<compile_context>
chip_gen: v7x
topology: tpu7x:2x2x1
jax: 0.10.0
libtpu: 0.0.40
codegen_flags: <defaults>
</compile_context>

<pallas_src>
import functools

import jax
import jax.numpy as jnp
import numpy as np
from jax.experimental import pallas as pl
from jax.experimental.pallas import tpu as pltpu


# ----------------------------------------------------------------------------
# Fused Pallas kernel (one batch element per grid step)
# ----------------------------------------------------------------------------
def _inception_kernel(x_ref,
                      w1_ref, b1_ref,
                      w21_ref, b21_ref, w22_ref, b22_ref,
                      w31_ref, b31_ref, w32_ref, b32_ref,
                      w4_ref, b4_ref,
                      o_ref,
                      z2_ref, z3_ref, z4_ref,
                      *, H, W):
    """Fused Inception forward for one batch element.

    x_ref : (1, Cin, H*W)     activations, spatial flattened onto the lane axis
    w*_ref: (Cout, K*K*Cin')  conv weights, tap-major (ky, kx, cin) columns
    b*_ref: (Cout, 1)         biases
    o_ref : (1, Ctot, H*W)    concatenated output (p1|p2|p3|p4 along channels)
    z*_ref: VMEM scratch      flattened 'same'-padding buffers (zero/-inf halos)
    """
    HW = H * W
    f32 = jnp.float32
    x = x_ref[0]                                            # (Cin, HW), lane-dense

    # Column index of every lane (to mask row-wrap at left/right image borders).
    w_pos = jax.lax.broadcasted_iota(jnp.int32, (1, HW), 1) % W

    def col_mask(dx):
        wd = w_pos + dx
        return jnp.logical_and(wd >= 0, wd < W)

    def conv1x1_relu(w_ref, b_ref, inp):
        y = jnp.dot(w_ref[...], inp, preferred_element_type=f32)
        return jnp.maximum(y + b_ref[...], 0.0)

    def conv_same_relu(z_ref, w_ref, b_ref, K):
        # z_ref holds the input with a zero halo: z[:, S + h*W + w] = inp[:, h*W + w]
        pad = (K - 1) // 2
        S = pad * (W + 1)
        cmid = z_ref.shape[0]
        cout = w_ref.shape[0]
        masks = {dx: col_mask(dx) for dx in range(-pad, pad + 1) if dx != 0}
        acc = jnp.zeros((cout, HW), f32)
        for ky in range(K):
            dy = ky - pad
            for kx in range(K):
                dx = kx - pad
                # v[:, h*W + w] = z[:, S + (h+dy)*W + (w+dx)]  (row OOB -> halo zeros)
                start = S + dy * W + dx
                v = z_ref[:, start:start + HW]
                if dx != 0:                                  # kill column wrap-around
                    v = jnp.where(masks[dx], v, 0.0)
                t = (ky * K + kx) * cmid
                wt = w_ref[:, t:t + cmid]                    # (cout, cmid) tap weights
                acc = acc + jnp.dot(wt, v, preferred_element_type=f32)
        return jnp.maximum(acc + b_ref[...], 0.0)

    def maxpool3x3(z_ref):
        # z_ref holds x with a -inf halo of width W+1 on each side.
        S = W + 1
        masks = {dx: col_mask(dx) for dx in (-1, 1)}
        m = None
        for dy in (-1, 0, 1):
            for dx in (-1, 0, 1):
                start = S + dy * W + dx
                v = z_ref[:, start:start + HW]
                if dx != 0:
                    v = jnp.where(masks[dx], v, -jnp.inf)
                m = v if m is None else jnp.maximum(m, v)
        return m

    # ---- branch 1: 1x1 conv -------------------------------------------------
    p1 = conv1x1_relu(w1_ref, b1_ref, x)

    # ---- branch 2: 1x1 conv -> 3x3 conv (intermediate stays in VMEM) --------
    S2 = W + 1
    y2 = conv1x1_relu(w21_ref, b21_ref, x)
    z2_ref[...] = jnp.zeros(z2_ref.shape, f32)
    z2_ref[:, S2:S2 + HW] = y2
    p2 = conv_same_relu(z2_ref, w22_ref, b22_ref, K=3)

    # ---- branch 3: 1x1 conv -> 5x5 conv --------------------------------------
    S3 = 2 * (W + 1)
    y3 = conv1x1_relu(w31_ref, b31_ref, x)
    z3_ref[...] = jnp.zeros(z3_ref.shape, f32)
    z3_ref[:, S3:S3 + HW] = y3
    p3 = conv_same_relu(z3_ref, w32_ref, b32_ref, K=5)

    # ---- branch 4: 3x3 max-pool -> 1x1 conv (VPU work overlaps MXU) ----------
    S4 = W + 1
    z4_ref[...] = jnp.full(z4_ref.shape, -jnp.inf, f32)
    z4_ref[:, S4:S4 + HW] = x
    p4 = conv1x1_relu(w4_ref, b4_ref, maxpool3x3(z4_ref))

    # ---- concatenated, lane-dense output writes ------------------------------
    c1, c2o, c3o = p1.shape[0], p2.shape[0], p3.shape[0]
    o_ref[0, 0:c1, :] = p1
    o_ref[0, c1:c1 + c2o, :] = p2
    o_ref[0, c1 + c2o:c1 + c2o + c3o, :] = p3
    o_ref[0, c1 + c2o + c3o:, :] = p4


# ----------------------------------------------------------------------------
# Wrapper: NCHW in -> NCHW out (exactly the PyTorch module semantics)
# ----------------------------------------------------------------------------
def _flatten_conv(w_oihw, b):
    """PyTorch (O, I, Kh, Kw) weight -> (O, Kh*Kw*I) tap-major matrix; bias -> (O, 1)."""
    co, ci, kh, kw = w_oihw.shape
    wm = jnp.transpose(w_oihw, (0, 2, 3, 1)).reshape(co, kh * kw * ci)
    return wm.astype(jnp.float32), b.reshape(co, 1).astype(jnp.float32)


@jax.jit
def inception_forward(x_nchw, params):
    N, Cin, H, W = x_nchw.shape
    HW = H * W

    flat = {k: _flatten_conv(*v) for k, v in params.items()}
    c1 = flat["p1_1"][0].shape[0]
    c2m, c2o = flat["p2_1"][0].shape[0], flat["p2_2"][0].shape[0]
    c3m, c3o = flat["p3_1"][0].shape[0], flat["p3_2"][0].shape[0]
    c4 = flat["p4_2"][0].shape[0]
    Ctot = c1 + c2o + c3o + c4

    xf = x_nchw.astype(jnp.float32).reshape(N, Cin, HW)      # metadata-only reshape

    order = ("p1_1", "p2_1", "p2_2", "p3_1", "p3_2", "p4_2")
    args = [xf]
    in_specs = [pl.BlockSpec((1, Cin, HW), lambda n: (n, 0, 0))]
    for name in order:
        wm, b2 = flat[name]
        args += [wm, b2]
        in_specs += [pl.BlockSpec(wm.shape, lambda n: (0, 0)),
                     pl.BlockSpec(b2.shape, lambda n: (0, 0))]

    out_flat = pl.pallas_call(
        functools.partial(_inception_kernel, H=H, W=W),
        out_shape=jax.ShapeDtypeStruct((N, Ctot, HW), jnp.float32),
        grid_spec=pltpu.PrefetchScalarGridSpec(
            num_scalar_prefetch=0,
            grid=(N,),
            in_specs=in_specs,
            out_specs=pl.BlockSpec((1, Ctot, HW), lambda n: (n, 0, 0)),
            scratch_shapes=[
                pltpu.VMEM((c2m, HW + 2 * (W + 1)), jnp.float32),       # 3x3 halo buf
                pltpu.VMEM((c3m, HW + 2 * 2 * (W + 1)), jnp.float32),   # 5x5 halo buf
                pltpu.VMEM((Cin, HW + 2 * (W + 1)), jnp.float32),       # pool halo buf
            ],
        ),
        # Batch axis is independent -> shards across TensorCores on megacore parts.
        # TODO(synk): for v7x with N == 1, add a second 'parallel' spatial grid axis
        # (split H with halo handling) so both TensorCores get work.
        compiler_params=pltpu.CompilerParams(dimension_semantics=("parallel",)),
    )(*args)

    return out_flat.reshape(N, Ctot, H, W)


# ----------------------------------------------------------------------------
# Deterministic parameter init (shapes from the PyTorch __init__, OIHW layout)
# ----------------------------------------------------------------------------
def init_inception_params(key, in_c, c1, c2, c3, c4):
    specs = {
        "p1_1": (in_c, c1, 1),
        "p2_1": (in_c, c2[0], 1),
        "p2_2": (c2[0], c2[1], 3),
        "p3_1": (in_c, c3[0], 1),
        "p3_2": (c3[0], c3[1], 5),
        "p4_2": (in_c, c4, 1),
    }
    params = {}
    for name, (ci, co, k) in specs.items():
        key, kw, kb = jax.random.split(key, 3)
        w = 0.1 * jax.random.normal(kw, (co, ci, k, k), jnp.float32)   # PyTorch OIHW
        b = 0.1 * jax.random.normal(kb, (co,), jnp.float32)
        params[name] = (w, b)
    return params


# ----------------------------------------------------------------------------
# Pure-JAX reference (for correctness verification)
# ----------------------------------------------------------------------------
def _ref_conv_relu(x_nchw, w_oihw, b, pad):
    y = jax.lax.conv_general_dilated(
        x_nchw, w_oihw, (1, 1), [(pad, pad), (pad, pad)],
        dimension_numbers=("NCHW", "OIHW", "NCHW"))
    return jax.nn.relu(y + b[None, :, None, None])


def _ref_maxpool3(x_nchw):
    return jax.lax.reduce_window(
        x_nchw, -jnp.inf, jax.lax.max,
        window_dimensions=(1, 1, 3, 3), window_strides=(1, 1, 1, 1),
        padding=[(0, 0), (0, 0), (1, 1), (1, 1)])


def inception_reference(x_nchw, params):
    p1 = _ref_conv_relu(x_nchw, *params["p1_1"], pad=0)
    p2 = _ref_conv_relu(x_nchw, *params["p2_1"], pad=0)
    p2 = _ref_conv_relu(p2, *params["p2_2"], pad=1)
    p3 = _ref_conv_relu(x_nchw, *params["p3_1"], pad=0)
    p3 = _ref_conv_relu(p3, *params["p3_2"], pad=2)
    p4 = _ref_conv_relu(_ref_maxpool3(x_nchw), *params["p4_2"], pad=0)
    return jnp.concatenate([p1, p2, p3, p4], axis=1)


# ----------------------------------------------------------------------------
if __name__ == "__main__":
    key = jax.random.PRNGKey(0)
    N, in_c, H, W = 2, 4, 16, 16
    c1, c2, c3, c4 = 4, (4, 8), (2, 4), 4

    key, kx = jax.random.split(key)
    x = jax.random.normal(kx, (N, in_c, H, W), jnp.float32)
    params = init_inception_params(key, in_c, c1, c2, c3, c4)

    out = jax.block_until_ready(inception_forward(x, params))
    expected_channels = c1 + c2[1] + c3[1] + c4
    assert out.shape == (N, expected_channels, H, W), out.shape

    ref = jax.block_until_ready(inception_reference(x, params))
    np.testing.assert_allclose(np.asarray(out), np.asarray(ref), rtol=1e-4, atol=1e-4)

    print("KERNEL_OK")
</pallas_src>

<mosaic_0001>
module attributes {stable_mosaic.version = 11 : i64} {
  func.func @_inception_kernel(%arg0: i32, %arg1: memref<1x4x256xf32, #tpu.memory_space<vmem>>, %arg2: memref<4x4xf32, #tpu.memory_space<vmem>>, %arg3: memref<4x1xf32, #tpu.memory_space<vmem>>, %arg4: memref<4x4xf32, #tpu.memory_space<vmem>>, %arg5: memref<4x1xf32, #tpu.memory_space<vmem>>, %arg6: memref<8x36xf32, #tpu.memory_space<vmem>>, %arg7: memref<8x1xf32, #tpu.memory_space<vmem>>, %arg8: memref<2x4xf32, #tpu.memory_space<vmem>>, %arg9: memref<2x1xf32, #tpu.memory_space<vmem>>, %arg10: memref<4x50xf32, #tpu.memory_space<vmem>>, %arg11: memref<4x1xf32, #tpu.memory_space<vmem>>, %arg12: memref<4x4xf32, #tpu.memory_space<vmem>>, %arg13: memref<4x1xf32, #tpu.memory_space<vmem>>, %arg14: memref<1x20x256xf32, #tpu.memory_space<vmem>>, %arg15: memref<4x290xf32, #tpu.memory_space<vmem>>, %arg16: memref<2x324xf32, #tpu.memory_space<vmem>>, %arg17: memref<4x290xf32, #tpu.memory_space<vmem>>) attributes {dimension_semantics = [#tpu.dimension_semantics<parallel>], iteration_bounds = array<i64: 2>, scalar_prefetch = 0 : i64, scratch_operands = 3 : i64, tpu.core_type = #tpu.core_type<tc>, window_params = [{transform_indices = @transform_0, window_bounds = array<i64: 1, 4, 256>}, {pipeline_mode = #tpu.pipeline_mode<synchronous>, transform_indices = @transform_1, window_bounds = array<i64: 4, 4>}, {pipeline_mode = #tpu.pipeline_mode<synchronous>, transform_indices = @transform_2, window_bounds = array<i64: 4, 1>}, {pipeline_mode = #tpu.pipeline_mode<synchronous>, transform_indices = @transform_3, window_bounds = array<i64: 4, 4>}, {pipeline_mode = #tpu.pipeline_mode<synchronous>, transform_indices = @transform_4, window_bounds = array<i64: 4, 1>}, {pipeline_mode = #tpu.pipeline_mode<synchronous>, transform_indices = @transform_5, window_bounds = array<i64: 8, 36>}, {pipeline_mode = #tpu.pipeline_mode<synchronous>, transform_indices = @transform_6, window_bounds = array<i64: 8, 1>}, {pipeline_mode = #tpu.pipeline_mode<synchronous>, transform_indices = @transform_7, window_bounds = array<i64: 2, 4>}, {pipeline_mode = #tpu.pipeline_mode<synchronous>, transform_indices = @transform_8, window_bounds = array<i64: 2, 1>}, {pipeline_mode = #tpu.pipeline_mode<synchronous>, transform_indices = @transform_9, window_bounds = array<i64: 4, 50>}, {pipeline_mode = #tpu.pipeline_mode<synchronous>, transform_indices = @transform_10, window_bounds = array<i64: 4, 1>}, {pipeline_mode = #tpu.pipeline_mode<synchronous>, transform_indices = @transform_11, window_bounds = array<i64: 4, 4>}, {pipeline_mode = #tpu.pipeline_mode<synchronous>, transform_indices = @transform_12, window_bounds = array<i64: 4, 1>}, {transform_indices = @transform_13, window_bounds = array<i64: 1, 20, 256>}]} {
    %c0 = arith.constant 0 : index
    %c0_0 = arith.constant 0 : index
    %c0_1 = arith.constant 0 : index
    %0 = vector.load %arg1[%c0, %c0_0, %c0_1] : memref<1x4x256xf32, #tpu.memory_space<vmem>>, vector<1x4x256xf32>
    %1 = vector.shape_cast %0 : vector<1x4x256xf32> to vector<4x256xf32>
    %2 = tpu.iota {dimensions = array<i32: 1>} : vector<1x256xi32>
    %c16_i32 = arith.constant 16 : i32
    %c0_i32 = arith.constant 0 : i32
    %3 = arith.cmpi eq, %c16_i32, %c0_i32 : i32
    %c1_i32 = arith.constant 1 : i32
    %4 = arith.select %3, %c1_i32, %c16_i32 : i32
    %5 = vector.broadcast %4 : i32 to vector<1x256xi32>
    %6 = arith.remsi %2, %5 : vector<1x256xi32>
    %c0_i32_2 = arith.constant 0 : i32
    %7 = vector.broadcast %c0_i32_2 : i32 to vector<1x256xi32>
    %8 = arith.cmpi ne, %6, %7 : vector<1x256xi32>
    %c0_i32_3 = arith.constant 0 : i32
    %9 = vector.broadcast %c0_i32_3 : i32 to vector<1x256xi32>
    %10 = arith.cmpi slt, %6, %9 : vector<1x256xi32>
    %c0_i32_4 = arith.constant 0 : i32
    %11 = arith.cmpi slt, %4, %c0_i32_4 : i32
    %12 = vector.broadcast %11 : i1 to vector<1x256xi1>
    %13 = vector.broadcast %12 : vector<1x256xi1> to vector<1x256xi1>
    %14 = arith.xori %10, %13 : vector<1x256xi1>
    %15 = arith.andi %14, %8 : vector<1x256xi1>
    %16 = vector.broadcast %4 : i32 to vector<1x256xi32>
    %17 = arith.addi %6, %16 : vector<1x256xi32>
    %18 = arith.select %15, %17, %6 : vector<1x256xi1>, vector<1x256xi32>
    %c0_5 = arith.constant 0 : index
    %c0_6 = arith.constant 0 : index
    %19 = vector.load %arg2[%c0_5, %c0_6] : memref<4x4xf32, #tpu.memory_space<vmem>>, vector<4x4xf32>
    %cst = arith.constant dense<0.000000e+00> : vector<4x256xf32>
    %20 = tpu.matmul %19, %1, %cst {dimension_numbers = #tpu.dot_dimension_numbers<[1], [0], [0], [1], [0, 0, 1, 1], [], []>} : vector<4x4xf32>, vector<4x256xf32>, vector<4x256xf32> -> vector<4x256xf32>
    %c0_7 = arith.constant 0 : index
    %c0_8 = arith.constant 0 : index
    %21 = vector.load %arg3[%c0_7, %c0_8] : memref<4x1xf32, #tpu.memory_space<vmem>>, vector<4x1xf32>
    %22 = vector.broadcast %21 : vector<4x1xf32> to vector<4x256xf32>
    %23 = arith.addf %20, %22 : vector<4x256xf32>
    %cst_9 = arith.constant 0.000000e+00 : f32
    %24 = vector.broadcast %cst_9 : f32 to vector<4x256xf32>
    %25 = arith.maximumf %23, %24 : vector<4x256xf32>
    %c0_10 = arith.constant 0 : index
    %c0_11 = arith.constant 0 : index
    %26 = vector.load %arg4[%c0_10, %c0_11] : memref<4x4xf32, #tpu.memory_space<vmem>>, vector<4x4xf32>
    %cst_12 = arith.constant dense<0.000000e+00> : vector<4x256xf32>
    %27 = tpu.matmul %26, %1, %cst_12 {dimension_numbers = #tpu.dot_dimension_numbers<[1], [0], [0], [1], [0, 0, 1, 1], [], []>} : vector<4x4xf32>, vector<4x256xf32>, vector<4x256xf32> -> vector<4x256xf32>
    %c0_13 = arith.constant 0 : index
    %c0_14 = arith.constant 0 : index
    %28 = vector.load %arg5[%c0_13, %c0_14] : memref<4x1xf32, #tpu.memory_space<vmem>>, vector<4x1xf32>
    %29 = vector.broadcast %28 : vector<4x1xf32> to vector<4x256xf32>
    %30 = arith.addf %27, %29 : vector<4x256xf32>
    %cst_15 = arith.constant 0.000000e+00 : f32
    %31 = vector.broadcast %cst_15 : f32 to vector<4x256xf32>
    %32 = arith.maximumf %30, %31 : vector<4x256xf32>
    %cst_16 = arith.constant 0.000000e+00 : f32
    %33 = vector.broadcast %cst_16 : f32 to vector<4x290xf32>
    %c0_17 = arith.constant 0 : index
    %c0_18 = arith.constant 0 : index
    %34 = vector.load %arg15[%c0_17, %c0_18] : memref<4x290xf32, #tpu.memory_space<vmem>>, vector<4x290xf32>
    tpu.vector_store %arg15[%c0_17, %c0_18], %33 {strides = array<i32>} : memref<4x290xf32, #tpu.memory_space<vmem>>, vector<4x290xf32>,
    %c0_19 = arith.constant 0 : index
    %c17 = arith.constant 17 : index
    %35 = vector.load %arg15[%c0_19, %c17] : memref<4x290xf32, #tpu.memory_space<vmem>>, vector<4x256xf32>
    tpu.vector_store %arg15[%c0_19, %c17], %32 {strides = array<i32>} : memref<4x290xf32, #tpu.memory_space<vmem>>, vector<4x256xf32>,
    %c-1_i32 = arith.constant -1 : i32
    %36 = vector.broadcast %c-1_i32 : i32 to vector<1x256xi32>
    %37 = arith.addi %18, %36 : vector<1x256xi32>
    %c0_i32_20 = arith.constant 0 : i32
    %38 = vector.broadcast %c0_i32_20 : i32 to vector<1x256xi32>
    %39 = arith.cmpi sge, %37, %38 : vector<1x256xi32>
    %c16_i32_21 = arith.constant 16 : i32
    %40 = vector.broadcast %c16_i32_21 : i32 to vector<1x256xi32>
    %41 = arith.cmpi slt, %37, %40 : vector<1x256xi32>
    %42 = arith.andi %39, %41 : vector<1x256xi1>
    %c1_i32_22 = arith.constant 1 : i32
    %43 = vector.broadcast %c1_i32_22 : i32 to vector<1x256xi32>
    %44 = arith.addi %18, %43 : vector<1x256xi32>
    %c0_i32_23 = arith.constant 0 : i32
    %45 = vector.broadcast %c0_i32_23 : i32 to vector<1x256xi32>
    %46 = arith.cmpi sge, %44, %45 : vector<1x256xi32>
    %c16_i32_24 = arith.constant 16 : i32
    %47 = vector.broadcast %c16_i32_24 : i32 to vector<1x256xi32>
    %48 = arith.cmpi slt, %44, %47 : vector<1x256xi32>
    %49 = arith.andi %46, %48 : vector<1x256xi1>
    %cst_25 = arith.constant 0.000000e+00 : f32
    %50 = vector.broadcast %cst_25 : f32 to vector<8x256xf32>
    %c0_26 = arith.constant 0 : index
    %c0_27 = arith.constant 0 : index
    %51 = vector.load %arg15[%c0_26, %c0_27] : memref<4x290xf32, #tpu.memory_space<vmem>>, vector<4x256xf32>
    %cst_28 = arith.constant 0.000000e+00 : f32
    %52 = vector.shape_cast %42 : vector<1x256xi1> to vector<1x256xi1>
    %53 = vector.broadcast %52 : vector<1x256xi1> to vector<4x256xi1>
    %54 = vector.broadcast %cst_28 : f32 to vector<4x256xf32>
    %55 = arith.select %53, %51, %54 : vector<4x256xi1>, vector<4x256xf32>
    %c0_29 = arith.constant 0 : index
    %c0_30 = arith.constant 0 : index
    %56 = vector.load %arg6[%c0_29, %c0_30] : memref<8x36xf32, #tpu.memory_space<vmem>>, vector<8x4xf32>
    %cst_31 = arith.constant dense<0.000000e+00> : vector<8x256xf32>
    %57 = tpu.matmul %56, %55, %cst_31 {dimension_numbers = #tpu.dot_dimension_numbers<[1], [0], [0], [1], [0, 0, 1, 1], [], []>} : vector<8x4xf32>, vector<4x256xf32>, vector<8x256xf32> -> vector<8x256xf32>
    %58 = arith.addf %50, %57 : vector<8x256xf32>
    %c0_32 = arith.constant 0 : index
    %c1 = arith.constant 1 : index
    %59 = vector.load %arg15[%c0_32, %c1] : memref<4x290xf32, #tpu.memory_space<vmem>>, vector<4x256xf32>
    %c0_33 = arith.constant 0 : index
    %c4 = arith.constant 4 : index
    %60 = vector.load %arg6[%c0_33, %c4] : memref<8x36xf32, #tpu.memory_space<vmem>>, vector<8x4xf32>
    %cst_34 = arith.constant dense<0.000000e+00> : vector<8x256xf32>
    %61 = tpu.matmul %60, %59, %cst_34 {dimension_numbers = #tpu.dot_dimension_numbers<[1], [0], [0], [1], [0, 0, 1, 1], [], []>} : vector<8x4xf32>, vector<4x256xf32>, vector<8x256xf32> -> vector<8x256xf32>
    %62 = arith.addf %58, %61 : vector<8x256xf32>
    %c0_35 = arith.constant 0 : index
    %c2 = arith.constant 2 : index
    %63 = vector.load %arg15[%c0_35, %c2] : memref<4x290xf32, #tpu.memory_space<vmem>>, vector<4x256xf32>
    %cst_36 = arith.constant 0.000000e+00 : f32
    %64 = vector.shape_cast %49 : vector<1x256xi1> to vector<1x256xi1>
    %65 = vector.broadcast %64 : vector<1x256xi1> to vector<4x256xi1>
    %66 = vector.broadcast %cst_36 : f32 to vector<4x256xf32>
    %67 = arith.select %65, %63, %66 : vector<4x256xi1>, vector<4x256xf32>
    %c0_37 = arith.constant 0 : index
    %c8 = arith.constant 8 : index
    %68 = vector.load %arg6[%c0_37, %c8] : memref<8x36xf32, #tpu.memory_space<vmem>>, vector<8x4xf32>
    %cst_38 = arith.constant dense<0.000000e+00> : vector<8x256xf32>
    %69 = tpu.matmul %68, %67, %cst_38 {dimension_numbers = #tpu.dot_dimension_numbers<[1], [0], [0], [1], [0, 0, 1, 1], [], []>} : vector<8x4xf32>, vector<4x256xf32>, vector<8x256xf32> -> vector<8x256xf32>
    %70 = arith.addf %62, %69 : vector<8x256xf32>
    %c0_39 = arith.constant 0 : index
    %c16 = arith.constant 16 : index
    %71 = vector.load %arg15[%c0_39, %c16] : memref<4x290xf32, #tpu.memory_space<vmem>>, vector<4x256xf32>
    %cst_40 = arith.constant 0.000000e+00 : f32
    %72 = vector.shape_cast %42 : vector<1x256xi1> to vector<1x256xi1>
    %73 = vector.broadcast %72 : vector<1x256xi1> to vector<4x256xi1>
    %74 = vector.broadcast %cst_40 : f32 to vector<4x256xf32>
    %75 = arith.select %73, %71, %74 : vector<4x256xi1>, vector<4x256xf32>
    %c0_41 = arith.constant 0 : index
    %c12 = arith.constant 12 : index
    %76 = vector.load %arg6[%c0_41, %c12] : memref<8x36xf32, #tpu.memory_space<vmem>>, vector<8x4xf32>
    %cst_42 = arith.constant dense<0.000000e+00> : vector<8x256xf32>
    %77 = tpu.matmul %76, %75, %cst_42 {dimension_numbers = #tpu.dot_dimension_numbers<[1], [0], [0], [1], [0, 0, 1, 1], [], []>} : vector<8x4xf32>, vector<4x256xf32>, vector<8x256xf32> -> vector<8x256xf32>
    %78 = arith.addf %70, %77 : vector<8x256xf32>
    %c0_43 = arith.constant 0 : index
    %c17_44 = arith.constant 17 : index
    %79 = vector.load %arg15[%c0_43, %c17_44] : memref<4x290xf32, #tpu.memory_space<vmem>>, vector<4x256xf32>
    %c0_45 = arith.constant 0 : index
    %c16_46 = arith.constant 16 : index
    %80 = vector.load %arg6[%c0_45, %c16_46] : memref<8x36xf32, #tpu.memory_space<vmem>>, vector<8x4xf32>
    %cst_47 = arith.constant dense<0.000000e+00> : vector<8x256xf32>
    %81 = tpu.matmul %80, %79, %cst_47 {dimension_numbers = #tpu.dot_dimension_numbers<[1], [0], [0], [1], [0, 0, 1, 1], [], []>} : vector<8x4xf32>, vector<4x256xf32>, vector<8x256xf32> -> vector<8x256xf32>
    %82 = arith.addf %78, %81 : vector<8x256xf32>
    %c0_48 = arith.constant 0 : index
    %c18 = arith.constant 18 : index
    %83 = vector.load %arg15[%c0_48, %c18] : memref<4x290xf32, #tpu.memory_space<vmem>>, vector<4x256xf32>
    %cst_49 = arith.constant 0.000000e+00 : f32
    %84 = vector.shape_cast %49 : vector<1x256xi1> to vector<1x256xi1>
    %85 = vector.broadcast %84 : vector<1x256xi1> to vector<4x256xi1>
    %86 = vector.broadcast %cst_49 : f32 to vector<4x256xf32>
    %87 = arith.select %85, %83, %86 : vector<4x256xi1>, vector<4x256xf32>
    %c0_50 = arith.constant 0 : index
    %c20 = arith.constant 20 : index
    %88 = vector.load %arg6[%c0_50, %c20] : memref<8x36xf32, #tpu.memory_space<vmem>>, vector<8x4xf32>
    %cst_51 = arith.constant dense<0.000000e+00> : vector<8x256xf32>
    %89 = tpu.matmul %88, %87, %cst_51 {dimension_numbers = #tpu.dot_dimension_numbers<[1], [0], [0], [1], [0, 0, 1, 1], [], []>} : vector<8x4xf32>, vector<4x256xf32>, vector<8x256xf32> -> vector<8x256xf32>
    %90 = arith.addf %82, %89 : vector<8x256xf32>
    %c0_52 = arith.constant 0 : index
    %c32 = arith.constant 32 : index
    %91 = vector.load %arg15[%c0_52, %c32] : memref<4x290xf32, #tpu.memory_space<vmem>>, vector<4x256xf32>
    %cst_53 = arith.constant 0.000000e+00 : f32
    %92 = vector.shape_cast %42 : vector<1x256xi1> to vector<1x256xi1>
    %93 = vector.broadcast %92 : vector<1x256xi1> to vector<4x256xi1>
    %94 = vector.broadcast %cst_53 : f32 to vector<4x256xf32>
    %95 = arith.select %93, %91, %94 : vector<4x256xi1>, vector<4x256xf32>
    %c0_54 = arith.constant 0 : index
    %c24 = arith.constant 24 : index
    %96 = vector.load %arg6[%c0_54, %c24] : memref<8x36xf32, #tpu.memory_space<vmem>>, vector<8x4xf32>
    %cst_55 = arith.constant dense<0.000000e+00> : vector<8x256xf32>
    %97 = tpu.matmul %96, %95, %cst_55 {dimension_numbers = #tpu.dot_dimension_numbers<[1], [0], [0], [1], [0, 0, 1, 1], [], []>} : vector<8x4xf32>, vector<4x256xf32>, vector<8x256xf32> -> vector<8x256xf32>
    %98 = arith.addf %90, %97 : vector<8x256xf32>
    %c0_56 = arith.constant 0 : index
    %c33 = arith.constant 33 : index
    %99 = vector.load %arg15[%c0_56, %c33] : memref<4x290xf32, #tpu.memory_space<vmem>>, vector<4x256xf32>
    %c0_57 = arith.constant 0 : index
    %c28 = arith.constant 28 : index
    %100 = vector.load %arg6[%c0_57, %c28] : memref<8x36xf32, #tpu.memory_space<vmem>>, vector<8x4xf32>
    %cst_58 = arith.constant dense<0.000000e+00> : vector<8x256xf32>
    %101 = tpu.matmul %100, %99, %cst_58 {dimension_numbers = #tpu.dot_dimension_numbers<[1], [0], [0], [1], [0, 0, 1, 1], [], []>} : vector<8x4xf32>, vector<4x256xf32>, vector<8x256xf32> -> vector<8x256xf32>
    %102 = arith.addf %98, %101 : vector<8x256xf32>
    %c0_59 = arith.constant 0 : index
    %c34 = arith.constant 34 : index
    %103 = vector.load %arg15[%c0_59, %c34] : memref<4x290xf32, #tpu.memory_space<vmem>>, vector<4x256xf32>
    %cst_60 = arith.constant 0.000000e+00 : f32
    %104 = vector.shape_cast %49 : vector<1x256xi1> to vector<1x256xi1>
    %105 = vector.broadcast %104 : vector<1x256xi1> to vector<4x256xi1>
    %106 = vector.broadcast %cst_60 : f32 to vector<4x256xf32>
    %107 = arith.select %105, %103, %106 : vector<4x256xi1>, vector<4x256xf32>
    %c0_61 = arith.constant 0 : index
    %c32_62 = arith.constant 32 : index
    %108 = vector.load %arg6[%c0_61, %c32_62] : memref<8x36xf32, #tpu.memory_space<vmem>>, vector<8x4xf32>
    %cst_63 = arith.constant dense<0.000000e+00> : vector<8x256xf32>
    %109 = tpu.matmul %108, %107, %cst_63 {dimension_numbers = #tpu.dot_dimension_numbers<[1], [0], [0], [1], [0, 0, 1, 1], [], []>} : vector<8x4xf32>, vector<4x256xf32>, vector<8x256xf32> -> vector<8x256xf32>
    %110 = arith.addf %102, %109 : vector<8x256xf32>
    %c0_64 = arith.constant 0 : index
    %c0_65 = arith.constant 0 : index
    %111 = vector.load %arg7[%c0_64, %c0_65] : memref<8x1xf32, #tpu.memory_space<vmem>>, vector<8x1xf32>
    %112 = vector.broadcast %111 : vector<8x1xf32> to vector<8x256xf32>
    %113 = arith.addf %110, %112 : vector<8x256xf32>
    %cst_66 = arith.constant 0.000000e+00 : f32
    %114 = vector.broadcast %cst_66 : f32 to vector<8x256xf32>
    %115 = arith.maximumf %113, %114 : vector<8x256xf32>
    %c0_67 = arith.constant 0 : index
    %c0_68 = arith.constant 0 : index
    %116 = vector.load %arg8[%c0_67, %c0_68] : memref<2x4xf32, #tpu.memory_space<vmem>>, vector<2x4xf32>
    %cst_69 = arith.constant dense<0.000000e+00> : vector<2x256xf32>
    %117 = tpu.matmul %116, %1, %cst_69 {dimension_numbers = #tpu.dot_dimension_numbers<[1], [0], [0], [1], [0, 0, 1, 1], [], []>} : vector<2x4xf32>, vector<4x256xf32>, vector<2x256xf32> -> vector<2x256xf32>
    %c0_70 = arith.constant 0 : index
    %c0_71 = arith.constant 0 : index
    %118 = vector.load %arg9[%c0_70, %c0_71] : memref<2x1xf32, #tpu.memory_space<vmem>>, vector<2x1xf32>
    %119 = vector.broadcast %118 : vector<2x1xf32> to vector<2x256xf32>
    %120 = arith.addf %117, %119 : vector<2x256xf32>
    %cst_72 = arith.constant 0.000000e+00 : f32
    %121 = vector.broadcast %cst_72 : f32 to vector<2x256xf32>
    %122 = arith.maximumf %120, %121 : vector<2x256xf32>
    %cst_73 = arith.constant 0.000000e+00 : f32
    %123 = vector.broadcast %cst_73 : f32 to vector<2x324xf32>
    %c0_74 = arith.constant 0 : index
    %c0_75 = arith.constant 0 : index
    %124 = vector.load %arg16[%c0_74, %c0_75] : memref<2x324xf32, #tpu.memory_space<vmem>>, vector<2x324xf32>
    tpu.vector_store %arg16[%c0_74, %c0_75], %123 {strides = array<i32>} : memref<2x324xf32, #tpu.memory_space<vmem>>, vector<2x324xf32>,
    %c0_76 = arith.constant 0 : index
    %c34_77 = arith.constant 34 : index
    %125 = vector.load %arg16[%c0_76, %c34_77] : memref<2x324xf32, #tpu.memory_space<vmem>>, vector<2x256xf32>
    tpu.vector_store %arg16[%c0_76, %c34_77], %122 {strides = array<i32>} : memref<2x324xf32, #tpu.memory_space<vmem>>, vector<2x256xf32>,
    %c-2_i32 = arith.constant -2 : i32
    %126 = vector.broadcast %c-2_i32 : i32 to vector<1x256xi32>
    %127 = arith.addi %18, %126 : vector<1x256xi32>
    %c0_i32_78 = arith.constant 0 : i32
    %128 = vector.broadcast %c0_i32_78 : i32 to vector<1x256xi32>
    %129 = arith.cmpi sge, %127, %128 : vector<1x256xi32>
    %c16_i32_79 = arith.constant 16 : i32
    %130 = vector.broadcast %c16_i32_79 : i32 to vector<1x256xi32>
    %131 = arith.cmpi slt, %127, %130 : vector<1x256xi32>
    %132 = arith.andi %129, %131 : vector<1x256xi1>
    %c-1_i32_80 = arith.constant -1 : i32
    %133 = vector.broadcast %c-1_i32_80 : i32 to vector<1x256xi32>
    %134 = arith.addi %18, %133 : vector<1x256xi32>
    %c0_i32_81 = arith.constant 0 : i32
    %135 = vector.broadcast %c0_i32_81 : i32 to vector<1x256xi32>
    %136 = arith.cmpi sge, %134, %135 : vector<1x256xi32>
    %c16_i32_82 = arith.constant 16 : i32
    %137 = vector.broadcast %c16_i32_82 : i32 to vector<1x256xi32>
    %138 = arith.cmpi slt, %134, %137 : vector<1x256xi32>
    %139 = arith.andi %136, %138 : vector<1x256xi1>
    %c1_i32_83 = arith.constant 1 : i32
    %140 = vector.broadcast %c1_i32_83 : i32 to vector<1x256xi32>
    %141 = arith.addi %18, %140 : vector<1x256xi32>
    %c0_i32_84 = arith.constant 0 : i32
    %142 = vector.broadcast %c0_i32_84 : i32 to vector<1x256xi32>
    %143 = arith.cmpi sge, %141, %142 : vector<1x256xi32>
    %c16_i32_85 = arith.constant 16 : i32
    %144 = vector.broadcast %c16_i32_85 : i32 to vector<1x256xi32>
    %145 = arith.cmpi slt, %141, %144 : vector<1x256xi32>
    %146 = arith.andi %143, %145 : vector<1x256xi1>
    %c2_i32 = arith.constant 2 : i32
    %147 = vector.broadcast %c2_i32 : i32 to vector<1x256xi32>
    %148 = arith.addi %18, %147 : vector<1x256xi32>
    %c0_i32_86 = arith.constant 0 : i32
    %149 = vector.broadcast %c0_i32_86 : i32 to vector<1x256xi32>
    %150 = arith.cmpi sge, %148, %149 : vector<1x256xi32>
    %c16_i32_87 = arith.constant 16 : i32
    %151 = vector.broadcast %c16_i32_87 : i32 to vector<1x256xi32>
    %152 = arith.cmpi slt, %148, %151 : vector<1x256xi32>
    %153 = arith.andi %150, %152 : vector<1x256xi1>
    %cst_88 = arith.constant 0.000000e+00 : f32
    %154 = vector.broadcast %cst_88 : f32 to vector<4x256xf32>
    %c0_89 = arith.constant 0 : index
    %c0_90 = arith.constant 0 : index
    %155 = vector.load %arg16[%c0_89, %c0_90] : memref<2x324xf32, #tpu.memory_space<vmem>>, vector<2x256xf32>
    %cst_91 = arith.constant 0.000000e+00 : f32
    %156 = vector.shape_cast %132 : vector<1x256xi1> to vector<1x256xi1>
    %157 = vector.broadcast %156 : vector<1x256xi1> to vector<2x256xi1>
    %158 = vector.broadcast %cst_91 : f32 to vector<2x256xf32>
    %159 = arith.select %157, %155, %158 : vector<2x256xi1>, vector<2x256xf32>
    %c0_92 = arith.constant 0 : index
    %c0_93 = arith.constant 0 : index
    %160 = vector.load %arg10[%c0_92, %c0_93] : memref<4x50xf32, #tpu.memory_space<vmem>>, vector<4x2xf32>
    %cst_94 = arith.constant dense<0.000000e+00> : vector<4x256xf32>
    %161 = tpu.matmul %160, %159, %cst_94 {dimension_numbers = #tpu.dot_dimension_numbers<[1], [0], [0], [1], [0, 0, 1, 1], [], []>} : vector<4x2xf32>, vector<2x256xf32>, vector<4x256xf32> -> vector<4x256xf32>
    %162 = arith.addf %154, %161 : vector<4x256xf32>
    %c0_95 = arith.constant 0 : index
    %c1_96 = arith.constant 1 : index
    %163 = vector.load %arg16[%c0_95, %c1_96] : memref<2x324xf32, #tpu.memory_space<vmem>>, vector<2x256xf32>
    %cst_97 = arith.constant 0.000000e+00 : f32
    %164 = vector.shape_cast %139 : vector<1x256xi1> to vector<1x256xi1>
    %165 = vector.broadcast %164 : vector<1x256xi1> to vector<2x256xi1>
    %166 = vector.broadcast %cst_97 : f32 to vector<2x256xf32>
    %167 = arith.select %165, %163, %166 : vector<2x256xi1>, vector<2x256xf32>
    %c0_98 = arith.constant 0 : index
    %c2_99 = arith.constant 2 : index
    %168 = vector.load %arg10[%c0_98, %c2_99] : memref<4x50xf32, #tpu.memory_space<vmem>>, vector<4x2xf32>
    %cst_100 = arith.constant dense<0.000000e+00> : vector<4x256xf32>
    %169 = tpu.matmul %168, %167, %cst_100 {dimension_numbers = #tpu.dot_dimension_numbers<[1], [0], [0], [1], [0, 0, 1, 1], [], []>} : vector<4x2xf32>, vector<2x256xf32>, vector<4x256xf32> -> vector<4x256xf32>
    %170 = arith.addf %162, %169 : vector<4x256xf32>
    %c0_101 = arith.constant 0 : index
    %c2_102 = arith.constant 2 : index
    %171 = vector.load %arg16[%c0_101, %c2_102] : memref<2x324xf32, #tpu.memory_space<vmem>>, vector<2x256xf32>
    %c0_103 = arith.constant 0 : index
    %c4_104 = arith.constant 4 : index
    %172 = vector.load %arg10[%c0_103, %c4_104] : memref<4x50xf32, #tpu.memory_space<vmem>>, vector<4x2xf32>
    %cst_105 = arith.constant dense<0.000000e+00> : vector<4x256xf32>
    %173 = tpu.matmul %172, %171, %cst_105 {dimension_numbers = #tpu.dot_dimension_numbers<[1], [0], [0], [1], [0, 0, 1, 1], [], []>} : vector<4x2xf32>, vector<2x256xf32>, vector<4x256xf32> -> vector<4x256xf32>
    %174 = arith.addf %170, %173 : vector<4x256xf32>
    %c0_106 = arith.constant 0 : index
    %c3 = arith.constant 3 : index
    %175 = vector.load %arg16[%c0_106, %c3] : memref<2x324xf32, #tpu.memory_space<vmem>>, vector<2x256xf32>
    %cst_107 = arith.constant 0.000000e+00 : f32
    %176 = vector.shape_cast %146 : vector<1x256xi1> to vector<1x256xi1>
    %177 = vector.broadcast %176 : vector<1x256xi1> to vector<2x256xi1>
    %178 = vector.broadcast %cst_107 : f32 to vector<2x256xf32>
    %179 = arith.select %177, %175, %178 : vector<2x256xi1>, vector<2x256xf32>
    %c0_108 = arith.constant 0 : index
    %c6 = arith.constant 6 : index
    %180 = vector.load %arg10[%c0_108, %c6] : memref<4x50xf32, #tpu.memory_space<vmem>>, vector<4x2xf32>
    %cst_109 = arith.constant dense<0.000000e+00> : vector<4x256xf32>
    %181 = tpu.matmul %180, %179, %cst_109 {dimension_numbers = #tpu.dot_dimension_numbers<[1], [0], [0], [1], [0, 0, 1, 1], [], []>} : vector<4x2xf32>, vector<2x256xf32>, vector<4x256xf32> -> vector<4x256xf32>
    %182 = arith.addf %174, %181 : vector<4x256xf32>
    %c0_110 = arith.constant 0 : index
    %c4_111 = arith.constant 4 : index
    %183 = vector.load %arg16[%c0_110, %c4_111] : memref<2x324xf32, #tpu.memory_space<vmem>>, vector<2x256xf32>
    %cst_112 = arith.constant 0.000000e+00 : f32
    %184 = vector.shape_cast %153 : vector<1x256xi1> to vector<1x256xi1>
    %185 = vector.broadcast %184 : vector<1x256xi1> to vector<2x256xi1>
    %186 = vector.broadcast %cst_112 : f32 to vector<2x256xf32>
    %187 = arith.select %185, %183, %186 : vector<2x256xi1>, vector<2x256xf32>
    %c0_113 = arith.constant 0 : index
    %c8_114 = arith.constant 8 : index
    %188 = vector.load %arg10[%c0_113, %c8_114] : memref<4x50xf32, #tpu.memory_space<vmem>>, vector<4x2xf32>
    %cst_115 = arith.constant dense<0.000000e+00> : vector<4x256xf32>
    %189 = tpu.matmul %188, %187, %cst_115 {dimension_numbers = #tpu.dot_dimension_numbers<[1], [0], [0], [1], [0, 0, 1, 1], [], []>} : vector<4x2xf32>, vector<2x256xf32>, vector<4x256xf32> -> vector<4x256xf32>
    %190 = arith.addf %182, %189 : vector<4x256xf32>
    %c0_116 = arith.constant 0 : index
    %c16_117 = arith.constant 16 : index
    %191 = vector.load %arg16[%c0_116, %c16_117] : memref<2x324xf32, #tpu.memory_space<vmem>>, vector<2x256xf32>
    %cst_118 = arith.constant 0.000000e+00 : f32
    %192 = vector.shape_cast %132 : vector<1x256xi1> to vector<1x256xi1>
    %193 = vector.broadcast %192 : vector<1x256xi1> to vector<2x256xi1>
    %194 = vector.broadcast %cst_118 : f32 to vector<2x256xf32>
    %195 = arith.select %193, %191, %194 : vector<2x256xi1>, vector<2x256xf32>
    %c0_119 = arith.constant 0 : index
    %c10 = arith.constant 10 : index
    %196 = vector.load %arg10[%c0_119, %c10] : memref<4x50xf32, #tpu.memory_space<vmem>>, vector<4x2xf32>
    %cst_120 = arith.constant dense<0.000000e+00> : vector<4x256xf32>
    %197 = tpu.matmul %196, %195, %cst_120 {dimension_numbers = #tpu.dot_dimension_numbers<[1], [0], [0], [1], [0, 0, 1, 1], [], []>} : vector<4x2xf32>, vector<2x256xf32>, vector<4x256xf32> -> vector<4x256xf32>
    %198 = arith.addf %190, %197 : vector<4x256xf32>
    %c0_121 = arith.constant 0 : index
    %c17_122 = arith.constant 17 : index
    %199 = vector.load %arg16[%c0_121, %c17_122] : memref<2x324xf32, #tpu.memory_space<vmem>>, vector<2x256xf32>
    %cst_123 = arith.constant 0.000000e+00 : f32
    %200 = vector.shape_cast %139 : vector<1x256xi1> to vector<1x256xi1>
    %201 = vector.broadcast %200 : vector<1x256xi1> to vector<2x256xi1>
    %202 = vector.broadcast %cst_123 : f32 to vector<2x256xf32>
    %203 = arith.select %201, %199, %202 : vector<2x256xi1>, vector<2x256xf32>
    %c0_124 = arith.constant 0 : index
    %c12_125 = arith.constant 12 : index
    %204 = vector.load %arg10[%c0_124, %c12_125] : memref<4x50xf32, #tpu.memory_space<vmem>>, vector<4x2xf32>
    %cst_126 = arith.constant dense<0.000000e+00> : vector<4x256xf32>
    %205 = tpu.matmul %204, %203, %cst_126 {dimension_numbers = #tpu.dot_dimension_numbers<[1], [0], [0], [1], [0, 0, 1, 1], [], []>} : vector<4x2xf32>, vector<2x256xf32>, vector<4x256xf32> -> vector<4x256xf32>
    %206 = arith.addf %198, %205 : vector<4x256xf32>
    %c0_127 = arith.constant 0 : index
    %c18_128 = arith.constant 18 : index
    %207 = vector.load %arg16[%c0_127, %c18_128] : memref<2x324xf32, #tpu.memory_space<vmem>>, vector<2x256xf32>
    %c0_129 = arith.constant 0 : index
    %c14 = arith.constant 14 : index
    %208 = vector.load %arg10[%c0_129, %c14] : memref<4x50xf32, #tpu.memory_space<vmem>>, vector<4x2xf32>
    %cst_130 = arith.constant dense<0.000000e+00> : vector<4x256xf32>
    %209 = tpu.matmul %208, %207, %cst_130 {dimension_numbers = #tpu.dot_dimension_numbers<[1], [0], [0], [1], [0, 0, 1, 1], [], []>} : vector<4x2xf32>, vector<2x256xf32>, vector<4x256xf32> -> vector<4x256xf32>
    %210 = arith.addf %206, %209 : vector<4x256xf32>
    %c0_131 = arith.constant 0 : index
    %c19 = arith.constant 19 : index
    %211 = vector.load %arg16[%c0_131, %c19] : memref<2x324xf32, #tpu.memory_space<vmem>>, vector<2x256xf32>
    %cst_132 = arith.constant 0.000000e+00 : f32
    %212 = vector.shape_cast %146 : vector<1x256xi1> to vector<1x256xi1>
    %213 = vector.broadcast %212 : vector<1x256xi1> to vector<2x256xi1>
    %214 = vector.broadcast %cst_132 : f32 to vector<2x256xf32>
    %215 = arith.select %213, %211, %214 : vector<2x256xi1>, vector<2x256xf32>
    %c0_133 = arith.constant 0 : index
    %c16_134 = arith.constant 16 : index
    %216 = vector.load %arg10[%c0_133, %c16_134] : memref<4x50xf32, #tpu.memory_space<vmem>>, vector<4x2xf32>
    %cst_135 = arith.constant dense<0.000000e+00> : vector<4x256xf32>
    %217 = tpu.matmul %216, %215, %cst_135 {dimension_numbers = #tpu.dot_dimension_numbers<[1], [0], [0], [1], [0, 0, 1, 1], [], []>} : vector<4x2xf32>, vector<2x256xf32>, vector<4x256xf32> -> vector<4x256xf32>
    %218 = arith.addf %210, %217 : vector<4x256xf32>
    %c0_136 = arith.constant 0 : index
    %c20_137 = arith.constant 20 : index
    %219 = vector.load %arg16[%c0_136, %c20_137] : memref<2x324xf32, #tpu.memory_space<vmem>>, vector<2x256xf32>
    %cst_138 = arith.constant 0.000000e+00 : f32
    %220 = vector.shape_cast %153 : vector<1x256xi1> to vector<1x256xi1>
    %221 = vector.broadcast %220 : vector<1x256xi1> to vector<2x256xi1>
    %222 = vector.broadcast %cst_138 : f32 to vector<2x256xf32>
    %223 = arith.select %221, %219, %222 : vector<2x256xi1>, vector<2x256xf32>
    %c0_139 = arith.constant 0 : index
    %c18_140 = arith.constant 18 : index
    %224 = vector.load %arg10[%c0_139, %c18_140] : memref<4x50xf32, #tpu.memory_space<vmem>>, vector<4x2xf32>
    %cst_141 = arith.constant dense<0.000000e+00> : vector<4x256xf32>
    %225 = tpu.matmul %224, %223, %cst_141 {dimension_numbers = #tpu.dot_dimension_numbers<[1], [0], [0], [1], [0, 0, 1, 1], [], []>} : vector<4x2xf32>, vector<2x256xf32>, vector<4x256xf32> -> vector<4x256xf32>
    %226 = arith.addf %218, %225 : vector<4x256xf32>
    %c0_142 = arith.constant 0 : index
    %c32_143 = arith.constant 32 : index
    %227 = vector.load %arg16[%c0_142, %c32_143] : memref<2x324xf32, #tpu.memory_space<vmem>>, vector<2x256xf32>
    %cst_144 = arith.constant 0.000000e+00 : f32
    %228 = vector.shape_cast %132 : vector<1x256xi1> to vector<1x256xi1>
    %229 = vector.broadcast %228 : vector<1x256xi1> to vector<2x256xi1>
    %230 = vector.broadcast %cst_144 : f32 to vector<2x256xf32>
    %231 = arith.select %229, %227, %230 : vector<2x256xi1>, vector<2x256xf32>
    %c0_145 = arith.constant 0 : index
    %c20_146 = arith.constant 20 : index
    %232 = vector.load %arg10[%c0_145, %c20_146] : memref<4x50xf32, #tpu.memory_space<vmem>>, vector<4x2xf32>
    %cst_147 = arith.constant dense<0.000000e+00> : vector<4x256xf32>
    %233 = tpu.matmul %232, %231, %cst_147 {dimension_numbers = #tpu.dot_dimension_numbers<[1], [0], [0], [1], [0, 0, 1, 1], [], []>} : vector<4x2xf32>, vector<2x256xf32>, vector<4x256xf32> -> vector<4x256xf32>
    %234 = arith.addf %226, %233 : vector<4x256xf32>
    %c0_148 = arith.constant 0 : index
    %c33_149 = arith.constant 33 : index
    %235 = vector.load %arg16[%c0_148, %c33_149] : memref<2x324xf32, #tpu.memory_space<vmem>>, vector<2x256xf32>
    %cst_150 = arith.constant 0.000000e+00 : f32
    %236 = vector.shape_cast %139 : vector<1x256xi1> to vector<1x256xi1>
    %237 = vector.broadcast %236 : vector<1x256xi1> to vector<2x256xi1>
    %238 = vector.broadcast %cst_150 : f32 to vector<2x256xf32>
    %239 = arith.select %237, %235, %238 : vector<2x256xi1>, vector<2x256xf32>
    %c0_151 = arith.constant 0 : index
    %c22 = arith.constant 22 : index
    %240 = vector.load %arg10[%c0_151, %c22] : memref<4x50xf32, #tpu.memory_space<vmem>>, vector<4x2xf32>
    %cst_152 = arith.constant dense<0.000000e+00> : vector<4x256xf32>
    %241 = tpu.matmul %240, %239, %cst_152 {dimension_numbers = #tpu.dot_dimension_numbers<[1], [0], [0], [1], [0, 0, 1, 1], [], []>} : vector<4x2xf32>, vector<2x256xf32>, vector<4x256xf32> -> vector<4x256xf32>
    %242 = arith.addf %234, %241 : vector<4x256xf32>
    %c0_153 = arith.constant 0 : index
    %c34_154 = arith.constant 34 : index
    %243 = vector.load %arg16[%c0_153, %c34_154] : memref<2x324xf32, #tpu.memory_space<vmem>>, vector<2x256xf32>
    %c0_155 = arith.constant 0 : index
    %c24_156 = arith.constant 24 : index
    %244 = vector.load %arg10[%c0_155, %c24_156] : memref<4x50xf32, #tpu.memory_space<vmem>>, vector<4x2xf32>
    %cst_157 = arith.constant dense<0.000000e+00> : vector<4x256xf32>
    %245 = tpu.matmul %244, %243, %cst_157 {dimension_numbers = #tpu.dot_dimension_numbers<[1], [0], [0], [1], [0, 0, 1, 1], [], []>} : vector<4x2xf32>, vector<2x256xf32>, vector<4x256xf32> -> vector<4x256xf32>
    %246 = arith.addf %242, %245 : vector<4x256xf32>
    %c0_158 = arith.constant 0 : index
    %c35 = arith.constant 35 : index
    %247 = vector.load %arg16[%c0_158, %c35] : memref<2x324xf32, #tpu.memory_space<vmem>>, vector<2x256xf32>
    %cst_159 = arith.constant 0.000000e+00 : f32
    %248 = vector.shape_cast %146 : vector<1x256xi1> to vector<1x256xi1>
    %249 = vector.broadcast %248 : vector<1x256xi1> to vector<2x256xi1>
    %250 = vector.broadcast %cst_159 : f32 to vector<2x256xf32>
    %251 = arith.select %249, %247, %250 : vector<2x256xi1>, vector<2x256xf32>
    %c0_160 = arith.constant 0 : index
    %c26 = arith.constant 26 : index
    %252 = vector.load %arg10[%c0_160, %c26] : memref<4x50xf32, #tpu.memory_space<vmem>>, vector<4x2xf32>
    %cst_161 = arith.constant dense<0.000000e+00> : vector<4x256xf32>
    %253 = tpu.matmul %252, %251, %cst_161 {dimension_numbers = #tpu.dot_dimension_numbers<[1], [0], [0], [1], [0, 0, 1, 1], [], []>} : vector<4x2xf32>, vector<2x256xf32>, vector<4x256xf32> -> vector<4x256xf32>
    %254 = arith.addf %246, %253 : vector<4x256xf32>
    %c0_162 = arith.constant 0 : index
    %c36 = arith.constant 36 : index
    %255 = vector.load %arg16[%c0_162, %c36] : memref<2x324xf32, #tpu.memory_space<vmem>>, vector<2x256xf32>
    %cst_163 = arith.constant 0.000000e+00 : f32
    %256 = vector.shape_cast %153 : vector<1x256xi1> to vector<1x256xi1>
    %257 = vector.broadcast %256 : vector<1x256xi1> to vector<2x256xi1>
    %258 = vector.broadcast %cst_163 : f32 to vector<2x256xf32>
    %259 = arith.select %257, %255, %258 : vector<2x256xi1>, vector<2x256xf32>
    %c0_164 = arith.constant 0 : index
    %c28_165 = arith.constant 28 : index
    %260 = vector.load %arg10[%c0_164, %c28_165] : memref<4x50xf32, #tpu.memory_space<vmem>>, vector<4x2xf32>
    %cst_166 = arith.constant dense<0.000000e+00> : vector<4x256xf32>
    %261 = tpu.matmul %260, %259, %cst_166 {dimension_numbers = #tpu.dot_dimension_numbers<[1], [0], [0], [1], [0, 0, 1, 1], [], []>} : vector<4x2xf32>, vector<2x256xf32>, vector<4x256xf32> -> vector<4x256xf32>
    %262 = arith.addf %254, %261 : vector<4x256xf32>
    %c0_167 = arith.constant 0 : index
    %c48 = arith.constant 48 : index
    %263 = vector.load %arg16[%c0_167, %c48] : memref<2x324xf32, #tpu.memory_space<vmem>>, vector<2x256xf32>
    %cst_168 = arith.constant 0.000000e+00 : f32
    %264 = vector.shape_cast %132 : vector<1x256xi1> to vector<1x256xi1>
    %265 = vector.broadcast %264 : vector<1x256xi1> to vector<2x256xi1>
    %266 = vector.broadcast %cst_168 : f32 to vector<2x256xf32>
    %267 = arith.select %265, %263, %266 : vector<2x256xi1>, vector<2x256xf32>
    %c0_169 = arith.constant 0 : index
    %c30 = arith.constant 30 : index
    %268 = vector.load %arg10[%c0_169, %c30] : memref<4x50xf32, #tpu.memory_space<vmem>>, vector<4x2xf32>
    %cst_170 = arith.constant dense<0.000000e+00> : vector<4x256xf32>
    %269 = tpu.matmul %268, %267, %cst_170 {dimension_numbers = #tpu.dot_dimension_numbers<[1], [0], [0], [1], [0, 0, 1, 1], [], []>} : vector<4x2xf32>, vector<2x256xf32>, vector<4x256xf32> -> vector<4x256xf32>
    %270 = arith.addf %262, %269 : vector<4x256xf32>
    %c0_171 = arith.constant 0 : index
    %c49 = arith.constant 49 : index
    %271 = vector.load %arg16[%c0_171, %c49] : memref<2x324xf32, #tpu.memory_space<vmem>>, vector<2x256xf32>
    %cst_172 = arith.constant 0.000000e+00 : f32
    %272 = vector.shape_cast %139 : vector<1x256xi1> to vector<1x256xi1>
    %273 = vector.broadcast %272 : vector<1x256xi1> to vector<2x256xi1>
    %274 = vector.broadcast %cst_172 : f32 to vector<2x256xf32>
    %275 = arith.select %273, %271, %274 : vector<2x256xi1>, vector<2x256xf32>
    %c0_173 = arith.constant 0 : index
    %c32_174 = arith.constant 32 : index
    %276 = vector.load %arg10[%c0_173, %c32_174] : memref<4x50xf32, #tpu.memory_space<vmem>>, vector<4x2xf32>
    %cst_175 = arith.constant dense<0.000000e+00> : vector<4x256xf32>
    %277 = tpu.matmul %276, %275, %cst_175 {dimension_numbers = #tpu.dot_dimension_numbers<[1], [0], [0], [1], [0, 0, 1, 1], [], []>} : vector<4x2xf32>, vector<2x256xf32>, vector<4x256xf32> -> vector<4x256xf32>
    %278 = arith.addf %270, %277 : vector<4x256xf32>
    %c0_176 = arith.constant 0 : index
    %c50 = arith.constant 50 : index
    %279 = vector.load %arg16[%c0_176, %c50] : memref<2x324xf32, #tpu.memory_space<vmem>>, vector<2x256xf32>
    %c0_177 = arith.constant 0 : index
    %c34_178 = arith.constant 34 : index
    %280 = vector.load %arg10[%c0_177, %c34_178] : memref<4x50xf32, #tpu.memory_space<vmem>>, vector<4x2xf32>
    %cst_179 = arith.constant dense<0.000000e+00> : vector<4x256xf32>
    %281 = tpu.matmul %280, %279, %cst_179 {dimension_numbers = #tpu.dot_dimension_numbers<[1], [0], [0], [1], [0, 0, 1, 1], [], []>} : vector<4x2xf32>, vector<2x256xf32>, vector<4x256xf32> -> vector<4x256xf32>
    %282 = arith.addf %278, %281 : vector<4x256xf32>
    %c0_180 = arith.constant 0 : index
    %c51 = arith.constant 51 : index
    %283 = vector.load %arg16[%c0_180, %c51] : memref<2x324xf32, #tpu.memory_space<vmem>>, vector<2x256xf32>
    %cst_181 = arith.constant 0.000000e+00 : f32
    %284 = vector.shape_cast %146 : vector<1x256xi1> to vector<1x256xi1>
    %285 = vector.broadcast %284 : vector<1x256xi1> to vector<2x256xi1>
    %286 = vector.broadcast %cst_181 : f32 to vector<2x256xf32>
    %287 = arith.select %285, %283, %286 : vector<2x256xi1>, vector<2x256xf32>
    %c0_182 = arith.constant 0 : index
    %c36_183 = arith.constant 36 : index
    %288 = vector.load %arg10[%c0_182, %c36_183] : memref<4x50xf32, #tpu.memory_space<vmem>>, vector<4x2xf32>
    %cst_184 = arith.constant dense<0.000000e+00> : vector<4x256xf32>
    %289 = tpu.matmul %288, %287, %cst_184 {dimension_numbers = #tpu.dot_dimension_numbers<[1], [0], [0], [1], [0, 0, 1, 1], [], []>} : vector<4x2xf32>, vector<2x256xf32>, vector<4x256xf32> -> vector<4x256xf32>
    %290 = arith.addf %282, %289 : vector<4x256xf32>
    %c0_185 = arith.constant 0 : index
    %c52 = arith.constant 52 : index
    %291 = vector.load %arg16[%c0_185, %c52] : memref<2x324xf32, #tpu.memory_space<vmem>>, vector<2x256xf32>
    %cst_186 = arith.constant 0.000000e+00 : f32
    %292 = vector.shape_cast %153 : vector<1x256xi1> to vector<1x256xi1>
    %293 = vector.broadcast %292 : vector<1x256xi1> to vector<2x256xi1>
    %294 = vector.broadcast %cst_186 : f32 to vector<2x256xf32>
    %295 = arith.select %293, %291, %294 : vector<2x256xi1>, vector<2x256xf32>
    %c0_187 = arith.constant 0 : index
    %c38 = arith.constant 38 : index
    %296 = vector.load %arg10[%c0_187, %c38] : memref<4x50xf32, #tpu.memory_space<vmem>>, vector<4x2xf32>
    %cst_188 = arith.constant dense<0.000000e+00> : vector<4x256xf32>
    %297 = tpu.matmul %296, %295, %cst_188 {dimension_numbers = #tpu.dot_dimension_numbers<[1], [0], [0], [1], [0, 0, 1, 1], [], []>} : vector<4x2xf32>, vector<2x256xf32>, vector<4x256xf32> -> vector<4x256xf32>
    %298 = arith.addf %290, %297 : vector<4x256xf32>
    %c0_189 = arith.constant 0 : index
    %c64 = arith.constant 64 : index
    %299 = vector.load %arg16[%c0_189, %c64] : memref<2x324xf32, #tpu.memory_space<vmem>>, vector<2x256xf32>
    %cst_190 = arith.constant 0.000000e+00 : f32
    %300 = vector.shape_cast %132 : vector<1x256xi1> to vector<1x256xi1>
    %301 = vector.broadcast %300 : vector<1x256xi1> to vector<2x256xi1>
    %302 = vector.broadcast %cst_190 : f32 to vector<2x256xf32>
    %303 = arith.select %301, %299, %302 : vector<2x256xi1>, vector<2x256xf32>
    %c0_191 = arith.constant 0 : index
    %c40 = arith.constant 40 : index
    %304 = vector.load %arg10[%c0_191, %c40] : memref<4x50xf32, #tpu.memory_space<vmem>>, vector<4x2xf32>
    %cst_192 = arith.constant dense<0.000000e+00> : vector<4x256xf32>
    %305 = tpu.matmul %304, %303, %cst_192 {dimension_numbers = #tpu.dot_dimension_numbers<[1], [0], [0], [1], [0, 0, 1, 1], [], []>} : vector<4x2xf32>, vector<2x256xf32>, vector<4x256xf32> -> vector<4x256xf32>
    %306 = arith.addf %298, %305 : vector<4x256xf32>
    %c0_193 = arith.constant 0 : index
    %c65 = arith.constant 65 : index
    %307 = vector.load %arg16[%c0_193, %c65] : memref<2x324xf32, #tpu.memory_space<vmem>>, vector<2x256xf32>
    %cst_194 = arith.constant 0.000000e+00 : f32
    %308 = vector.shape_cast %139 : vector<1x256xi1> to vector<1x256xi1>
    %309 = vector.broadcast %308 : vector<1x256xi1> to vector<2x256xi1>
    %310 = vector.broadcast %cst_194 : f32 to vector<2x256xf32>
    %311 = arith.select %309, %307, %310 : vector<2x256xi1>, vector<2x256xf32>
    %c0_195 = arith.constant 0 : index
    %c42 = arith.constant 42 : index
    %312 = vector.load %arg10[%c0_195, %c42] : memref<4x50xf32, #tpu.memory_space<vmem>>, vector<4x2xf32>
    %cst_196 = arith.constant dense<0.000000e+00> : vector<4x256xf32>
    %313 = tpu.matmul %312, %311, %cst_196 {dimension_numbers = #tpu.dot_dimension_numbers<[1], [0], [0], [1], [0, 0, 1, 1], [], []>} : vector<4x2xf32>, vector<2x256xf32>, vector<4x256xf32> -> vector<4x256xf32>
    %314 = arith.addf %306, %313 : vector<4x256xf32>
    %c0_197 = arith.constant 0 : index
    %c66 = arith.constant 66 : index
    %315 = vector.load %arg16[%c0_197, %c66] : memref<2x324xf32, #tpu.memory_space<vmem>>, vector<2x256xf32>
    %c0_198 = arith.constant 0 : index
    %c44 = arith.constant 44 : index
    %316 = vector.load %arg10[%c0_198, %c44] : memref<4x50xf32, #tpu.memory_space<vmem>>, vector<4x2xf32>
    %cst_199 = arith.constant dense<0.000000e+00> : vector<4x256xf32>
    %317 = tpu.matmul %316, %315, %cst_199 {dimension_numbers = #tpu.dot_dimension_numbers<[1], [0], [0], [1], [0, 0, 1, 1], [], []>} : vector<4x2xf32>, vector<2x256xf32>, vector<4x256xf32> -> vector<4x256xf32>
    %318 = arith.addf %314, %317 : vector<4x256xf32>
    %c0_200 = arith.constant 0 : index
    %c67 = arith.constant 67 : index
    %319 = vector.load %arg16[%c0_200, %c67] : memref<2x324xf32, #tpu.memory_space<vmem>>, vector<2x256xf32>
    %cst_201 = arith.constant 0.000000e+00 : f32
    %320 = vector.shape_cast %146 : vector<1x256xi1> to vector<1x256xi1>
    %321 = vector.broadcast %320 : vector<1x256xi1> to vector<2x256xi1>
    %322 = vector.broadcast %cst_201 : f32 to vector<2x256xf32>
    %323 = arith.select %321, %319, %322 : vector<2x256xi1>, vector<2x256xf32>
    %c0_202 = arith.constant 0 : index
    %c46 = arith.constant 46 : index
    %324 = vector.load %arg10[%c0_202, %c46] : memref<4x50xf32, #tpu.memory_space<vmem>>, vector<4x2xf32>
    %cst_203 = arith.constant dense<0.000000e+00> : vector<4x256xf32>
    %325 = tpu.matmul %324, %323, %cst_203 {dimension_numbers = #tpu.dot_dimension_numbers<[1], [0], [0], [1], [0, 0, 1, 1], [], []>} : vector<4x2xf32>, vector<2x256xf32>, vector<4x256xf32> -> vector<4x256xf32>
    %326 = arith.addf %318, %325 : vector<4x256xf32>
    %c0_204 = arith.constant 0 : index
    %c68 = arith.constant 68 : index
    %327 = vector.load %arg16[%c0_204, %c68] : memref<2x324xf32, #tpu.memory_space<vmem>>, vector<2x256xf32>
    %cst_205 = arith.constant 0.000000e+00 : f32
    %328 = vector.shape_cast %153 : vector<1x256xi1> to vector<1x256xi1>
    %329 = vector.broadcast %328 : vector<1x256xi1> to vector<2x256xi1>
    %330 = vector.broadcast %cst_205 : f32 to vector<2x256xf32>
    %331 = arith.select %329, %327, %330 : vector<2x256xi1>, vector<2x256xf32>
    %c0_206 = arith.constant 0 : index
    %c48_207 = arith.constant 48 : index
    %332 = vector.load %arg10[%c0_206, %c48_207] : memref<4x50xf32, #tpu.memory_space<vmem>>, vector<4x2xf32>
    %cst_208 = arith.constant dense<0.000000e+00> : vector<4x256xf32>
    %333 = tpu.matmul %332, %331, %cst_208 {dimension_numbers = #tpu.dot_dimension_numbers<[1], [0], [0], [1], [0, 0, 1, 1], [], []>} : vector<4x2xf32>, vector<2x256xf32>, vector<4x256xf32> -> vector<4x256xf32>
    %334 = arith.addf %326, %333 : vector<4x256xf32>
    %c0_209 = arith.constant 0 : index
    %c0_210 = arith.constant 0 : index
    %335 = vector.load %arg11[%c0_209, %c0_210] : memref<4x1xf32, #tpu.memory_space<vmem>>, vector<4x1xf32>
    %336 = vector.broadcast %335 : vector<4x1xf32> to vector<4x256xf32>
    %337 = arith.addf %334, %336 : vector<4x256xf32>
    %cst_211 = arith.constant 0.000000e+00 : f32
    %338 = vector.broadcast %cst_211 : f32 to vector<4x256xf32>
    %339 = arith.maximumf %337, %338 : vector<4x256xf32>
    %cst_212 = arith.constant 0xFF800000 : f32
    %340 = vector.broadcast %cst_212 : f32 to vector<4x290xf32>
    %c0_213 = arith.constant 0 : index
    %c0_214 = arith.constant 0 : index
    %341 = vector.load %arg17[%c0_213, %c0_214] : memref<4x290xf32, #tpu.memory_space<vmem>>, vector<4x290xf32>
    tpu.vector_store %arg17[%c0_213, %c0_214], %340 {strides = array<i32>} : memref<4x290xf32, #tpu.memory_space<vmem>>, vector<4x290xf32>,
    %c0_215 = arith.constant 0 : index
    %c17_216 = arith.constant 17 : index
    %342 = vector.load %arg17[%c0_215, %c17_216] : memref<4x290xf32, #tpu.memory_space<vmem>>, vector<4x256xf32>
    tpu.vector_store %arg17[%c0_215, %c17_216], %1 {strides = array<i32>} : memref<4x290xf32, #tpu.memory_space<vmem>>, vector<4x256xf32>,
    %c-1_i32_217 = arith.constant -1 : i32
    %343 = vector.broadcast %c-1_i32_217 : i32 to vector<1x256xi32>
    %344 = arith.addi %18, %343 : vector<1x256xi32>
    %c0_i32_218 = arith.constant 0 : i32
    %345 = vector.broadcast %c0_i32_218 : i32 to vector<1x256xi32>
    %346 = arith.cmpi sge, %344, %345 : vector<1x256xi32>
    %c16_i32_219 = arith.constant 16 : i32
    %347 = vector.broadcast %c16_i32_219 : i32 to vector<1x256xi32>
    %348 = arith.cmpi slt, %344, %347 : vector<1x256xi32>
    %349 = arith.andi %346, %348 : vector<1x256xi1>
    %c1_i32_220 = arith.constant 1 : i32
    %350 = vector.broadcast %c1_i32_220 : i32 to vector<1x256xi32>
    %351 = arith.addi %18, %350 : vector<1x256xi32>
    %c0_i32_221 = arith.constant 0 : i32
    %352 = vector.broadcast %c0_i32_221 : i32 to vector<1x256xi32>
    %353 = arith.cmpi sge, %351, %352 : vector<1x256xi32>
    %c16_i32_222 = arith.constant 16 : i32
    %354 = vector.broadcast %c16_i32_222 : i32 to vector<1x256xi32>
    %355 = arith.cmpi slt, %351, %354 : vector<1x256xi32>
    %356 = arith.andi %353, %355 : vector<1x256xi1>
    %c0_223 = arith.constant 0 : index
    %c0_224 = arith.constant 0 : index
    %357 = vector.load %arg17[%c0_223, %c0_224] : memref<4x290xf32, #tpu.memory_space<vmem>>, vector<4x256xf32>
    %cst_225 = arith.constant 0xFF800000 : f32
    %358 = vector.shape_cast %349 : vector<1x256xi1> to vector<1x256xi1>
    %359 = vector.broadcast %358 : vector<1x256xi1> to vector<4x256xi1>
    %360 = vector.broadcast %cst_225 : f32 to vector<4x256xf32>
    %361 = arith.select %359, %357, %360 : vector<4x256xi1>, vector<4x256xf32>
    %c0_226 = arith.constant 0 : index
    %c1_227 = arith.constant 1 : index
    %362 = vector.load %arg17[%c0_226, %c1_227] : memref<4x290xf32, #tpu.memory_space<vmem>>, vector<4x256xf32>
    %363 = arith.maximumf %361, %362 : vector<4x256xf32>
    %c0_228 = arith.constant 0 : index
    %c2_229 = arith.constant 2 : index
    %364 = vector.load %arg17[%c0_228, %c2_229] : memref<4x290xf32, #tpu.memory_space<vmem>>, vector<4x256xf32>
    %cst_230 = arith.constant 0xFF800000 : f32
    %365 = vector.shape_cast %356 : vector<1x256xi1> to vector<1x256xi1>
    %366 = vector.broadcast %365 : vector<1x256xi1> to vector<4x256xi1>
    %367 = vector.broadcast %cst_230 : f32 to vector<4x256xf32>
    %368 = arith.select %366, %364, %367 : vector<4x256xi1>, vector<4x256xf32>
    %369 = arith.maximumf %363, %368 : vector<4x256xf32>
    %c0_231 = arith.constant 0 : index
    %c16_232 = arith.constant 16 : index
    %370 = vector.load %arg17[%c0_231, %c16_232] : memref<4x290xf32, #tpu.memory_space<vmem>>, vector<4x256xf32>
    %cst_233 = arith.constant 0xFF800000 : f32
    %371 = vector.shape_cast %349 : vector<1x256xi1> to vector<1x256xi1>
    %372 = vector.broadcast %371 : vector<1x256xi1> to vector<4x256xi1>
    %373 = vector.broadcast %cst_233 : f32 to vector<4x256xf32>
    %374 = arith.select %372, %370, %373 : vector<4x256xi1>, vector<4x256xf32>
    %375 = arith.maximumf %369, %374 : vector<4x256xf32>
    %c0_234 = arith.constant 0 : index
    %c17_235 = arith.constant 17 : index
    %376 = vector.load %arg17[%c0_234, %c17_235] : memref<4x290xf32, #tpu.memory_space<vmem>>, vector<4x256xf32>
    %377 = arith.maximumf %375, %376 : vector<4x256xf32>
    %c0_236 = arith.constant 0 : index
    %c18_237 = arith.constant 18 : index
    %378 = vector.load %arg17[%c0_236, %c18_237] : memref<4x290xf32, #tpu.memory_space<vmem>>, vector<4x256xf32>
    %cst_238 = arith.constant 0xFF800000 : f32
    %379 = vector.shape_cast %356 : vector<1x256xi1> to vector<1x256xi1>
    %380 = vector.broadcast %379 : vector<1x256xi1> to vector<4x256xi1>
    %381 = vector.broadcast %cst_238 : f32 to vector<4x256xf32>
    %382 = arith.select %380, %378, %381 : vector<4x256xi1>, vector<4x256xf32>
    %383 = arith.maximumf %377, %382 : vector<4x256xf32>
    %c0_239 = arith.constant 0 : index
    %c32_240 = arith.constant 32 : index
    %384 = vector.load %arg17[%c0_239, %c32_240] : memref<4x290xf32, #tpu.memory_space<vmem>>, vector<4x256xf32>
    %cst_241 = arith.constant 0xFF800000 : f32
    %385 = vector.shape_cast %349 : vector<1x256xi1> to vector<1x256xi1>
    %386 = vector.broadcast %385 : vector<1x256xi1> to vector<4x256xi1>
    %387 = vector.broadcast %cst_241 : f32 to vector<4x256xf32>
    %388 = arith.select %386, %384, %387 : vector<4x256xi1>, vector<4x256xf32>
    %389 = arith.maximumf %383, %388 : vector<4x256xf32>
    %c0_242 = arith.constant 0 : index
    %c33_243 = arith.constant 33 : index
    %390 = vector.load %arg17[%c0_242, %c33_243] : memref<4x290xf32, #tpu.memory_space<vmem>>, vector<4x256xf32>
    %391 = arith.maximumf %389, %390 : vector<4x256xf32>
    %c0_244 = arith.constant 0 : index
    %c34_245 = arith.constant 34 : index
    %392 = vector.load %arg17[%c0_244, %c34_245] : memref<4x290xf32, #tpu.memory_space<vmem>>, vector<4x256xf32>
    %cst_246 = arith.constant 0xFF800000 : f32
    %393 = vector.shape_cast %356 : vector<1x256xi1> to vector<1x256xi1>
    %394 = vector.broadcast %393 : vector<1x256xi1> to vector<4x256xi1>
    %395 = vector.broadcast %cst_246 : f32 to vector<4x256xf32>
    %396 = arith.select %394, %392, %395 : vector<4x256xi1>, vector<4x256xf32>
    %397 = arith.maximumf %391, %396 : vector<4x256xf32>
    %c0_247 = arith.constant 0 : index
    %c0_248 = arith.constant 0 : index
    %398 = vector.load %arg12[%c0_247, %c0_248] : memref<4x4xf32, #tpu.memory_space<vmem>>, vector<4x4xf32>
    %cst_249 = arith.constant dense<0.000000e+00> : vector<4x256xf32>
    %399 = tpu.matmul %398, %397, %cst_249 {dimension_numbers = #tpu.dot_dimension_numbers<[1], [0], [0], [1], [0, 0, 1, 1], [], []>} : vector<4x4xf32>, vector<4x256xf32>, vector<4x256xf32> -> vector<4x256xf32>
    %c0_250 = arith.constant 0 : index
    %c0_251 = arith.constant 0 : index
    %400 = vector.load %arg13[%c0_250, %c0_251] : memref<4x1xf32, #tpu.memory_space<vmem>>, vector<4x1xf32>
    %401 = vector.broadcast %400 : vector<4x1xf32> to vector<4x256xf32>
    %402 = arith.addf %399, %401 : vector<4x256xf32>
    %cst_252 = arith.constant 0.000000e+00 : f32
    %403 = vector.broadcast %cst_252 : f32 to vector<4x256xf32>
    %404 = arith.maximumf %402, %403 : vector<4x256xf32>
    %c0_253 = arith.constant 0 : index
    %c0_254 = arith.constant 0 : index
    %c0_255 = arith.constant 0 : index
    %405 = vector.load %arg14[%c0_253, %c0_254, %c0_255] : memref<1x20x256xf32, #tpu.memory_space<vmem>>, vector<1x4x256xf32>
    %406 = vector.shape_cast %405 : vector<1x4x256xf32> to vector<4x256xf32>
    %407 = vector.shape_cast %25 : vector<4x256xf32> to vector<1x4x256xf32>
    tpu.vector_store %arg14[%c0_253, %c0_254, %c0_255], %407 {strides = array<i32>} : memref<1x20x256xf32, #tpu.memory_space<vmem>>, vector<1x4x256xf32>,
    %c0_256 = arith.constant 0 : index
    %c4_257 = arith.constant 4 : index
    %c0_258 = arith.constant 0 : index
    %408 = vector.load %arg14[%c0_256, %c4_257, %c0_258] : memref<1x20x256xf32, #tpu.memory_space<vmem>>, vector<1x8x256xf32>
    %409 = vector.shape_cast %408 : vector<1x8x256xf32> to vector<8x256xf32>
    %410 = vector.shape_cast %115 : vector<8x256xf32> to vector<1x8x256xf32>
    tpu.vector_store %arg14[%c0_256, %c4_257, %c0_258], %410 {strides = array<i32>} : memref<1x20x256xf32, #tpu.memory_space<vmem>>, vector<1x8x256xf32>,
    %c0_259 = arith.constant 0 : index
    %c12_260 = arith.constant 12 : index
    %c0_261 = arith.constant 0 : index
    %411 = vector.load %arg14[%c0_259, %c12_260, %c0_261] : memref<1x20x256xf32, #tpu.memory_space<vmem>>, vector<1x4x256xf32>
    %412 = vector.shape_cast %411 : vector<1x4x256xf32> to vector<4x256xf32>
    %413 = vector.shape_cast %339 : vector<4x256xf32> to vector<1x4x256xf32>
    tpu.vector_store %arg14[%c0_259, %c12_260, %c0_261], %413 {strides = array<i32>} : memref<1x20x256xf32, #tpu.memory_space<vmem>>, vector<1x4x256xf32>,
    %c0_262 = arith.constant 0 : index
    %c16_263 = arith.constant 16 : index
    %c0_264 = arith.constant 0 : index
    %414 = vector.load %arg14[%c0_262, %c16_263, %c0_264] : memref<1x20x256xf32, #tpu.memory_space<vmem>>, vector<1x4x256xf32>
    %415 = vector.shape_cast %414 : vector<1x4x256xf32> to vector<4x256xf32>
    %416 = vector.shape_cast %404 : vector<4x256xf32> to vector<1x4x256xf32>
    tpu.vector_store %arg14[%c0_262, %c16_263, %c0_264], %416 {strides = array<i32>} : memref<1x20x256xf32, #tpu.memory_space<vmem>>, vector<1x4x256xf32>,
    return
  }
  func.func @transform_0(%arg0: i32) -> (i32, i32, i32) {
    %c0_i32 = arith.constant 0 : i32
    %c0_i32_0 = arith.constant 0 : i32
    %c0_i32_1 = arith.constant 0 : i32
    return %arg0, %c0_i32, %c0_i32_0 : i32, i32, i32
  }
  func.func @transform_1(%arg0: i32) -> (i32, i32) {
    %c0_i32 = arith.constant 0 : i32
    %c0_i32_0 = arith.constant 0 : i32
    %c0_i32_1 = arith.constant 0 : i32
    return %c0_i32, %c0_i32_0 : i32, i32
  }
  func.func @transform_2(%arg0: i32) -> (i32, i32) {
    %c0_i32 = arith.constant 0 : i32
    %c0_i32_0 = arith.constant 0 : i32
    %c0_i32_1 = arith.constant 0 : i32
    return %c0_i32, %c0_i32_0 : i32, i32
  }
  func.func @transform_3(%arg0: i32) -> (i32, i32) {
    %c0_i32 = arith.constant 0 : i32
    %c0_i32_0 = arith.constant 0 : i32
    %c0_i32_1 = arith.constant 0 : i32
    return %c0_i32, %c0_i32_0 : i32, i32
  }
  func.func @transform_4(%arg0: i32) -> (i32, i32) {
    %c0_i32 = arith.constant 0 : i32
    %c0_i32_0 = arith.constant 0 : i32
    %c0_i32_1 = arith.constant 0 : i32
    return %c0_i32, %c0_i32_0 : i32, i32
  }
  func.func @transform_5(%arg0: i32) -> (i32, i32) {
    %c0_i32 = arith.constant 0 : i32
    %c0_i32_0 = arith.constant 0 : i32
    %c0_i32_1 = arith.constant 0 : i32
    return %c0_i32, %c0_i32_0 : i32, i32
  }
  func.func @transform_6(%arg0: i32) -> (i32, i32) {
    %c0_i32 = arith.constant 0 : i32
    %c0_i32_0 = arith.constant 0 : i32
    %c0_i32_1 = arith.constant 0 : i32
    return %c0_i32, %c0_i32_0 : i32, i32
  }
  func.func @transform_7(%arg0: i32) -> (i32, i32) {
    %c0_i32 = arith.constant 0 : i32
    %c0_i32_0 = arith.constant 0 : i32
    %c0_i32_1 = arith.constant 0 : i32
    return %c0_i32, %c0_i32_0 : i32, i32
  }
  func.func @transform_8(%arg0: i32) -> (i32, i32) {
    %c0_i32 = arith.constant 0 : i32
    %c0_i32_0 = arith.constant 0 : i32
    %c0_i32_1 = arith.constant 0 : i32
    return %c0_i32, %c0_i32_0 : i32, i32
  }
  func.func @transform_9(%arg0: i32) -> (i32, i32) {
    %c0_i32 = arith.constant 0 : i32
    %c0_i32_0 = arith.constant 0 : i32
    %c0_i32_1 = arith.constant 0 : i32
    return %c0_i32, %c0_i32_0 : i32, i32
  }
  func.func @transform_10(%arg0: i32) -> (i32, i32) {
    %c0_i32 = arith.constant 0 : i32
    %c0_i32_0 = arith.constant 0 : i32
    %c0_i32_1 = arith.constant 0 : i32
    return %c0_i32, %c0_i32_0 : i32, i32
  }
  func.func @transform_11(%arg0: i32) -> (i32, i32) {
    %c0_i32 = arith.constant 0 : i32
    %c0_i32_0 = arith.constant 0 : i32
    %c0_i32_1 = arith.constant 0 : i32
    return %c0_i32, %c0_i32_0 : i32, i32
  }
  func.func @transform_12(%arg0: i32) -> (i32, i32) {
    %c0_i32 = arith.constant 0 : i32
    %c0_i32_0 = arith.constant 0 : i32
    %c0_i32_1 = arith.constant 0 : i32
    return %c0_i32, %c0_i32_0 : i32, i32
  }
  func.func @transform_13(%arg0: i32) -> (i32, i32, i32) {
    %c0_i32 = arith.constant 0 : i32
    %c0_i32_0 = arith.constant 0 : i32
    %c0_i32_1 = arith.constant 0 : i32
    return %arg0, %c0_i32, %c0_i32_0 : i32, i32, i32
  }
}

</mosaic_0001>

<llo_original>
// kernel: inception_forward.1
$region0: #{inception_forward.1}
  #allocation0 [shape = 'u32[]', space=smem, size = 0x4, offset = 0x4, fixed_abs, tag = 'smem constant byte address 0x4 - core index']
  #allocation1 [shape = 'u32[144,128]{1,0:T(1,128)}', space=vmem, size = 0x12000, scoped, tag = 'internal scratch']
  #allocation2 [shape = 'f32[4,290]{1,0:T(4,128)}', space=vmem, size = 0x1800, scoped, tag = 'scratch operand']
  #allocation3 [shape = 'f32[2,324]{1,0:T(2,128)}', space=vmem, size = 0xc00, scoped, tag = 'scratch operand']
  #allocation4 [shape = 'f32[4,290]{1,0:T(4,128)}', space=vmem, size = 0x1800, scoped, tag = 'scratch operand']
  %s0 = inlined_call_operand.vmem [shape: f32[2,4,256], index: 0, kind: input, shape index: {}]
  %s1 = inlined_call_operand.vmem [shape: f32[4,4], index: 1, kind: input, shape index: {}]
  %s2 = inlined_call_operand.vmem [shape: f32[4,1], index: 2, kind: input, shape index: {}]
  %s3 = inlined_call_operand.vmem [shape: f32[4,4], index: 3, kind: input, shape index: {}]
  %s4 = inlined_call_operand.vmem [shape: f32[4,1], index: 4, kind: input, shape index: {}]
  %s5 = inlined_call_operand.vmem [shape: f32[8,36], index: 5, kind: input, shape index: {}]
  %s6 = inlined_call_operand.vmem [shape: f32[8,1], index: 6, kind: input, shape index: {}]
  %s7 = inlined_call_operand.vmem [shape: f32[2,4], index: 7, kind: input, shape index: {}]
  %s8 = inlined_call_operand.vmem [shape: f32[2,1], index: 8, kind: input, shape index: {}]
  %s9 = inlined_call_operand.vmem [shape: f32[4,50], index: 9, kind: input, shape index: {}]
  %s10 = inlined_call_operand.vmem [shape: f32[4,1], index: 10, kind: input, shape index: {}]
  %s11 = inlined_call_operand.vmem [shape: f32[4,4], index: 11, kind: input, shape index: {}]
  %s12 = inlined_call_operand.vmem [shape: f32[4,1], index: 12, kind: input, shape index: {}]
  %s13 = inlined_call_operand.vmem [shape: f32[2,20,256], index: 13, kind: output, shape index: {}]
  %s14 = sld [smem:[#allocation0]]
  $region85: #{inception_forward.1} parent=0
    _
  %s16 = ssub.s32 1, %s14
  %s17 = scalar_select 0, %s16, %s14
  loop: start=0, step=1, limit=4
  $region2: #{inception_forward.1} parent=0 // loop_pre_header
    _
  $region3: #{inception_forward.1} parent=0 // loop_header
    %s19 = sphi 0, %s23
    %p20 = scmp.ge.s32.totalorder %s19, 4
    %s29 = sphi 0, %s31
    %s32 = sphi 0, %s29
    %s33 = sphi 0, %s32
    %s49 = sphi 0, %s33
    %s53 = sphi 0, %s53
    %s55 = sphi 0, %s53
    %s56 = sphi 0, %s55
    %s70 = sphi 0, %s56
    %s74 = sphi 0, %s74
    %s76 = sphi 0, %s74
    %s77 = sphi 0, %s76
    %s91 = sphi 0, %s77
    %s95 = sphi 0, %s95
    %s97 = sphi 0, %s95
    %s98 = sphi 0, %s97
    %s112 = sphi 0, %s98
    %s116 = sphi 0, %s116
    %s118 = sphi 0, %s116
    %s119 = sphi 0, %s118
    %s133 = sphi 0, %s119
    %s137 = sphi 0, %s137
    %s139 = sphi 0, %s137
    %s140 = sphi 0, %s139
    %s154 = sphi 0, %s140
    %s158 = sphi 0, %s158
    %s160 = sphi 0, %s158
    %s161 = sphi 0, %s160
    %s175 = sphi 0, %s161
    %s179 = sphi 0, %s179
    %s181 = sphi 0, %s179
    %s182 = sphi 0, %s181
    %s196 = sphi 0, %s182
    %s200 = sphi 0, %s200
    %s202 = sphi 0, %s200
    %s203 = sphi 0, %s202
    %s217 = sphi 0, %s203
    %s221 = sphi 0, %s221
    %s223 = sphi 0, %s221
    %s224 = sphi 0, %s223
    %s238 = sphi 0, %s224
    %s242 = sphi 0, %s242
    %s244 = sphi 0, %s242
    %s245 = sphi 0, %s244
    %s259 = sphi 0, %s245
    %s263 = sphi 0, %s263
    %s265 = sphi 0, %s263
    %s266 = sphi 0, %s265
    %s280 = sphi 0, %s266
    %s284 = sphi 0, %s284
    %s286 = sphi 0, %s284
    %s287 = sphi 0, %s286
    %s301 = sphi 0, %s287
    %s307 = sphi 0, %s309
    %s310 = sphi 0, %s307
    %s311 = sphi 0, %s310
    %s327 = sphi 0, %s311
  $region4: #{inception_forward.1} parent=0 // loop_header_branch
    %22 = sbr.rel (%p20) target = $region8
  $region5: #{inception_forward.1} parent=0 // loop_body
    %s24 = ssub.s32 %s19, 1
    %s25 = ssub.s32 %s19, 2
    %s26 = sadd.s32 %s19, 1
    %s27 = ssub.s32 %s19, %s26
    %p28 = scmp.eq.s32.totalorder %s27, 0
    %s30 = sadd.s32 %s29, 1
    %s31 = scalar_select %p28, %s29, %s30
    %p34 = pneg %p28
    %p35 = scmp.eq.s32.totalorder %s19, 1
    %p36 = por %p34, %p35
    %p37 = scmp.ne.s32.totalorder %s29, %s32
    %p38 = scmp.eq.s32.totalorder %s19, 0
    %p39 = por %p37, %p38
    %p40 = scmp.ne.s32.totalorder %s29, %s32
    %p41 = scmp.eq.s32.totalorder %s24, 1
    %p42 = por %p40, %p41
    %p43 = scmp.ne.s32.totalorder %s32, %s33
    %p44 = scmp.eq.s32.totalorder %s24, 0
    %p45 = por %p43, %p44
    %p46 = scmp.ne.s32.totalorder %s32, %s33
    %p47 = scmp.eq.s32.totalorder %s25, 1
    %p48 = por %p46, %p47
    %p50 = scmp.ne.s32.totalorder %s33, %s49
    %p51 = scmp.eq.s32.totalorder %s25, 0
    %p52 = por %p50, %p51
    %s54 = sadd.s32 %s53, 1
    %p57 = scmp.eq.s32.totalorder %s19, 1
    %p58 = scmp.ne.s32.totalorder %s53, %s55
    %p59 = scmp.eq.s32.totalorder %s19, 0
    %p60 = por %p58, %p59
    %p61 = scmp.ne.s32.totalorder %s53, %s55
    %p62 = scmp.eq.s32.totalorder %s24, 1
    %p63 = por %p61, %p62
    %p64 = scmp.ne.s32.totalorder %s55, %s56
    %p65 = scmp.eq.s32.totalorder %s24, 0
    %p66 = por %p64, %p65
    %p67 = scmp.ne.s32.totalorder %s55, %s56
    %p68 = scmp.eq.s32.totalorder %s25, 1
    %p69 = por %p67, %p68
    %p71 = scmp.ne.s32.totalorder %s56, %s70
    %p72 = scmp.eq.s32.totalorder %s25, 0
    %p73 = por %p71, %p72
    %s75 = sadd.s32 %s74, 1
    %p78 = scmp.eq.s32.totalorder %s19, 1
    %p79 = scmp.ne.s32.totalorder %s74, %s76
    %p80 = scmp.eq.s32.totalorder %s19, 0
    %p81 = por %p79, %p80
    %p82 = scmp.ne.s32.totalorder %s74, %s76
    %p83 = scmp.eq.s32.totalorder %s24, 1
    %p84 = por %p82, %p83
    %p85 = scmp.ne.s32.totalorder %s76, %s77
    %p86 = scmp.eq.s32.totalorder %s24, 0
    %p87 = por %p85, %p86
    %p88 = scmp.ne.s32.totalorder %s76, %s77
    %p89 = scmp.eq.s32.totalorder %s25, 1
    %p90 = por %p88, %p89
    %p92 = scmp.ne.s32.totalorder %s77, %s91
    %p93 = scmp.eq.s32.totalorder %s25, 0
    %p94 = por %p92, %p93
    %s96 = sadd.s32 %s95, 1
    %p99 = scmp.eq.s32.totalorder %s19, 1
    %p100 = scmp.ne.s32.totalorder %s95, %s97
    %p101 = scmp.eq.s32.totalorder %s19, 0
    %p102 = por %p100, %p101
    %p103 = scmp.ne.s32.totalorder %s95, %s97
    %p104 = scmp.eq.s32.totalorder %s24, 1
    %p105 = por %p103, %p104
    %p106 = scmp.ne.s32.totalorder %s97, %s98
    %p107 = scmp.eq.s32.totalorder %s24, 0
    %p108 = por %p106, %p107
    %p109 = scmp.ne.s32.totalorder %s97, %s98
    %p110 = scmp.eq.s32.totalorder %s25, 1
    %p111 = por %p109, %p110
    %p113 = scmp.ne.s32.totalorder %s98, %s112
    %p114 = scmp.eq.s32.totalorder %s25, 0
    %p115 = por %p113, %p114
    %s117 = sadd.s32 %s116, 1
    %p120 = scmp.eq.s32.totalorder %s19, 1
    %p121 = scmp.ne.s32.totalorder %s116, %s118
    %p122 = scmp.eq.s32.totalorder %s19, 0
    %p123 = por %p121, %p122
    %p124 = scmp.ne.s32.totalorder %s116, %s118
    %p125 = scmp.eq.s32.totalorder %s24, 1
    %p126 = por %p124, %p125
    %p127 = scmp.ne.s32.totalorder %s118, %s119
    %p128 = scmp.eq.s32.totalorder %s24, 0
    %p129 = por %p127, %p128
    %p130 = scmp.ne.s32.totalorder %s118, %s119
    %p131 = scmp.eq.s32.totalorder %s25, 1
    %p132 = por %p130, %p131
    %p134 = scmp.ne.s32.totalorder %s119, %s133
    %p135 = scmp.eq.s32.totalorder %s25, 0
    %p136 = por %p134, %p135
    %s138 = sadd.s32 %s137, 1
    %p141 = scmp.eq.s32.totalorder %s19, 1
    %p142 = scmp.ne.s32.totalorder %s137, %s139
    %p143 = scmp.eq.s32.totalorder %s19, 0
    %p144 = por %p142, %p143
    %p145 = scmp.ne.s32.totalorder %s137, %s139
    %p146 = scmp.eq.s32.totalorder %s24, 1
    %p147 = por %p145, %p146
    %p148 = scmp.ne.s32.totalorder %s139, %s140
    %p149 = scmp.eq.s32.totalorder %s24, 0
    %p150 = por %p148, %p149
    %p151 = scmp.ne.s32.totalorder %s139, %s140
    %p152 = scmp.eq.s32.totalorder %s25, 1
    %p153 = por %p151, %p152
    %p155 = scmp.ne.s32.totalorder %s140, %s154
    %p156 = scmp.eq.s32.totalorder %s25, 0
    %p157 = por %p155, %p156
    %s159 = sadd.s32 %s158, 1
    %p162 = scmp.eq.s32.totalorder %s19, 1
    %p163 = scmp.ne.s32.totalorder %s158, %s160
    %p164 = scmp.eq.s32.totalorder %s19, 0
    %p165 = por %p163, %p164
    %p166 = scmp.ne.s32.totalorder %s158, %s160
    %p167 = scmp.eq.s32.totalorder %s24, 1
    %p168 = por %p166, %p167
    %p169 = scmp.ne.s32.totalorder %s160, %s161
    %p170 = scmp.eq.s32.totalorder %s24, 0
    %p171 = por %p169, %p170
    %p172 = scmp.ne.s32.totalorder %s160, %s161
    %p173 = scmp.eq.s32.totalorder %s25, 1
    %p174 = por %p172, %p173
    %p176 = scmp.ne.s32.totalorder %s161, %s175
    %p177 = scmp.eq.s32.totalorder %s25, 0
    %p178 = por %p176, %p177
    %s180 = sadd.s32 %s179, 1
    %p183 = scmp.eq.s32.totalorder %s19, 1
    %p184 = scmp.ne.s32.totalorder %s179, %s181
    %p185 = scmp.eq.s32.totalorder %s19, 0
    %p186 = por %p184, %p185
    %p187 = scmp.ne.s32.totalorder %s179, %s181
    %p188 = scmp.eq.s32.totalorder %s24, 1
    %p189 = por %p187, %p188
    %p190 = scmp.ne.s32.totalorder %s181, %s182
    %p191 = scmp.eq.s32.totalorder %s24, 0
    %p192 = por %p190, %p191
    %p193 = scmp.ne.s32.totalorder %s181, %s182
    %p194 = scmp.eq.s32.totalorder %s25, 1
    %p195 = por %p193, %p194
    %p197 = scmp.ne.s32.totalorder %s182, %s196
    %p198 = scmp.eq.s32.totalorder %s25, 0
    %p199 = por %p197, %p198
    %s201 = sadd.s32 %s200, 1
    %p204 = scmp.eq.s32.totalorder %s19, 1
    %p205 = scmp.ne.s32.totalorder %s200, %s202
    %p206 = scmp.eq.s32.totalorder %s19, 0
    %p207 = por %p205, %p206
    %p208 = scmp.ne.s32.totalorder %s200, %s202
    %p209 = scmp.eq.s32.totalorder %s24, 1
    %p210 = por %p208, %p209
    %p211 = scmp.ne.s32.totalorder %s202, %s203
    %p212 = scmp.eq.s32.totalorder %s24, 0
    %p213 = por %p211, %p212
    %p214 = scmp.ne.s32.totalorder %s202, %s203
    %p215 = scmp.eq.s32.totalorder %s25, 1
    %p216 = por %p214, %p215
    %p218 = scmp.ne.s32.totalorder %s203, %s217
    %p219 = scmp.eq.s32.totalorder %s25, 0
    %p220 = por %p218, %p219
    %s222 = sadd.s32 %s221, 1
    %p225 = scmp.eq.s32.totalorder %s19, 1
    %p226 = scmp.ne.s32.totalorder %s221, %s223
    %p227 = scmp.eq.s32.totalorder %s19, 0
    %p228 = por %p226, %p227
    %p229 = scmp.ne.s32.totalorder %s221, %s223
    %p230 = scmp.eq.s32.totalorder %s24, 1
    %p231 = por %p229, %p230
    %p232 = scmp.ne.s32.totalorder %s223, %s224
    %p233 = scmp.eq.s32.totalorder %s24, 0
    %p234 = por %p232, %p233
    %p235 = scmp.ne.s32.totalorder %s223, %s224
    %p236 = scmp.eq.s32.totalorder %s25, 1
    %p237 = por %p235, %p236
    %p239 = scmp.ne.s32.totalorder %s224, %s238
    %p240 = scmp.eq.s32.totalorder %s25, 0
    %p241 = por %p239, %p240
    %s243 = sadd.s32 %s242, 1
    %p246 = scmp.eq.s32.totalorder %s19, 1
    %p247 = scmp.ne.s32.totalorder %s242, %s244
    %p248 = scmp.eq.s32.totalorder %s19, 0
    %p249 = por %p247, %p248
    %p250 = scmp.ne.s32.totalorder %s242, %s244
    %p251 = scmp.eq.s32.totalorder %s24, 1
    %p252 = por %p250, %p251
    %p253 = scmp.ne.s32.totalorder %s244, %s245
    %p254 = scmp.eq.s32.totalorder %s24, 0
    %p255 = por %p253, %p254
    %p256 = scmp.ne.s32.totalorder %s244, %s245
    %p257 = scmp.eq.s32.totalorder %s25, 1
    %p258 = por %p256, %p257
    %p260 = scmp.ne.s32.totalorder %s245, %s259
    %p261 = scmp.eq.s32.totalorder %s25, 0
    %p262 = por %p260, %p261
    %s264 = sadd.s32 %s263, 1
    %p267 = scmp.eq.s32.totalorder %s19, 1
    %p268 = scmp.ne.s32.totalorder %s263, %s265
    %p269 = scmp.eq.s32.totalorder %s19, 0
    %p270 = por %p268, %p269
    %p271 = scmp.ne.s32.totalorder %s263, %s265
    %p272 = scmp.eq.s32.totalorder %s24, 1
    %p273 = por %p271, %p272
    %p274 = scmp.ne.s32.totalorder %s265, %s266
    %p275 = scmp.eq.s32.totalorder %s24, 0
    %p276 = por %p274, %p275
    %p277 = scmp.ne.s32.totalorder %s265, %s266
    %p278 = scmp.eq.s32.totalorder %s25, 1
    %p279 = por %p277, %p278
    %p281 = scmp.ne.s32.totalorder %s266, %s280
    %p282 = scmp.eq.s32.totalorder %s25, 0
    %p283 = por %p281, %p282
    %s285 = sadd.s32 %s284, 1
    %p288 = scmp.eq.s32.totalorder %s19, 1
    %p289 = scmp.ne.s32.totalorder %s284, %s286
    %p290 = scmp.eq.s32.totalorder %s19, 0
    %p291 = por %p289, %p290
    %p292 = scmp.ne.s32.totalorder %s284, %s286
    %p293 = scmp.eq.s32.totalorder %s24, 1
    %p294 = por %p292, %p293
    %p295 = scmp.ne.s32.totalorder %s286, %s287
    %p296 = scmp.eq.s32.totalorder %s24, 0
    %p297 = por %p295, %p296
    %p298 = scmp.ne.s32.totalorder %s286, %s287
    %p299 = scmp.eq.s32.totalorder %s25, 1
    %p300 = por %p298, %p299
    %p302 = scmp.ne.s32.totalorder %s287, %s301
    %p303 = scmp.eq.s32.totalorder %s25, 0
    %p304 = por %p302, %p303
    %s305 = ssub.s32 %s19, %s26
    %p306 = scmp.eq.s32.totalorder %s305, 0
    %s308 = sadd.s32 %s307, 1
    %s309 = scalar_select %p306, %s307, %s308
    %p312 = pneg %p306
    %p313 = scmp.eq.s32.totalorder %s19, 1
    %p314 = por %p312, %p313
    %p315 = scmp.ne.s32.totalorder %s307, %s310
    %p316 = scmp.eq.s32.totalorder %s19, 0
    %p317 = por %p315, %p316
    %p318 = scmp.ne.s32.totalorder %s307, %s310
    %p319 = scmp.eq.s32.totalorder %s24, 1
    %p320 = por %p318, %p319
    %p321 = scmp.ne.s32.totalorder %s310, %s311
    %p322 = scmp.eq.s32.totalorder %s24, 0
    %p323 = por %p321, %p322
    %p324 = scmp.ne.s32.totalorder %s310, %s311
    %p325 = scmp.eq.s32.totalorder %s25, 1
    %p326 = por %p324, %p325
    %p328 = scmp.ne.s32.totalorder %s311, %s327
    %p329 = scmp.eq.s32.totalorder %s25, 0
    %p330 = por %p328, %p329
    %p331 = scmp.le.s32.totalorder 1, %s19
    %p332 = scmp.lt.s32.totalorder %s19, 3
    %p333 = pnand %p331, %p332
    %p334 = pneg %p333
    // Predicated region
    $region9: #{inception_forward.1} parent=5 // pred_check
      _
    $region10: #{inception_forward.1} parent=5 // pred_check_branch
      %336 = sbr.rel (%p333) target = $region12
    $region11: #{inception_forward.1} parent=5 // pred_region
      %s337 = ssub.s32 %s19, 1
      // Predicated region
      $region13: #{inception_forward.1} parent=11 // pred_check
        %p338 = pneg %p66
      $region14: #{inception_forward.1} parent=11 // pred_check_branch
        %340 = sbr.rel (%p338) target = $region16
      $region15: #{inception_forward.1} parent=11 // pred_region
        _
      $region16: #{inception_forward.1} parent=11 // pred_fallthru
        _
      // Predicated region
      $region17: #{inception_forward.1} parent=11 // pred_check
        %p341 = pneg %p87
      $region18: #{inception_forward.1} parent=11 // pred_check_branch
        %343 = sbr.rel (%p341) target = $region20
      $region19: #{inception_forward.1} parent=11 // pred_region
        _
      $region20: #{inception_forward.1} parent=11 // pred_fallthru
        _
      // Predicated region
      $region21: #{inception_forward.1} parent=11 // pred_check
        %p344 = pneg %p108
      $region22: #{inception_forward.1} parent=11 // pred_check_branch
        %346 = sbr.rel (%p344) target = $region24
      $region23: #{inception_forward.1} parent=11 // pred_region
        _
      $region24: #{inception_forward.1} parent=11 // pred_fallthru
        _
      // Predicated region
      $region25: #{inception_forward.1} parent=11 // pred_check
        %p347 = pneg %p129
      $region26: #{inception_forward.1} parent=11 // pred_check_branch
        %349 = sbr.rel (%p347) target = $region28
      $region27: #{inception_forward.1} parent=11 // pred_region
        _
      $region28: #{inception_forward.1} parent=11 // pred_fallthru
        _
      // Predicated region
      $region29: #{inception_forward.1} parent=11 // pred_check
        %p350 = pneg %p150
      $region30: #{inception_forward.1} parent=11 // pred_check_branch
        %352 = sbr.rel (%p350) target = $region32
      $region31: #{inception_forward.1} parent=11 // pred_region
        _
      $region32: #{inception_forward.1} parent=11 // pred_fallthru
        _
      // Predicated region
      $region33: #{inception_forward.1} parent=11 // pred_check
        %p353 = pneg %p171
      $region34: #{inception_forward.1} parent=11 // pred_check_branch
        %355 = sbr.rel (%p353) target = $region36
      $region35: #{inception_forward.1} parent=11 // pred_region
        _
      $region36: #{inception_forward.1} parent=11 // pred_fallthru
        _
      // Predicated region
      $region37: #{inception_forward.1} parent=11 // pred_check
        %p356 = pneg %p192
      $region38: #{inception_forward.1} parent=11 // pred_check_branch
        %358 = sbr.rel (%p356) target = $region40
      $region39: #{inception_forward.1} parent=11 // pred_region
        _
      $region40: #{inception_forward.1} parent=11 // pred_fallthru
        _
      // Predicated region
      $region41: #{inception_forward.1} parent=11 // pred_check
        %p359 = pneg %p213
      $region42: #{inception_forward.1} parent=11 // pred_check_branch
        %361 = sbr.rel (%p359) target = $region44
      $region43: #{inception_forward.1} parent=11 // pred_region
        _
      $region44: #{inception_forward.1} parent=11 // pred_fallthru
        _
      // Predicated region
      $region45: #{inception_forward.1} parent=11 // pred_check
        %p362 = pneg %p234
      $region46: #{inception_forward.1} parent=11 // pred_check_branch
        %364 = sbr.rel (%p362) target = $region48
      $region47: #{inception_forward.1} parent=11 // pred_region
        _
      $region48: #{inception_forward.1} parent=11 // pred_fallthru
        _
      // Predicated region
      $region49: #{inception_forward.1} parent=11 // pred_check
        %p365 = pneg %p255
      $region50: #{inception_forward.1} parent=11 // pred_check_branch
        %367 = sbr.rel (%p365) target = $region52
      $region51: #{inception_forward.1} parent=11 // pred_region
        _
      $region52: #{inception_forward.1} parent=11 // pred_fallthru
        _
      // Predicated region
      $region53: #{inception_forward.1} parent=11 // pred_check
        %p368 = pneg %p276
      $region54: #{inception_forward.1} parent=11 // pred_check_branch
        %370 = sbr.rel (%p368) target = $region56
      $region55: #{inception_forward.1} parent=11 // pred_region
        _
      $region56: #{inception_forward.1} parent=11 // pred_fallthru
        _
      // Predicated region
      $region57: #{inception_forward.1} parent=11 // pred_check
        %p371 = pneg %p297
      $region58: #{inception_forward.1} parent=11 // pred_check_branch
        %373 = sbr.rel (%p371) target = $region60
      $region59: #{inception_forward.1} parent=11 // pred_region
        _
      $region60: #{inception_forward.1} parent=11 // pred_fallthru
        _
    $region12: #{inception_forward.1} parent=5 // pred_fallthru
      _
    %p374 = scmp.lt.s32.totalorder %s19, 2
    // Predicated region
    $region61: #{inception_forward.1} parent=5 // pred_check
      %p375 = pneg %p374
    $region62: #{inception_forward.1} parent=5 // pred_check_branch
      %377 = sbr.rel (%p375) target = $region64
    $region63: #{inception_forward.1} parent=5 // pred_region
      // Predicated region
      $region65: #{inception_forward.1} parent=63 // pred_check
        %p378 = pneg %p39
      $region66: #{inception_forward.1} parent=63 // pred_check_branch
        %380 = sbr.rel (%p378) target = $region68
      $region67: #{inception_forward.1} parent=63 // pred_region
        %p381 = scmp.lt.s32.totalorder %s19, 1
        %s382 = scalar_select %p381, %s19, 1
        %s383 = smul.addr %s382, 2
        %s384 = smul.addr %s383, 4
        %s385 = scalar_lea.vmem %s0, %s384
      $region68: #{inception_forward.1} parent=63 // pred_fallthru
        _
    $region64: #{inception_forward.1} parent=5 // pred_fallthru
      _
    %p386 = scmp.le.s32.totalorder 1, %s19
    %p387 = scmp.lt.s32.totalorder %s19, 3
    %p388 = pnand %p386, %p387
    %p389 = pneg %p388
    // Predicated region
    $region69: #{inception_forward.1} parent=5 // pred_check
      _
    $region70: #{inception_forward.1} parent=5 // pred_check_branch
      %391 = sbr.rel (%p388) target = $region72
    $region71: #{inception_forward.1} parent=5 // pred_region
      %s392 = ssub.s32 %s19, 1
      %p393 = scmp.lt.s32.totalorder %s24, 1
      %s394 = scalar_select %p393, %s24, 1
      %s395 = smul.addr %s394, 2
      %s396 = smul.addr %s395, 4
      %s397 = scalar_lea.vmem %s0, %s396
      %p398 = pneg %p45
      %p399 = pneg %p42
      %p400 = pneg %p66
      %p401 = pneg %p63
      %p402 = pneg %p87
      %p403 = pneg %p84
      %p404 = pneg %p108
      %p405 = pneg %p105
      %p406 = pneg %p129
      %p407 = pneg %p126
      %p408 = pneg %p150
      %p409 = pneg %p147
      %p410 = pneg %p171
      %p411 = pneg %p168
      %p412 = pneg %p192
      %p413 = pneg %p189
      %p414 = pneg %p213
      %p415 = pneg %p210
      %p416 = pneg %p234
      %p417 = pneg %p231
      %p418 = pneg %p255
      %p419 = pneg %p252
      %p420 = pneg %p276
      %p421 = pneg %p273
      %p422 = pneg %p297
      %p423 = pneg %p294
      %p424 = pneg %p323
      %p425 = pneg %p320
      %p426 = scmp.lt.s32.totalorder %s24, 1
      %s427 = scalar_select %p426, %s24, 1
      %s428 = smul.addr %s427, 6
      %s429 = smul.addr %s428, 8
      %s430 = scalar_lea.vmem %s13, %s429
      %p431 = scmp.lt.s32.totalorder %s24, 1
      %s432 = scalar_select %p431, %s24, 1
      %s433 = smul.addr %s432, 2
      %s434 = smul.addr %s433, 4
      %s435 = scalar_lea.vmem %s0, %s434
      %p436 = scmp.lt.s32.totalorder %s24, 1
      %s437 = scalar_select %p436, %s24, 1
      %s438 = smul.addr %s437, 6
      %s439 = smul.addr %s438, 8
      %s440 = scalar_lea.vmem %s13, %s439
      %v441 = vld [vmem:[%s435] sm:$0xff]
      %v442 = vlaneseq
      %v443 = vand.u32 %v442, 127
      %v444 = vadd.s32 %v443, 128
      %vm445 = vcmp.lt.s32.totalorder %v443, 0
      %v446 = vsub.s32 0, %v443
      %v447 = vsel %vm445, %v446, %v443
      %v448 = vshrl.u32 %v447, 4
      %v449 = vand.u32 %v447, 15
      %v450 = vsub.s32 0, %v449
      %v451 = vsel %vm445, %v450, %v449
      %vm452 = vcmp.lt.s32.totalorder %v444, 0
      %v453 = vsub.s32 0, %v444
      %v454 = vsel %vm452, %v453, %v444
      %v455 = vshrl.u32 %v454, 4
      %v456 = vand.u32 %v454, 15
      %v457 = vsub.s32 0, %v456
      %v458 = vsel %vm452, %v457, %v456
      %vm459 = vcmp.ne.s32.totalorder %v451, 0
      %vm460 = vcmp.ne.s32.totalorder %v458, 0
      %vm461 = vcmp.lt.s32.totalorder %v451, 0
      %vm462 = vcmp.lt.s32.totalorder %v458, 0
      %vm463 = vmand %vm461, %vm459
      %vm464 = vmand %vm462, %vm460
      %v465 = vadd.s32 %v451, 16
      %v466 = vadd.s32 %v458, 16
      %v467 = vsel %vm463, %v465, %v451
      %v468 = vsel %vm464, %v466, %v458
      %v469 = vld [vmem:[%s1] sm:$0xf]
      %v470 = vld [vmem:[%s2] sm:$0xf]
      %472 = vset.pattern.permute.xlu0 0
      %473 = vperm.xlu0 %472, %v470
      %v474 = vpop.permute.xlu0 %473
      %v477 = vcombine.high %v441, %v441
      %vm478 = vcmask 31744
      %v480 = vsel %vm478, %v469, 0
      %vm482 = vcmask 1043456
      %v483 = vsel %vm482, %v441, 0
      %v485 = vsel %vm482, %v477, 0
      %487 = vmatprep.subr.mxu0 %v485
      %488 = vmatpush1.msra.mxu0 %v483
      %489 = vmatprep.subr.mxu0 0.0
      %490 = vmatpush1.msra.mxu0 0.0
      %491 = vmatprep.subr.mxu0 0.0
      %492 = vmatpush1.msra.mxu0 0.0
      %493 = vmatprep.subr.mxu0 0.0
      %494 = vmatpush1.msra.mxu0 0.0
      %495 = vmatprep.subr.mxu0 0.0
      %496 = vmatpush1.msra.mxu0 0.0
      %497 = vmatprep.subr.mxu0 0.0
      %498 = vmatpush1.msra.mxu0 0.0
      %499 = vmatprep.subr.mxu0 0.0
      %500 = vmatpush1.msra.mxu0 0.0
      %501 = vmatprep.subr.mxu0 0.0
      %502 = vmatpush1.msra.mxu0 0.0
      %503 = vmatprep.subr.mxu0 0.0
      %504 = vmatpush1.msra.mxu0 0.0
      %505 = vmatprep.subr.mxu0 0.0
      %506 = vmatpush1.msra.mxu0 0.0
      %507 = vmatprep.subr.mxu0 0.0
      %508 = vmatpush1.msra.mxu0 0.0
      %509 = vmatprep.subr.mxu0 0.0
      %510 = vmatpush1.msra.mxu0 0.0
      %511 = vmatprep.subr.mxu0 0.0
      %512 = vmatpush1.msra.mxu0 0.0
      %513 = vmatprep.subr.mxu0 0.0
      %514 = vmatpush1.msra.mxu0 0.0
      %515 = vmatprep.subr.mxu0 0.0
      %516 = vmatpush1.msra.mxu0 0.0
      %517 = vmatprep.subr.mxu0 0.0
      %518 = vmatpush1.msra.mxu0 0.0
      %519 = vmatprep.subr.mxu0 0.0
      %520 = vmatpush1.msra.mxu0 0.0
      %521 = vmatprep.subr.mxu0 0.0
      %522 = vmatpush1.msra.mxu0 0.0
      %523 = vmatprep.subr.mxu0 0.0
      %524 = vmatpush1.msra.mxu0 0.0
      %525 = vmatprep.subr.mxu0 0.0
      %526 = vmatpush1.msra.mxu0 0.0
      %527 = vmatprep.subr.mxu0 0.0
      %528 = vmatpush1.msra.mxu0 0.0
      %529 = vmatprep.subr.mxu0 0.0
      %530 = vmatpush1.msra.mxu0 0.0
      %531 = vmatprep.subr.mxu0 0.0
      %532 = vmatpush1.msra.mxu0 0.0
      %533 = vmatprep.subr.mxu0 0.0
      %534 = vmatpush1.msra.mxu0 0.0
      %535 = vmatprep.subr.mxu0 0.0
      %536 = vmatpush1.msra.mxu0 0.0
      %537 = vmatprep.subr.mxu0 0.0
      %538 = vmatpush1.msra.mxu0 0.0
      %539 = vmatprep.subr.mxu0 0.0
      %540 = vmatpush1.msra.mxu0 0.0
      %541 = vmatprep.subr.mxu0 0.0
      %542 = vmatpush1.msra.mxu0 0.0
      %543 = vmatprep.subr.mxu0 0.0
      %544 = vmatpush1.msra.mxu0 0.0
      %545 = vmatprep.subr.mxu0 0.0
      %546 = vmatpush1.msra.mxu0 0.0
      %547 = vmatprep.subr.mxu0 0.0
      %548 = vmatpush1.msra.mxu0 0.0
      %549 = vmatprep.subr.mxu0 0.0
      %550 = vmatpush1.msra.mxu0 0.0
      %551 = vmatprep.mubr.f32.mxu0 0.0
      %552 = vmatmul.mubr.f32.gmra.mrb[0].mxu0 %v480
      %v553 = vpop.f32.mrb[0].mxu0
      %v554 = vadd.f32 %v474, %v553
      %v555 = vpop.f32.mrb[0].mxu0
      %v556 = vadd.f32 %v474, %v555
      %557 = vdwg.mxu0
      %v558 = vmax.f32 %v554, 0.0
      %v559 = vmax.f32 %v556, 0.0
      %v560 = vld [vmem:[%s3] sm:$0xf]
      %v561 = vld [vmem:[%s4] sm:$0xf]
      %563 = vset.pattern.permute.xlu0 0
      %564 = vperm.xlu0 %563, %v561
      %v565 = vpop.permute.xlu0 %564
      %v568 = vsel %vm478, %v560, 0
      %570 = vmatprep.subr.mxu0 %v485
      %571 = vmatpush1.msra.mxu0 %v483
      %572 = vmatprep.subr.mxu0 0.0
      %573 = vmatpush1.msra.mxu0 0.0
      %574 = vmatprep.subr.mxu0 0.0
      %575 = vmatpush1.msra.mxu0 0.0
      %576 = vmatprep.subr.mxu0 0.0
      %577 = vmatpush1.msra.mxu0 0.0
      %578 = vmatprep.subr.mxu0 0.0
      %579 = vmatpush1.msra.mxu0 0.0
      %580 = vmatprep.subr.mxu0 0.0
      %581 = vmatpush1.msra.mxu0 0.0
      %582 = vmatprep.subr.mxu0 0.0
      %583 = vmatpush1.msra.mxu0 0.0
      %584 = vmatprep.subr.mxu0 0.0
      %585 = vmatpush1.msra.mxu0 0.0
      %586 = vmatprep.subr.mxu0 0.0
      %587 = vmatpush1.msra.mxu0 0.0
      %588 = vmatprep.subr.mxu0 0.0
      %589 = vmatpush1.msra.mxu0 0.0
      %590 = vmatprep.subr.mxu0 0.0
      %591 = vmatpush1.msra.mxu0 0.0
      %592 = vmatprep.subr.mxu0 0.0
      %593 = vmatpush1.msra.mxu0 0.0
      %594 = vmatprep.subr.mxu0 0.0
      %595 = vmatpush1.msra.mxu0 0.0
      %596 = vmatprep.subr.mxu0 0.0
      %597 = vmatpush1.msra.mxu0 0.0
      %598 = vmatprep.subr.mxu0 0.0
      %599 = vmatpush1.msra.mxu0 0.0
      %600 = vmatprep.subr.mxu0 0.0
      %601 = vmatpush1.msra.mxu0 0.0
      %602 = vmatprep.subr.mxu0 0.0
      %603 = vmatpush1.msra.mxu0 0.0
      %604 = vmatprep.subr.mxu0 0.0
      %605 = vmatpush1.msra.mxu0 0.0
      %606 = vmatprep.subr.mxu0 0.0
      %607 = vmatpush1.msra.mxu0 0.0
      %608 = vmatprep.subr.mxu0 0.0
      %609 = vmatpush1.msra.mxu0 0.0
      %610 = vmatprep.subr.mxu0 0.0
      %611 = vmatpush1.msra.mxu0 0.0
      %612 = vmatprep.subr.mxu0 0.0
      %613 = vmatpush1.msra.mxu0 0.0
      %614 = vmatprep.subr.mxu0 0.0
      %615 = vmatpush1.msra.mxu0 0.0
      %616 = vmatprep.subr.mxu0 0.0
      %617 = vmatpush1.msra.mxu0 0.0
      %618 = vmatprep.subr.mxu0 0.0
      %619 = vmatpush1.msra.mxu0 0.0
      %620 = vmatprep.subr.mxu0 0.0
      %621 = vmatpush1.msra.mxu0 0.0
      %622 = vmatprep.subr.mxu0 0.0
      %623 = vmatpush1.msra.mxu0 0.0
      %624 = vmatprep.subr.mxu0 0.0
      %625 = vmatpush1.msra.mxu0 0.0
      %626 = vmatprep.subr.mxu0 0.0
      %627 = vmatpush1.msra.mxu0 0.0
      %628 = vmatprep.subr.mxu0 0.0
      %629 = vmatpush1.msra.mxu0 0.0
      %630 = vmatprep.subr.mxu0 0.0
      %631 = vmatpush1.msra.mxu0 0.0
      %632 = vmatprep.subr.mxu0 0.0
      %633 = vmatpush1.msra.mxu0 0.0
      %634 = vmatprep.mubr.f32.mxu0 0.0
      %635 = vmatmul.mubr.f32.gmra.mrb[0].mxu0 %v568
      %v636 = vpop.f32.mrb[0].mxu0
      %v637 = vadd.f32 %v565, %v636
      %v638 = vpop.f32.mrb[0].mxu0
      %v639 = vadd.f32 %v565, %v638
      %640 = vdwg.mxu0
      %v641 = vmax.f32 %v637, 0.0
      %v642 = vmax.f32 %v639, 0.0
      %643 = vst [vmem:[#allocation2] sm:$0xff] 0.0
      %vm644 = vcmask 273408
      %645 = vst.msk [vmem:[#allocation2 + $0x8] sm:$0xf] %vm644, 0.0
      %v648 = vcombine.low %v641, %v642
      %649 = vrot.lane.b32.xlu0 %v648, 17
      %v650 = vpop.permute.xlu0 %649
      %v651 = vrot.slane %v650, 4
      %vm652 = vcmask 138240
      %v653 = vsel %vm652, %v651, %v650
      %vm656 = vcmask 1043592
      %vm657 = vcmask 1047556
      %vm658 = vmor %vm657, %vm656
      %659 = vst.msk [vmem:[#allocation2] sm:$0xff] %vm658, %v653
      %vm660 = vcmask 134144
      %661 = vst.msk [vmem:[#allocation2 + $0x8] sm:$0xf] %vm660, %v651
      %v662 = vadd.s32 %v467, 4294967295
      %v663 = vadd.s32 %v468, 4294967295
      %vm664 = vcmp.ge.s32.totalorder %v662, 0
      %vm665 = vcmp.ge.s32.totalorder %v663, 0
      %vm666 = vcmp.lt.s32.totalorder %v662, 16
      %vm667 = vcmp.lt.s32.totalorder %v663, 16
      %vm668 = vmand %vm664, %vm666
      %vm669 = vmand %vm665, %vm667
      %v670 = vadd.s32 %v467, 1
      %v671 = vadd.s32 %v468, 1
      %vm672 = vcmp.ge.s32.totalorder %v670, 0
      %vm673 = vcmp.ge.s32.totalorder %v671, 0
      %vm674 = vcmp.lt.s32.totalorder %v670, 16
      %vm675 = vcmp.lt.s32.totalorder %v671, 16
      %vm676 = vmand %vm672, %vm674
      %vm677 = vmand %vm673, %vm675
      %v678 = vld [vmem:[#allocation2] sm:$0xff]
      %v679 = vsel %vm668, 1, 0
      %v680 = vsel %vm669, 1, 0
      %vm681 = vcmp.eq.s32.totalorder %v679, 1
      %vm682 = vcmp.eq.s32.totalorder %v680, 1
      %v684 = vcombine.high %v678, %v678
      %v686 = vsel %vm681, %v678, 0.0
      %v687 = vsel %vm682, %v684, 0.0
      %v688 = vld [vmem:[%s5] sm:$0xff]
      %v689 = vld [vmem:[#allocation2 + $0x8] sm:$0xf]
      %691 = vrot.lane.b32.xlu0 %v688, 124
      %v692 = vpop.permute.xlu0 %691
      %694 = vrot.lane.b32.xlu0 %v678, 127
      %v695 = vpop.permute.xlu0 %694
      %696 = vrot.lane.b32.xlu0 %v684, 127
      %v697 = vpop.permute.xlu0 %696
      %698 = vrot.lane.b32.xlu0 %v689, 127
      %v699 = vpop.permute.xlu0 %698
      %vm700 = vcmask 1039360
      %v701 = vsel %vm700, %v695, %v697
      %v702 = vsel %vm700, %v697, %v699
      %v703 = vsel %vm478, %v692, 0
      %v705 = vsel %vm482, %v701, 0
      %v707 = vsel %vm482, %v702, 0
      %709 = vmatprep.subr.mxu0 %v707
      %710 = vmatpush1.msra.mxu0 %v705
      %711 = vmatprep.subr.mxu0 0.0
      %712 = vmatpush1.msra.mxu0 0.0
      %713 = vmatprep.subr.mxu0 0.0
      %714 = vmatpush1.msra.mxu0 0.0
      %715 = vmatprep.subr.mxu0 0.0
      %716 = vmatpush1.msra.mxu0 0.0
      %717 = vmatprep.subr.mxu0 0.0
      %718 = vmatpush1.msra.mxu0 0.0
      %719 = vmatprep.subr.mxu0 0.0
      %720 = vmatpush1.msra.mxu0 0.0
      %721 = vmatprep.subr.mxu0 0.0
      %722 = vmatpush1.msra.mxu0 0.0
      %723 = vmatprep.subr.mxu0 0.0
      %724 = vmatpush1.msra.mxu0 0.0
      %725 = vmatprep.subr.mxu0 0.0
      %726 = vmatpush1.msra.mxu0 0.0
      %727 = vmatprep.subr.mxu0 0.0
      %728 = vmatpush1.msra.mxu0 0.0
      %729 = vmatprep.subr.mxu0 0.0
      %730 = vmatpush1.msra.mxu0 0.0
      %731 = vmatprep.subr.mxu0 0.0
      %732 = vmatpush1.msra.mxu0 0.0
      %733 = vmatprep.subr.mxu0 0.0
      %734 = vmatpush1.msra.mxu0 0.0
      %735 = vmatprep.subr.mxu0 0.0
      %736 = vmatpush1.msra.mxu0 0.0
      %737 = vmatprep.subr.mxu0 0.0
      %738 = vmatpush1.msra.mxu0 0.0
      %739 = vmatprep.subr.mxu0 0.0
      %740 = vmatpush1.msra.mxu0 0.0
      %741 = vmatprep.subr.mxu0 0.0
      %742 = vmatpush1.msra.mxu0 0.0
      %743 = vmatprep.subr.mxu0 0.0
      %744 = vmatpush1.msra.mxu0 0.0
      %745 = vmatprep.subr.mxu0 0.0
      %746 = vmatpush1.msra.mxu0 0.0
      %747 = vmatprep.subr.mxu0 0.0
      %748 = vmatpush1.msra.mxu0 0.0
      %749 = vmatprep.subr.mxu0 0.0
      %750 = vmatpush1.msra.mxu0 0.0
      %751 = vmatprep.subr.mxu0 0.0
      %752 = vmatpush1.msra.mxu0 0.0
      %753 = vmatprep.subr.mxu0 0.0
      %754 = vmatpush1.msra.mxu0 0.0
      %755 = vmatprep.subr.mxu0 0.0
      %756 = vmatpush1.msra.mxu0 0.0
      %757 = vmatprep.subr.mxu0 0.0
      %758 = vmatpush1.msra.mxu0 0.0
      %759 = vmatprep.subr.mxu0 0.0
      %760 = vmatpush1.msra.mxu0 0.0
      %761 = vmatprep.subr.mxu0 0.0
      %762 = vmatpush1.msra.mxu0 0.0
      %763 = vmatprep.subr.mxu0 0.0
      %764 = vmatpush1.msra.mxu0 0.0
      %765 = vmatprep.subr.mxu0 0.0
      %766 = vmatpush1.msra.mxu0 0.0
      %767 = vmatprep.subr.mxu0 0.0
      %768 = vmatpush1.msra.mxu0 0.0
      %769 = vmatprep.subr.mxu0 0.0
      %770 = vmatpush1.msra.mxu0 0.0
      %771 = vmatprep.subr.mxu0 0.0
      %772 = vmatpush1.msra.mxu0 0.0
      %773 = vmatprep.mubr.f32.mxu0 0.0
      %774 = vmatmul.mubr.f32.gmra.mrb[0].mxu0 %v703
      %v775 = vpop.f32.mrb[0].mxu0
      %v776 = vadd.f32 0.0, %v775
      %v777 = vpop.f32.mrb[0].mxu0
      %v778 = vadd.f32 0.0, %v777
      %779 = vdwg.mxu0
      %v780 = vsel %vm478, %v688, 0
      %v783 = vsel %vm482, %v686, 0
      %v786 = vsel %vm482, %v687, 0
      %788 = vmatprep.subr.mxu0 %v786
      %789 = vmatpush1.msra.mxu0 %v783
      %790 = vmatprep.subr.mxu0 0.0
      %791 = vmatpush1.msra.mxu0 0.0
      %792 = vmatprep.subr.mxu0 0.0
      %793 = vmatpush1.msra.mxu0 0.0
      %794 = vmatprep.subr.mxu0 0.0
      %795 = vmatpush1.msra.mxu0 0.0
      %796 = vmatprep.subr.mxu0 0.0
      %797 = vmatpush1.msra.mxu0 0.0
      %798 = vmatprep.subr.mxu0 0.0
      %799 = vmatpush1.msra.mxu0 0.0
      %800 = vmatprep.subr.mxu0 0.0
      %801 = vmatpush1.msra.mxu0 0.0
      %802 = vmatprep.subr.mxu0 0.0
      %803 = vmatpush1.msra.mxu0 0.0
      %804 = vmatprep.subr.mxu0 0.0
      %805 = vmatpush1.msra.mxu0 0.0
      %806 = vmatprep.subr.mxu0 0.0
      %807 = vmatpush1.msra.mxu0 0.0
      %808 = vmatprep.subr.mxu0 0.0
      %809 = vmatpush1.msra.mxu0 0.0
      %810 = vmatprep.subr.mxu0 0.0
      %811 = vmatpush1.msra.mxu0 0.0
      %812 = vmatprep.subr.mxu0 0.0
      %813 = vmatpush1.msra.mxu0 0.0
      %814 = vmatprep.subr.mxu0 0.0
      %815 = vmatpush1.msra.mxu0 0.0
      %816 = vmatprep.subr.mxu0 0.0
      %817 = vmatpush1.msra.mxu0 0.0
      %818 = vmatprep.subr.mxu0 0.0
      %819 = vmatpush1.msra.mxu0 0.0
      %820 = vmatprep.subr.mxu0 0.0
      %821 = vmatpush1.msra.mxu0 0.0
      %822 = vmatprep.subr.mxu0 0.0
      %823 = vmatpush1.msra.mxu0 0.0
      %824 = vmatprep.subr.mxu0 0.0
      %825 = vmatpush1.msra.mxu0 0.0
      %826 = vmatprep.subr.mxu0 0.0
      %827 = vmatpush1.msra.mxu0 0.0
      %828 = vmatprep.subr.mxu0 0.0
      %829 = vmatpush1.msra.mxu0 0.0
      %830 = vmatprep.subr.mxu0 0.0
      %831 = vmatpush1.msra.mxu0 0.0
      %832 = vmatprep.subr.mxu0 0.0
      %833 = vmatpush1.msra.mxu0 0.0
      %834 = vmatprep.subr.mxu0 0.0
      %835 = vmatpush1.msra.mxu0 0.0
      %836 = vmatprep.subr.mxu0 0.0
      %837 = vmatpush1.msra.mxu0 0.0
      %838 = vmatprep.subr.mxu0 0.0
      %839 = vmatpush1.msra.mxu0 0.0
      %840 = vmatprep.subr.mxu0 0.0
      %841 = vmatpush1.msra.mxu0 0.0
      %842 = vmatprep.subr.mxu0 0.0
      %843 = vmatpush1.msra.mxu0 0.0
      %844 = vmatprep.subr.mxu0 0.0
      %845 = vmatpush1.msra.mxu0 0.0
      %846 = vmatprep.subr.mxu0 0.0
      %847 = vmatpush1.msra.mxu0 0.0
      %848 = vmatprep.subr.mxu0 0.0
      %849 = vmatpush1.msra.mxu0 0.0
      %850 = vmatprep.subr.mxu0 0.0
      %851 = vmatpush1.msra.mxu0 0.0
      %852 = vmatprep.mubr.f32.mxu0 0.0
      %853 = vmatmul.mubr.f32.gmra.mrb[0].mxu0 %v780
      %v854 = vpop.f32.mrb[0].mxu0
      %v855 = vadd.f32 %v776, %v854
      %v856 = vpop.f32.mrb[0].mxu0
      %v857 = vadd.f32 %v778, %v856
      %858 = vdwg.mxu0
      %v859 = vld [vmem:[#allocation2] sm:$0xff]
      %v860 = vld [vmem:[#allocation2 + $0x8] sm:$0xf]
      %v861 = vsel %vm676, 1, 0
      %v862 = vsel %vm677, 1, 0
      %vm863 = vcmp.eq.s32.totalorder %v861, 1
      %vm864 = vcmp.eq.s32.totalorder %v862, 1
      %v867 = vcombine.high %v859, %v859
      %868 = vrot.lane.b32.xlu0 %v859, 126
      %v869 = vpop.permute.xlu0 %868
      %870 = vrot.lane.b32.xlu0 %v867, 126
      %v871 = vpop.permute.xlu0 %870
      %872 = vrot.lane.b32.xlu0 %v860, 126
      %v873 = vpop.permute.xlu0 %872
      %vm874 = vcmask 1031168
      %v875 = vsel %vm874, %v869, %v871
      %v876 = vsel %vm874, %v871, %v873
      %v879 = vsel %vm863, %v875, 0.0
      %v880 = vsel %vm864, %v876, 0.0
      %v881 = vld [vmem:[%s5] sm:$0xff]
      %883 = vrot.lane.b32.xlu0 %v881, 120
      %v884 = vpop.permute.xlu0 %883
      %v885 = vsel %vm478, %v884, 0
      %v888 = vsel %vm482, %v879, 0
      %v891 = vsel %vm482, %v880, 0
      %893 = vmatprep.subr.mxu0 %v891
      %894 = vmatpush1.msra.mxu0 %v888
      %895 = vmatprep.subr.mxu0 0.0
      %896 = vmatpush1.msra.mxu0 0.0
      %897 = vmatprep.subr.mxu0 0.0
      %898 = vmatpush1.msra.mxu0 0.0
      %899 = vmatprep.subr.mxu0 0.0
      %900 = vmatpush1.msra.mxu0 0.0
      %901 = vmatprep.subr.mxu0 0.0
      %902 = vmatpush1.msra.mxu0 0.0
      %903 = vmatprep.subr.mxu0 0.0
      %904 = vmatpush1.msra.mxu0 0.0
      %905 = vmatprep.subr.mxu0 0.0
      %906 = vmatpush1.msra.mxu0 0.0
      %907 = vmatprep.subr.mxu0 0.0
      %908 = vmatpush1.msra.mxu0 0.0
      %909 = vmatprep.subr.mxu0 0.0
      %910 = vmatpush1.msra.mxu0 0.0
      %911 = vmatprep.subr.mxu0 0.0
      %912 = vmatpush1.msra.mxu0 0.0
      %913 = vmatprep.subr.mxu0 0.0
      %914 = vmatpush1.msra.mxu0 0.0
      %915 = vmatprep.subr.mxu0 0.0
      %916 = vmatpush1.msra.mxu0 0.0
      %917 = vmatprep.subr.mxu0 0.0
      %918 = vmatpush1.msra.mxu0 0.0
      %919 = vmatprep.subr.mxu0 0.0
      %920 = vmatpush1.msra.mxu0 0.0
      %921 = vmatprep.subr.mxu0 0.0
      %922 = vmatpush1.msra.mxu0 0.0
      %923 = vmatprep.subr.mxu0 0.0
      %924 = vmatpush1.msra.mxu0 0.0
      %925 = vmatprep.subr.mxu0 0.0
      %926 = vmatpush1.msra.mxu0 0.0
      %927 = vmatprep.subr.mxu0 0.0
      %928 = vmatpush1.msra.mxu0 0.0
      %929 = vmatprep.subr.mxu0 0.0
      %930 = vmatpush1.msra.mxu0 0.0
      %931 = vmatprep.subr.mxu0 0.0
      %932 = vmatpush1.msra.mxu0 0.0
      %933 = vmatprep.subr.mxu0 0.0
      %934 = vmatpush1.msra.mxu0 0.0
      %935 = vmatprep.subr.mxu0 0.0
      %936 = vmatpush1.msra.mxu0 0.0
      %937 = vmatprep.subr.mxu0 0.0
      %938 = vmatpush1.msra.mxu0 0.0
      %939 = vmatprep.subr.mxu0 0.0
      %940 = vmatpush1.msra.mxu0 0.0
      %941 = vmatprep.subr.mxu0 0.0
      %942 = vmatpush1.msra.mxu0 0.0
      %943 = vmatprep.subr.mxu0 0.0
      %944 = vmatpush1.msra.mxu0 0.0
      %945 = vmatprep.subr.mxu0 0.0
      %946 = vmatpush1.msra.mxu0 0.0
      %947 = vmatprep.subr.mxu0 0.0
      %948 = vmatpush1.msra.mxu0 0.0
      %949 = vmatprep.subr.mxu0 0.0
      %950 = vmatpush1.msra.mxu0 0.0
      %951 = vmatprep.subr.mxu0 0.0
      %952 = vmatpush1.msra.mxu0 0.0
      %953 = vmatprep.subr.mxu0 0.0
      %954 = vmatpush1.msra.mxu0 0.0
      %955 = vmatprep.subr.mxu0 0.0
      %956 = vmatpush1.msra.mxu0 0.0
      %957 = vmatprep.mubr.f32.mxu0 0.0
      %958 = vmatmul.mubr.f32.gmra.mrb[0].mxu0 %v885
      %v959 = vpop.f32.mrb[0].mxu0
      %v960 = vadd.f32 0.0, %v959
      %v961 = vpop.f32.mrb[0].mxu0
      %v962 = vadd.f32 0.0, %v961
      %963 = vdwg.mxu0
      %v964 = vadd.f32 %v855, %v960
      %v965 = vadd.f32 %v857, %v962
      %v966 = vld [vmem:[#allocation2] sm:$0xff]
      %v967 = vld [vmem:[#allocation2 + $0x8] sm:$0xf]
      %v970 = vcombine.high %v966, %v966
      %971 = vrot.lane.b32.xlu0 %v966, 112
      %v972 = vpop.permute.xlu0 %971
      %973 = vrot.lane.b32.xlu0 %v970, 112
      %v974 = vpop.permute.xlu0 %973
      %975 = vrot.lane.b32.xlu0 %v967, 112
      %v976 = vpop.permute.xlu0 %975
      %vm977 = vcmask 916480
      %v978 = vsel %vm977, %v972, %v974
      %v979 = vsel %vm977, %v974, %v976
      %v982 = vsel %vm681, %v978, 0.0
      %v983 = vsel %vm682, %v979, 0.0
      %v984 = vld [vmem:[%s5] sm:$0xff]
      %986 = vrot.lane.b32.xlu0 %v984, 116
      %v987 = vpop.permute.xlu0 %986
      %v988 = vsel %vm478, %v987, 0
      %v991 = vsel %vm482, %v982, 0
      %v994 = vsel %vm482, %v983, 0
      %996 = vmatprep.subr.mxu0 %v994
      %997 = vmatpush1.msra.mxu0 %v991
      %998 = vmatprep.subr.mxu0 0.0
      %999 = vmatpush1.msra.mxu0 0.0
      %1000 = vmatprep.subr.mxu0 0.0
      %1001 = vmatpush1.msra.mxu0 0.0
      %1002 = vmatprep.subr.mxu0 0.0
      %1003 = vmatpush1.msra.mxu0 0.0
      %1004 = vmatprep.subr.mxu0 0.0
      %1005 = vmatpush1.msra.mxu0 0.0
      %1006 = vmatprep.subr.mxu0 0.0
      %1007 = vmatpush1.msra.mxu0 0.0
      %1008 = vmatprep.subr.mxu0 0.0
      %1009 = vmatpush1.msra.mxu0 0.0
      %1010 = vmatprep.subr.mxu0 0.0
      %1011 = vmatpush1.msra.mxu0 0.0
      %1012 = vmatprep.subr.mxu0 0.0
      %1013 = vmatpush1.msra.mxu0 0.0
      %1014 = vmatprep.subr.mxu0 0.0
      %1015 = vmatpush1.msra.mxu0 0.0
      %1016 = vmatprep.subr.mxu0 0.0
      %1017 = vmatpush1.msra.mxu0 0.0
      %1018 = vmatprep.subr.mxu0 0.0
      %1019 = vmatpush1.msra.mxu0 0.0
      %1020 = vmatprep.subr.mxu0 0.0
      %1021 = vmatpush1.msra.mxu0 0.0
      %1022 = vmatprep.subr.mxu0 0.0
      %1023 = vmatpush1.msra.mxu0 0.0
      %1024 = vmatprep.subr.mxu0 0.0
      %1025 = vmatpush1.msra.mxu0 0.0
      %1026 = vmatprep.subr.mxu0 0.0
      %1027 = vmatpush1.msra.mxu0 0.0
      %1028 = vmatprep.subr.mxu0 0.0
      %1029 = vmatpush1.msra.mxu0 0.0
      %1030 = vmatprep.subr.mxu0 0.0
      %1031 = vmatpush1.msra.mxu0 0.0
      %1032 = vmatprep.subr.mxu0 0.0
      %1033 = vmatpush1.msra.mxu0 0.0
      %1034 = vmatprep.subr.mxu0 0.0
      %1035 = vmatpush1.msra.mxu0 0.0
      %1036 = vmatprep.subr.mxu0 0.0
      %1037 = vmatpush1.msra.mxu0 0.0
      %1038 = vmatprep.subr.mxu0 0.0
      %1039 = vmatpush1.msra.mxu0 0.0
      %1040 = vmatprep.subr.mxu0 0.0
      %1041 = vmatpush1.msra.mxu0 0.0
      %1042 = vmatprep.subr.mxu0 0.0
      %1043 = vmatpush1.msra.mxu0 0.0
      %1044 = vmatprep.subr.mxu0 0.0
      %1045 = vmatpush1.msra.mxu0 0.0
      %1046 = vmatprep.subr.mxu0 0.0
      %1047 = vmatpush1.msra.mxu0 0.0
      %1048 = vmatprep.subr.mxu0 0.0
      %1049 = vmatpush1.msra.mxu0 0.0
      %1050 = vmatprep.subr.mxu0 0.0
      %1051 = vmatpush1.msra.mxu0 0.0
      %1052 = vmatprep.subr.mxu0 0.0
      %1053 = vmatpush1.msra.mxu0 0.0
      %1054 = vmatprep.subr.mxu0 0.0
      %1055 = vmatpush1.msra.mxu0 0.0
      %1056 = vmatprep.subr.mxu0 0.0
      %1057 = vmatpush1.msra.mxu0 0.0
      %1058 = vmatprep.subr.mxu0 0.0
      %1059 = vmatpush1.msra.mxu0 0.0
      %1060 = vmatprep.mubr.f32.mxu0 0.0
      %1061 = vmatmul.mubr.f32.gmra.mrb[0].mxu0 %v988
      %v1062 = vpop.f32.mrb[0].mxu0
      %v1063 = vadd.f32 0.0, %v1062
      %v1064 = vpop.f32.mrb[0].mxu0
      %v1065 = vadd.f32 0.0, %v1064
      %1066 = vdwg.mxu0
      %v1067 = vadd.f32 %v964, %v1063
      %v1068 = vadd.f32 %v965, %v1065
      %v1069 = vld [vmem:[#allocation2] sm:$0xff]
      %v1070 = vld [vmem:[#allocation2 + $0x8] sm:$0xf]
      %1071 = vrot.lane.b32.xlu0 %v984, 112
      %v1072 = vpop.permute.xlu0 %1071
      %v1075 = vcombine.high %v1069, %v1069
      %1076 = vrot.lane.b32.xlu0 %v1069, 111
      %v1077 = vpop.permute.xlu0 %1076
      %1078 = vrot.lane.b32.xlu0 %v1075, 111
      %v1079 = vpop.permute.xlu0 %1078
      %1080 = vrot.lane.b32.xlu0 %v1070, 111
      %v1081 = vpop.permute.xlu0 %1080
      %vm1082 = vcmask 908288
      %v1083 = vsel %vm1082, %v1077, %v1079
      %v1084 = vsel %vm1082, %v1079, %v1081
      %v1085 = vsel %vm478, %v1072, 0
      %v1087 = vsel %vm482, %v1083, 0
      %v1089 = vsel %vm482, %v1084, 0
      %1091 = vmatprep.subr.mxu0 %v1089
      %1092 = vmatpush1.msra.mxu0 %v1087
      %1093 = vmatprep.subr.mxu0 0.0
      %1094 = vmatpush1.msra.mxu0 0.0
      %1095 = vmatprep.subr.mxu0 0.0
      %1096 = vmatpush1.msra.mxu0 0.0
      %1097 = vmatprep.subr.mxu0 0.0
      %1098 = vmatpush1.msra.mxu0 0.0
      %1099 = vmatprep.subr.mxu0 0.0
      %1100 = vmatpush1.msra.mxu0 0.0
      %1101 = vmatprep.subr.mxu0 0.0
      %1102 = vmatpush1.msra.mxu0 0.0
      %1103 = vmatprep.subr.mxu0 0.0
      %1104 = vmatpush1.msra.mxu0 0.0
      %1105 = vmatprep.subr.mxu0 0.0
      %1106 = vmatpush1.msra.mxu0 0.0
      %1107 = vmatprep.subr.mxu0 0.0
      %1108 = vmatpush1.msra.mxu0 0.0
      %1109 = vmatprep.subr.mxu0 0.0
      %1110 = vmatpush1.msra.mxu0 0.0
      %1111 = vmatprep.subr.mxu0 0.0
      %1112 = vmatpush1.msra.mxu0 0.0
      %1113 = vmatprep.subr.mxu0 0.0
      %1114 = vmatpush1.msra.mxu0 0.0
      %1115 = vmatprep.subr.mxu0 0.0
      %1116 = vmatpush1.msra.mxu0 0.0
      %1117 = vmatprep.subr.mxu0 0.0
      %1118 = vmatpush1.msra.mxu0 0.0
      %1119 = vmatprep.subr.mxu0 0.0
      %1120 = vmatpush1.msra.mxu0 0.0
      %1121 = vmatprep.subr.mxu0 0.0
      %1122 = vmatpush1.msra.mxu0 0.0
      %1123 = vmatprep.subr.mxu0 0.0
      %1124 = vmatpush1.msra.mxu0 0.0
      %1125 = vmatprep.subr.mxu0 0.0
      %1126 = vmatpush1.msra.mxu0 0.0
      %1127 = vmatprep.subr.mxu0 0.0
      %1128 = vmatpush1.msra.mxu0 0.0
      %1129 = vmatprep.subr.mxu0 0.0
      %1130 = vmatpush1.msra.mxu0 0.0
      %1131 = vmatprep.subr.mxu0 0.0
      %1132 = vmatpush1.msra.mxu0 0.0
      %1133 = vmatprep.subr.mxu0 0.0
      %1134 = vmatpush1.msra.mxu0 0.0
      %1135 = vmatprep.subr.mxu0 0.0
      %1136 = vmatpush1.msra.mxu0 0.0
      %1137 = vmatprep.subr.mxu0 0.0
      %1138 = vmatpush1.msra.mxu0 0.0
      %1139 = vmatprep.subr.mxu0 0.0
      %1140 = vmatpush1.msra.mxu0 0.0
      %1141 = vmatprep.subr.mxu0 0.0
      %1142 = vmatpush1.msra.mxu0 0.0
      %1143 = vmatprep.subr.mxu0 0.0
      %1144 = vmatpush1.msra.mxu0 0.0
      %1145 = vmatprep.subr.mxu0 0.0
      %1146 = vmatpush1.msra.mxu0 0.0
      %1147 = vmatprep.subr.mxu0 0.0
      %1148 = vmatpush1.msra.mxu0 0.0
      %1149 = vmatprep.subr.mxu0 0.0
      %1150 = vmatpush1.msra.mxu0 0.0
      %1151 = vmatprep.subr.mxu0 0.0
      %1152 = vmatpush1.msra.mxu0 0.0
      %1153 = vmatprep.subr.mxu0 0.0
      %1154 = vmatpush1.msra.mxu0 0.0
      %1155 = vmatprep.mubr.f32.mxu0 0.0
      %1156 = vmatmul.mubr.f32.gmra.mrb[0].mxu0 %v1085
      %v1157 = vpop.f32.mrb[0].mxu0
      %v1158 = vadd.f32 0.0, %v1157
      %v1159 = vpop.f32.mrb[0].mxu0
      %v1160 = vadd.f32 0.0, %v1159
      %1161 = vdwg.mxu0
      %v1162 = vadd.f32 %v1067, %v1158
      %v1163 = vadd.f32 %v1068, %v1160
      %v1164 = vld [vmem:[#allocation2] sm:$0xff]
      %v1165 = vld [vmem:[#allocation2 + $0x8] sm:$0xf]
      %v1168 = vcombine.high %v1164, %v1164
      %1169 = vrot.lane.b32.xlu0 %v1164, 110
      %v1170 = vpop.permute.xlu0 %1169
      %1171 = vrot.lane.b32.xlu0 %v1168, 110
      %v1172 = vpop.permute.xlu0 %1171
      %1173 = vrot.lane.b32.xlu0 %v1165, 110
      %v1174 = vpop.permute.xlu0 %1173
      %vm1175 = vcmask 900096
      %v1176 = vsel %vm1175, %v1170, %v1172
      %v1177 = vsel %vm1175, %v1172, %v1174
      %v1180 = vsel %vm863, %v1176, 0.0
      %v1181 = vsel %vm864, %v1177, 0.0
      %v1182 = vld [vmem:[%s5] sm:$0xff]
      %1184 = vrot.lane.b32.xlu0 %v1182, 108
      %v1185 = vpop.permute.xlu0 %1184
      %v1186 = vsel %vm478, %v1185, 0
      %v1189 = vsel %vm482, %v1180, 0
      %v1192 = vsel %vm482, %v1181, 0
      %1194 = vmatprep.subr.mxu0 %v1192
      %1195 = vmatpush1.msra.mxu0 %v1189
      %1196 = vmatprep.subr.mxu0 0.0
      %1197 = vmatpush1.msra.mxu0 0.0
      %1198 = vmatprep.subr.mxu0 0.0
      %1199 = vmatpush1.msra.mxu0 0.0
      %1200 = vmatprep.subr.mxu0 0.0
      %1201 = vmatpush1.msra.mxu0 0.0
      %1202 = vmatprep.subr.mxu0 0.0
      %1203 = vmatpush1.msra.mxu0 0.0
      %1204 = vmatprep.subr.mxu0 0.0
      %1205 = vmatpush1.msra.mxu0 0.0
      %1206 = vmatprep.subr.mxu0 0.0
      %1207 = vmatpush1.msra.mxu0 0.0
      %1208 = vmatprep.subr.mxu0 0.0
      %1209 = vmatpush1.msra.mxu0 0.0
      %1210 = vmatprep.subr.mxu0 0.0
      %1211 = vmatpush1.msra.mxu0 0.0
      %1212 = vmatprep.subr.mxu0 0.0
      %1213 = vmatpush1.msra.mxu0 0.0
      %1214 = vmatprep.subr.mxu0 0.0
      %1215 = vmatpush1.msra.mxu0 0.0
      %1216 = vmatprep.subr.mxu0 0.0
      %1217 = vmatpush1.msra.mxu0 0.0
      %1218 = vmatprep.subr.mxu0 0.0
      %1219 = vmatpush1.msra.mxu0 0.0
      %1220 = vmatprep.subr.mxu0 0.0
      %1221 = vmatpush1.msra.mxu0 0.0
      %1222 = vmatprep.subr.mxu0 0.0
      %1223 = vmatpush1.msra.mxu0 0.0
      %1224 = vmatprep.subr.mxu0 0.0
      %1225 = vmatpush1.msra.mxu0 0.0
      %1226 = vmatprep.subr.mxu0 0.0
      %1227 = vmatpush1.msra.mxu0 0.0
      %1228 = vmatprep.subr.mxu0 0.0
      %1229 = vmatpush1.msra.mxu0 0.0
      %1230 = vmatprep.subr.mxu0 0.0
      %1231 = vmatpush1.msra.mxu0 0.0
      %1232 = vmatprep.subr.mxu0 0.0
      %1233 = vmatpush1.msra.mxu0 0.0
      %1234 = vmatprep.subr.mxu0 0.0
      %1235 = vmatpush1.msra.mxu0 0.0
      %1236 = vmatprep.subr.mxu0 0.0
      %1237 = vmatpush1.msra.mxu0 0.0
      %1238 = vmatprep.subr.mxu0 0.0
      %1239 = vmatpush1.msra.mxu0 0.0
      %1240 = vmatprep.subr.mxu0 0.0
      %1241 = vmatpush1.msra.mxu0 0.0
      %1242 = vmatprep.subr.mxu0 0.0
      %1243 = vmatpush1.msra.mxu0 0.0
      %1244 = vmatprep.subr.mxu0 0.0
      %1245 = vmatpush1.msra.mxu0 0.0
      %1246 = vmatprep.subr.mxu0 0.0
      %1247 = vmatpush1.msra.mxu0 0.0
      %1248 = vmatprep.subr.mxu0 0.0
      %1249 = vmatpush1.msra.mxu0 0.0
      %1250 = vmatprep.subr.mxu0 0.0
      %1251 = vmatpush1.msra.mxu0 0.0
      %1252 = vmatprep.subr.mxu0 0.0
      %1253 = vmatpush1.msra.mxu0 0.0
      %1254 = vmatprep.subr.mxu0 0.0
      %1255 = vmatpush1.msra.mxu0 0.0
      %1256 = vmatprep.subr.mxu0 0.0
      %1257 = vmatpush1.msra.mxu0 0.0
      %1258 = vmatprep.mubr.f32.mxu0 0.0
      %1259 = vmatmul.mubr.f32.gmra.mrb[0].mxu0 %v1186
      %v1260 = vpop.f32.mrb[0].mxu0
      %v1261 = vadd.f32 0.0, %v1260
      %v1262 = vpop.f32.mrb[0].mxu0
      %v1263 = vadd.f32 0.0, %v1262
      %1264 = vdwg.mxu0
      %v1265 = vadd.f32 %v1162, %v1261
      %v1266 = vadd.f32 %v1163, %v1263
      %v1267 = vld [vmem:[#allocation2] sm:$0xff]
      %v1268 = vld [vmem:[#allocation2 + $0x8] sm:$0xf]
      %v1271 = vcombine.high %v1267, %v1267
      %1272 = vrot.lane.b32.xlu0 %v1267, 96
      %v1273 = vpop.permute.xlu0 %1272
      %1274 = vrot.lane.b32.xlu0 %v1271, 96
      %v1275 = vpop.permute.xlu0 %1274
      %1276 = vrot.lane.b32.xlu0 %v1268, 96
      %v1277 = vpop.permute.xlu0 %1276
      %vm1278 = vcmask 785408
      %v1279 = vsel %vm1278, %v1273, %v1275
      %v1280 = vsel %vm1278, %v1275, %v1277
      %v1283 = vsel %vm681, %v1279, 0.0
      %v1284 = vsel %vm682, %v1280, 0.0
      %v1285 = vld [vmem:[%s5] sm:$0xff]
      %1287 = vrot.lane.b32.xlu0 %v1285, 104
      %v1288 = vpop.permute.xlu0 %1287
      %v1289 = vsel %vm478, %v1288, 0
      %v1292 = vsel %vm482, %v1283, 0
      %v1295 = vsel %vm482, %v1284, 0
      %1297 = vmatprep.subr.mxu0 %v1295
      %1298 = vmatpush1.msra.mxu0 %v1292
      %1299 = vmatprep.subr.mxu0 0.0
      %1300 = vmatpush1.msra.mxu0 0.0
      %1301 = vmatprep.subr.mxu0 0.0
      %1302 = vmatpush1.msra.mxu0 0.0
      %1303 = vmatprep.subr.mxu0 0.0
      %1304 = vmatpush1.msra.mxu0 0.0
      %1305 = vmatprep.subr.mxu0 0.0
      %1306 = vmatpush1.msra.mxu0 0.0
      %1307 = vmatprep.subr.mxu0 0.0
      %1308 = vmatpush1.msra.mxu0 0.0
      %1309 = vmatprep.subr.mxu0 0.0
      %1310 = vmatpush1.msra.mxu0 0.0
      %1311 = vmatprep.subr.mxu0 0.0
      %1312 = vmatpush1.msra.mxu0 0.0
      %1313 = vmatprep.subr.mxu0 0.0
      %1314 = vmatpush1.msra.mxu0 0.0
      %1315 = vmatprep.subr.mxu0 0.0
      %1316 = vmatpush1.msra.mxu0 0.0
      %1317 = vmatprep.subr.mxu0 0.0
      %1318 = vmatpush1.msra.mxu0 0.0
      %1319 = vmatprep.subr.mxu0 0.0
      %1320 = vmatpush1.msra.mxu0 0.0
      %1321 = vmatprep.subr.mxu0 0.0
      %1322 = vmatpush1.msra.mxu0 0.0
      %1323 = vmatprep.subr.mxu0 0.0
      %1324 = vmatpush1.msra.mxu0 0.0
      %1325 = vmatprep.subr.mxu0 0.0
      %1326 = vmatpush1.msra.mxu0 0.0
      %1327 = vmatprep.subr.mxu0 0.0
      %1328 = vmatpush1.msra.mxu0 0.0
      %1329 = vmatprep.subr.mxu0 0.0
      %1330 = vmatpush1.msra.mxu0 0.0
      %1331 = vmatprep.subr.mxu0 0.0
      %1332 = vmatpush1.msra.mxu0 0.0
      %1333 = vmatprep.subr.mxu0 0.0
      %1334 = vmatpush1.msra.mxu0 0.0
      %1335 = vmatprep.subr.mxu0 0.0
      %1336 = vmatpush1.msra.mxu0 0.0
      %1337 = vmatprep.subr.mxu0 0.0
      %1338 = vmatpush1.msra.mxu0 0.0
      %1339 = vmatprep.subr.mxu0 0.0
      %1340 = vmatpush1.msra.mxu0 0.0
      %1341 = vmatprep.subr.mxu0 0.0
      %1342 = vmatpush1.msra.mxu0 0.0
      %1343 = vmatprep.subr.mxu0 0.0
      %1344 = vmatpush1.msra.mxu0 0.0
      %1345 = vmatprep.subr.mxu0 0.0
      %1346 = vmatpush1.msra.mxu0 0.0
      %1347 = vmatprep.subr.mxu0 0.0
      %1348 = vmatpush1.msra.mxu0 0.0
      %1349 = vmatprep.subr.mxu0 0.0
      %1350 = vmatpush1.msra.mxu0 0.0
      %1351 = vmatprep.subr.mxu0 0.0
      %1352 = vmatpush1.msra.mxu0 0.0
      %1353 = vmatprep.subr.mxu0 0.0
      %1354 = vmatpush1.msra.mxu0 0.0
      %1355 = vmatprep.subr.mxu0 0.0
      %1356 = vmatpush1.msra.mxu0 0.0
      %1357 = vmatprep.subr.mxu0 0.0
      %1358 = vmatpush1.msra.mxu0 0.0
      %1359 = vmatprep.subr.mxu0 0.0
      %1360 = vmatpush1.msra.mxu0 0.0
      %1361 = vmatprep.mubr.f32.mxu0 0.0
      %1362 = vmatmul.mubr.f32.gmra.mrb[0].mxu0 %v1289
      %v1363 = vpop.f32.mrb[0].mxu0
      %v1364 = vadd.f32 0.0, %v1363
      %v1365 = vpop.f32.mrb[0].mxu0
      %v1366 = vadd.f32 0.0, %v1365
      %1367 = vdwg.mxu0
      %v1368 = vadd.f32 %v1265, %v1364
      %v1369 = vadd.f32 %v1266, %v1366
      %v1370 = vld [vmem:[#allocation2] sm:$0xff]
      %v1371 = vld [vmem:[#allocation2 + $0x8] sm:$0xf]
      %1372 = vrot.lane.b32.xlu0 %v1285, 100
      %v1373 = vpop.permute.xlu0 %1372
      %v1376 = vcombine.high %v1370, %v1370
      %1377 = vrot.lane.b32.xlu0 %v1370, 95
      %v1378 = vpop.permute.xlu0 %1377
      %1379 = vrot.lane.b32.xlu0 %v1376, 95
      %v1380 = vpop.permute.xlu0 %1379
      %1381 = vrot.lane.b32.xlu0 %v1371, 95
      %v1382 = vpop.permute.xlu0 %1381
      %vm1383 = vcmask 777216
      %v1384 = vsel %vm1383, %v1378, %v1380
      %v1385 = vsel %vm1383, %v1380, %v1382
      %v1386 = vsel %vm478, %v1373, 0
      %v1388 = vsel %vm482, %v1384, 0
      %v1390 = vsel %vm482, %v1385, 0
      %1392 = vmatprep.subr.mxu0 %v1390
      %1393 = vmatpush1.msra.mxu0 %v1388
      %1394 = vmatprep.subr.mxu0 0.0
      %1395 = vmatpush1.msra.mxu0 0.0
      %1396 = vmatprep.subr.mxu0 0.0
      %1397 = vmatpush1.msra.mxu0 0.0
      %1398 = vmatprep.subr.mxu0 0.0
      %1399 = vmatpush1.msra.mxu0 0.0
      %1400 = vmatprep.subr.mxu0 0.0
      %1401 = vmatpush1.msra.mxu0 0.0
      %1402 = vmatprep.subr.mxu0 0.0
      %1403 = vmatpush1.msra.mxu0 0.0
      %1404 = vmatprep.subr.mxu0 0.0
      %1405 = vmatpush1.msra.mxu0 0.0
      %1406 = vmatprep.subr.mxu0 0.0
      %1407 = vmatpush1.msra.mxu0 0.0
      %1408 = vmatprep.subr.mxu0 0.0
      %1409 = vmatpush1.msra.mxu0 0.0
      %1410 = vmatprep.subr.mxu0 0.0
      %1411 = vmatpush1.msra.mxu0 0.0
      %1412 = vmatprep.subr.mxu0 0.0
      %1413 = vmatpush1.msra.mxu0 0.0
      %1414 = vmatprep.subr.mxu0 0.0
      %1415 = vmatpush1.msra.mxu0 0.0
      %1416 = vmatprep.subr.mxu0 0.0
      %1417 = vmatpush1.msra.mxu0 0.0
      %1418 = vmatprep.subr.mxu0 0.0
      %1419 = vmatpush1.msra.mxu0 0.0
      %1420 = vmatprep.subr.mxu0 0.0
      %1421 = vmatpush1.msra.mxu0 0.0
      %1422 = vmatprep.subr.mxu0 0.0
      %1423 = vmatpush1.msra.mxu0 0.0
      %1424 = vmatprep.subr.mxu0 0.0
      %1425 = vmatpush1.msra.mxu0 0.0
      %1426 = vmatprep.subr.mxu0 0.0
      %1427 = vmatpush1.msra.mxu0 0.0
      %1428 = vmatprep.subr.mxu0 0.0
      %1429 = vmatpush1.msra.mxu0 0.0
      %1430 = vmatprep.subr.mxu0 0.0
      %1431 = vmatpush1.msra.mxu0 0.0
      %1432 = vmatprep.subr.mxu0 0.0
      %1433 = vmatpush1.msra.mxu0 0.0
      %1434 = vmatprep.subr.mxu0 0.0
      %1435 = vmatpush1.msra.mxu0 0.0
      %1436 = vmatprep.subr.mxu0 0.0
      %1437 = vmatpush1.msra.mxu0 0.0
      %1438 = vmatprep.subr.mxu0 0.0
      %1439 = vmatpush1.msra.mxu0 0.0
      %1440 = vmatprep.subr.mxu0 0.0
      %1441 = vmatpush1.msra.mxu0 0.0
      %1442 = vmatprep.subr.mxu0 0.0
      %1443 = vmatpush1.msra.mxu0 0.0
      %1444 = vmatprep.subr.mxu0 0.0
      %1445 = vmatpush1.msra.mxu0 0.0
      %1446 = vmatprep.subr.mxu0 0.0
      %1447 = vmatpush1.msra.mxu0 0.0
      %1448 = vmatprep.subr.mxu0 0.0
      %1449 = vmatpush1.msra.mxu0 0.0
      %1450 = vmatprep.subr.mxu0 0.0
      %1451 = vmatpush1.msra.mxu0 0.0
      %1452 = vmatprep.subr.mxu0 0.0
      %1453 = vmatpush1.msra.mxu0 0.0
      %1454 = vmatprep.subr.mxu0 0.0
      %1455 = vmatpush1.msra.mxu0 0.0
      %1456 = vmatprep.mubr.f32.mxu0 0.0
      %1457 = vmatmul.mubr.f32.gmra.mrb[0].mxu0 %v1386
      %v1458 = vpop.f32.mrb[0].mxu0
      %v1459 = vadd.f32 0.0, %v1458
      %v1460 = vpop.f32.mrb[0].mxu0
      %v1461 = vadd.f32 0.0, %v1460
      %1462 = vdwg.mxu0
      %v1463 = vadd.f32 %v1368, %v1459
      %v1464 = vadd.f32 %v1369, %v1461
      %v1465 = vld [vmem:[#allocation2] sm:$0xff]
      %v1466 = vld [vmem:[#allocation2 + $0x8] sm:$0xf]
      %v1469 = vcombine.high %v1465, %v1465
      %1470 = vrot.lane.b32.xlu0 %v1465, 94
      %v1471 = vpop.permute.xlu0 %1470
      %1472 = vrot.lane.b32.xlu0 %v1469, 94
      %v1473 = vpop.permute.xlu0 %1472
      %1474 = vrot.lane.b32.xlu0 %v1466, 94
      %v1475 = vpop.permute.xlu0 %1474
      %vm1476 = vcmask 769024
      %v1477 = vsel %vm1476, %v1471, %v1473
      %v1478 = vsel %vm1476, %v1473, %v1475
      %v1481 = vsel %vm863, %v1477, 0.0
      %v1482 = vsel %vm864, %v1478, 0.0
      %v1483 = vld [vmem:[%s5] sm:$0xff]
      %1485 = vrot.lane.b32.xlu0 %v1483, 96
      %v1486 = vpop.permute.xlu0 %1485
      %v1487 = vsel %vm478, %v1486, 0
      %v1490 = vsel %vm482, %v1481, 0
      %v1493 = vsel %vm482, %v1482, 0
      %1495 = vmatprep.subr.mxu0 %v1493
      %1496 = vmatpush1.msra.mxu0 %v1490
      %1497 = vmatprep.subr.mxu0 0.0
      %1498 = vmatpush1.msra.mxu0 0.0
      %1499 = vmatprep.subr.mxu0 0.0
      %1500 = vmatpush1.msra.mxu0 0.0
      %1501 = vmatprep.subr.mxu0 0.0
      %1502 = vmatpush1.msra.mxu0 0.0
      %1503 = vmatprep.subr.mxu0 0.0
      %1504 = vmatpush1.msra.mxu0 0.0
      %1505 = vmatprep.subr.mxu0 0.0
      %1506 = vmatpush1.msra.mxu0 0.0
      %1507 = vmatprep.subr.mxu0 0.0
      %1508 = vmatpush1.msra.mxu0 0.0
      %1509 = vmatprep.subr.mxu0 0.0
      %1510 = vmatpush1.msra.mxu0 0.0
      %1511 = vmatprep.subr.mxu0 0.0
      %1512 = vmatpush1.msra.mxu0 0.0
      %1513 = vmatprep.subr.mxu0 0.0
      %1514 = vmatpush1.msra.mxu0 0.0
      %1515 = vmatprep.subr.mxu0 0.0
      %1516 = vmatpush1.msra.mxu0 0.0
      %1517 = vmatprep.subr.mxu0 0.0
      %1518 = vmatpush1.msra.mxu0 0.0
      %1519 = vmatprep.subr.mxu0 0.0
      %1520 = vmatpush1.msra.mxu0 0.0
      %1521 = vmatprep.subr.mxu0 0.0
      %1522 = vmatpush1.msra.mxu0 0.0
      %1523 = vmatprep.subr.mxu0 0.0
      %1524 = vmatpush1.msra.mxu0 0.0
      %1525 = vmatprep.subr.mxu0 0.0
      %1526 = vmatpush1.msra.mxu0 0.0
      %1527 = vmatprep.subr.mxu0 0.0
      %1528 = vmatpush1.msra.mxu0 0.0
      %1529 = vmatprep.subr.mxu0 0.0
      %1530 = vmatpush1.msra.mxu0 0.0
      %1531 = vmatprep.subr.mxu0 0.0
      %1532 = vmatpush1.msra.mxu0 0.0
      %1533 = vmatprep.subr.mxu0 0.0
      %1534 = vmatpush1.msra.mxu0 0.0
      %1535 = vmatprep.subr.mxu0 0.0
      %1536 = vmatpush1.msra.mxu0 0.0
      %1537 = vmatprep.subr.mxu0 0.0
      %1538 = vmatpush1.msra.mxu0 0.0
      %1539 = vmatprep.subr.mxu0 0.0
      %1540 = vmatpush1.msra.mxu0 0.0
      %1541 = vmatprep.subr.mxu0 0.0
      %1542 = vmatpush1.msra.mxu0 0.0
      %1543 = vmatprep.subr.mxu0 0.0
      %1544 = vmatpush1.msra.mxu0 0.0
      %1545 = vmatprep.subr.mxu0 0.0
      %1546 = vmatpush1.msra.mxu0 0.0
      %1547 = vmatprep.subr.mxu0 0.0
      %1548 = vmatpush1.msra.mxu0 0.0
      %1549 = vmatprep.subr.mxu0 0.0
      %1550 = vmatpush1.msra.mxu0 0.0
      %1551 = vmatprep.subr.mxu0 0.0
      %1552 = vmatpush1.msra.mxu0 0.0
      %1553 = vmatprep.subr.mxu0 0.0
      %1554 = vmatpush1.msra.mxu0 0.0
      %1555 = vmatprep.subr.mxu0 0.0
      %1556 = vmatpush1.msra.mxu0 0.0
      %1557 = vmatprep.subr.mxu0 0.0
      %1558 = vmatpush1.msra.mxu0 0.0
      %1559 = vmatprep.mubr.f32.mxu0 0.0
      %1560 = vmatmul.mubr.f32.gmra.mrb[0].mxu0 %v1487
      %v1561 = vpop.f32.mrb[0].mxu0
      %v1562 = vadd.f32 0.0, %v1561
      %v1563 = vpop.f32.mrb[0].mxu0
      %v1564 = vadd.f32 0.0, %v1563
      %1565 = vdwg.mxu0
      %v1566 = vadd.f32 %v1463, %v1562
      %v1567 = vadd.f32 %v1464, %v1564
      %v1568 = vld [vmem:[%s6] sm:$0xff]
      %1570 = vset.pattern.permute.xlu0 0
      %1571 = vperm.xlu0 %1570, %v1568
      %v1572 = vpop.permute.xlu0 %1571
      %v1574 = vadd.f32 %v1566, %v1572
      %v1575 = vadd.f32 %v1567, %v1572
      %v1576 = vmax.f32 %v1574, 0.0
      %v1577 = vmax.f32 %v1575, 0.0
      %v1578 = vld [vmem:[%s7] sm:$0x3]
      %v1579 = vld [vmem:[%s8] sm:$0x3]
      %1581 = vset.pattern.permute.xlu0 0
      %1582 = vperm.xlu0 %1581, %v1579
      %v1583 = vpop.permute.xlu0 %1582
      %v1586 = vsel %vm478, %v1578, 0
      %1588 = vmatprep.subr.mxu0 %v485
      %1589 = vmatpush1.msra.mxu0 %v483
      %1590 = vmatprep.subr.mxu0 0.0
      %1591 = vmatpush1.msra.mxu0 0.0
      %1592 = vmatprep.subr.mxu0 0.0
      %1593 = vmatpush1.msra.mxu0 0.0
      %1594 = vmatprep.subr.mxu0 0.0
      %1595 = vmatpush1.msra.mxu0 0.0
      %1596 = vmatprep.subr.mxu0 0.0
      %1597 = vmatpush1.msra.mxu0 0.0
      %1598 = vmatprep.subr.mxu0 0.0
      %1599 = vmatpush1.msra.mxu0 0.0
      %1600 = vmatprep.subr.mxu0 0.0
      %1601 = vmatpush1.msra.mxu0 0.0
      %1602 = vmatprep.subr.mxu0 0.0
      %1603 = vmatpush1.msra.mxu0 0.0
      %1604 = vmatprep.subr.mxu0 0.0
      %1605 = vmatpush1.msra.mxu0 0.0
      %1606 = vmatprep.subr.mxu0 0.0
      %1607 = vmatpush1.msra.mxu0 0.0
      %1608 = vmatprep.subr.mxu0 0.0
      %1609 = vmatpush1.msra.mxu0 0.0
      %1610 = vmatprep.subr.mxu0 0.0
      %1611 = vmatpush1.msra.mxu0 0.0
      %1612 = vmatprep.subr.mxu0 0.0
      %1613 = vmatpush1.msra.mxu0 0.0
      %1614 = vmatprep.subr.mxu0 0.0
      %1615 = vmatpush1.msra.mxu0 0.0
      %1616 = vmatprep.subr.mxu0 0.0
      %1617 = vmatpush1.msra.mxu0 0.0
      %1618 = vmatprep.subr.mxu0 0.0
      %1619 = vmatpush1.msra.mxu0 0.0
      %1620 = vmatprep.subr.mxu0 0.0
      %1621 = vmatpush1.msra.mxu0 0.0
      %1622 = vmatprep.subr.mxu0 0.0
      %1623 = vmatpush1.msra.mxu0 0.0
      %1624 = vmatprep.subr.mxu0 0.0
      %1625 = vmatpush1.msra.mxu0 0.0
      %1626 = vmatprep.subr.mxu0 0.0
      %1627 = vmatpush1.msra.mxu0 0.0
      %1628 = vmatprep.subr.mxu0 0.0
      %1629 = vmatpush1.msra.mxu0 0.0
      %1630 = vmatprep.subr.mxu0 0.0
      %1631 = vmatpush1.msra.mxu0 0.0
      %1632 = vmatprep.subr.mxu0 0.0
      %1633 = vmatpush1.msra.mxu0 0.0
      %1634 = vmatprep.subr.mxu0 0.0
      %1635 = vmatpush1.msra.mxu0 0.0
      %1636 = vmatprep.subr.mxu0 0.0
      %1637 = vmatpush1.msra.mxu0 0.0
      %1638 = vmatprep.subr.mxu0 0.0
      %1639 = vmatpush1.msra.mxu0 0.0
      %1640 = vmatprep.subr.mxu0 0.0
      %1641 = vmatpush1.msra.mxu0 0.0
      %1642 = vmatprep.subr.mxu0 0.0
      %1643 = vmatpush1.msra.mxu0 0.0
      %1644 = vmatprep.subr.mxu0 0.0
      %1645 = vmatpush1.msra.mxu0 0.0
      %1646 = vmatprep.subr.mxu0 0.0
      %1647 = vmatpush1.msra.mxu0 0.0
      %1648 = vmatprep.subr.mxu0 0.0
      %1649 = vmatpush1.msra.mxu0 0.0
      %1650 = vmatprep.subr.mxu0 0.0
      %1651 = vmatpush1.msra.mxu0 0.0
      %1652 = vmatprep.mubr.f32.mxu0 0.0
      %1653 = vmatmul.mubr.f32.gmra.mrb[0].mxu0 %v1586
      %v1654 = vpop.f32.mrb[0].mxu0
      %v1655 = vadd.f32 %v1583, %v1654
      %v1656 = vpop.f32.mrb[0].mxu0
      %v1657 = vadd.f32 %v1583, %v1656
      %1658 = vdwg.mxu0
      %v1659 = vmax.f32 %v1655, 0.0
      %v1660 = vmax.f32 %v1657, 0.0
      %vm1661 = vcmask 1041408
      %vm1662 = vcmask 1043458
      %vm1663 = vmor %vm1662, %vm1661
      %vm1664 = vcmask 553988
      %vm1665 = vmor %vm1664, %vm1663
      %1666 = vst.msk [vmem:[#allocation3] sm:$0x3f] %vm1665, 0.0
      %v1669 = vcombine.low %v1659, %v1660
      %v1671 = vunpack.c.l.s4 1983009808
      %v1672 = vunpack.c.0.s8 %v1671
      %v1673 = vlaneseq
      %v1674 = vshrl.u32 %v1673, 7
      %v1675 = vsub.s32 %v1672, %v1674
      %v1676 = vrot.slane %v1669, %v1675
      %1677 = vrot.lane.b32.xlu0 %v1676, 34
      %v1678 = vpop.permute.xlu0 %1677
      %v1679 = vrot.slane %v1678, 6
      %vm1680 = vcmask 277504
      %v1681 = vsel %vm1680, %v1679, %v1678
      %vm1683 = vcmask 1041680
      %vm1684 = vmor %vm1662, %vm1683
      %vm1685 = vcmask 275460
      %vm1686 = vmor %vm1685, %vm1684
      %1687 = vst.msk [vmem:[#allocation3] sm:$0x3f] %vm1686, %v1681
      %v1688 = vadd.s32 %v467, 4294967294
      %v1689 = vadd.s32 %v468, 4294967294
      %vm1690 = vcmp.ge.s32.totalorder %v1688, 0
      %vm1691 = vcmp.ge.s32.totalorder %v1689, 0
      %vm1692 = vcmp.lt.s32.totalorder %v1688, 16
      %vm1693 = vcmp.lt.s32.totalorder %v1689, 16
      %vm1694 = vmand %vm1690, %vm1692
      %vm1695 = vmand %vm1691, %vm1693
      %v1696 = vadd.s32 %v467, 2
      %v1697 = vadd.s32 %v468, 2
      %vm1698 = vcmp.ge.s32.totalorder %v1696, 0
      %vm1699 = vcmp.ge.s32.totalorder %v1697, 0
      %vm1700 = vcmp.lt.s32.totalorder %v1696, 16
      %vm1701 = vcmp.lt.s32.totalorder %v1697, 16
      %vm1702 = vmand %vm1698, %vm1700
      %vm1703 = vmand %vm1699, %vm1701
      %v1704 = vld [vmem:[#allocation3] sm:$0xf]
      %v1705 = vsel %vm1694, 1, 0
      %v1706 = vsel %vm1695, 1, 0
      %vm1707 = vcmp.eq.s32.totalorder %v1705, 1
      %vm1708 = vcmp.eq.s32.totalorder %v1706, 1
      %v1711 = vunpack.c.l.s4 1983009808
      %v1712 = vunpack.c.0.s8 %v1711
      %v1713 = vlaneseq
      %v1714 = vshrl.u32 %v1713, 7
      %v1715 = vsub.s32 %v1712, %v1714
      %v1716 = vrot.slane %v1704, %v1715
      %v1717 = vcombine.high %v1716, %v1716
      %v1720 = vsel %vm1707, %v1716, 0.0
      %v1721 = vsel %vm1708, %v1717, 0.0
      %v1722 = vld [vmem:[%s9] sm:$0xf]
      %v1723 = vld [vmem:[#allocation3] sm:$0x3f]
      %v1725 = vcombine.high %v1723, %v1723
      %v1727 = vunpack.c.l.s4 1983009808
      %v1728 = vunpack.c.0.s8 %v1727
      %v1729 = vlaneseq
      %v1730 = vshrl.u32 %v1729, 7
      %v1731 = vsub.s32 %v1728, %v1730
      %v1732 = vrot.slane %v1723, %v1731
      %v1734 = vunpack.c.l.s4 1983009808
      %v1735 = vunpack.c.0.s8 %v1734
      %v1736 = vlaneseq
      %v1737 = vshrl.u32 %v1736, 7
      %v1738 = vsub.s32 %v1735, %v1737
      %v1739 = vrot.slane %v1725, %v1738
      %v1740 = vcombine.high %v1732, %v1732
      %1741 = vrot.lane.b32.xlu0 %v1732, 127
      %v1742 = vpop.permute.xlu0 %1741
      %1743 = vrot.lane.b32.xlu0 %v1740, 127
      %v1744 = vpop.permute.xlu0 %1743
      %1745 = vrot.lane.b32.xlu0 %v1739, 127
      %v1746 = vpop.permute.xlu0 %1745
      %v1747 = vsel %vm700, %v1742, %v1744
      %v1748 = vsel %vm700, %v1744, %v1746
      %v1751 = vsel %vm681, %v1747, 0.0
      %v1752 = vsel %vm682, %v1748, 0.0
      %1754 = vrot.lane.b32.xlu0 %v1722, 126
      %v1755 = vpop.permute.xlu0 %1754
      %vm1756 = vcmask 15360
      %v1757 = vsel %vm1756, %v1755, 0
      %v1760 = vsel %vm1661, %v1751, 0
      %v1763 = vsel %vm1661, %v1752, 0
      %1765 = vmatprep.subr.mxu0 %v1763
      %1766 = vmatpush1.msra.mxu0 %v1760
      %1767 = vmatprep.subr.mxu0 0.0
      %1768 = vmatpush1.msra.mxu0 0.0
      %1769 = vmatprep.subr.mxu0 0.0
      %1770 = vmatpush1.msra.mxu0 0.0
      %1771 = vmatprep.subr.mxu0 0.0
      %1772 = vmatpush1.msra.mxu0 0.0
      %1773 = vmatprep.subr.mxu0 0.0
      %1774 = vmatpush1.msra.mxu0 0.0
      %1775 = vmatprep.subr.mxu0 0.0
      %1776 = vmatpush1.msra.mxu0 0.0
      %1777 = vmatprep.subr.mxu0 0.0
      %1778 = vmatpush1.msra.mxu0 0.0
      %1779 = vmatprep.subr.mxu0 0.0
      %1780 = vmatpush1.msra.mxu0 0.0
      %1781 = vmatprep.subr.mxu0 0.0
      %1782 = vmatpush1.msra.mxu0 0.0
      %1783 = vmatprep.subr.mxu0 0.0
      %1784 = vmatpush1.msra.mxu0 0.0
      %1785 = vmatprep.subr.mxu0 0.0
      %1786 = vmatpush1.msra.mxu0 0.0
      %1787 = vmatprep.subr.mxu0 0.0
      %1788 = vmatpush1.msra.mxu0 0.0
      %1789 = vmatprep.subr.mxu0 0.0
      %1790 = vmatpush1.msra.mxu0 0.0
      %1791 = vmatprep.subr.mxu0 0.0
      %1792 = vmatpush1.msra.mxu0 0.0
      %1793 = vmatprep.subr.mxu0 0.0
      %1794 = vmatpush1.msra.mxu0 0.0
      %1795 = vmatprep.subr.mxu0 0.0
      %1796 = vmatpush1.msra.mxu0 0.0
      %1797 = vmatprep.subr.mxu0 0.0
      %1798 = vmatpush1.msra.mxu0 0.0
      %1799 = vmatprep.subr.mxu0 0.0
      %1800 = vmatpush1.msra.mxu0 0.0
      %1801 = vmatprep.subr.mxu0 0.0
      %1802 = vmatpush1.msra.mxu0 0.0
      %1803 = vmatprep.subr.mxu0 0.0
      %1804 = vmatpush1.msra.mxu0 0.0
      %1805 = vmatprep.subr.mxu0 0.0
      %1806 = vmatpush1.msra.mxu0 0.0
      %1807 = vmatprep.subr.mxu0 0.0
      %1808 = vmatpush1.msra.mxu0 0.0
      %1809 = vmatprep.subr.mxu0 0.0
      %1810 = vmatpush1.msra.mxu0 0.0
      %1811 = vmatprep.subr.mxu0 0.0
      %1812 = vmatpush1.msra.mxu0 0.0
      %1813 = vmatprep.subr.mxu0 0.0
      %1814 = vmatpush1.msra.mxu0 0.0
      %1815 = vmatprep.subr.mxu0 0.0
      %1816 = vmatpush1.msra.mxu0 0.0
      %1817 = vmatprep.subr.mxu0 0.0
      %1818 = vmatpush1.msra.mxu0 0.0
      %1819 = vmatprep.subr.mxu0 0.0
      %1820 = vmatpush1.msra.mxu0 0.0
      %1821 = vmatprep.subr.mxu0 0.0
      %1822 = vmatpush1.msra.mxu0 0.0
      %1823 = vmatprep.subr.mxu0 0.0
      %1824 = vmatpush1.msra.mxu0 0.0
      %1825 = vmatprep.subr.mxu0 0.0
      %1826 = vmatpush1.msra.mxu0 0.0
      %1827 = vmatprep.subr.mxu0 0.0
      %1828 = vmatpush1.msra.mxu0 0.0
      %1829 = vmatprep.mubr.f32.mxu0 0.0
      %1830 = vmatmul.mubr.f32.gmra.mrb[0].mxu0 %v1757
      %v1831 = vpop.f32.mrb[0].mxu0
      %v1832 = vadd.f32 0.0, %v1831
      %v1833 = vpop.f32.mrb[0].mxu0
      %v1834 = vadd.f32 0.0, %v1833
      %1835 = vdwg.mxu0
      %v1836 = vsel %vm1756, %v1722, 0
      %v1839 = vsel %vm1661, %v1720, 0
      %v1842 = vsel %vm1661, %v1721, 0
      %1844 = vmatprep.subr.mxu0 %v1842
      %1845 = vmatpush1.msra.mxu0 %v1839
      %1846 = vmatprep.subr.mxu0 0.0
      %1847 = vmatpush1.msra.mxu0 0.0
      %1848 = vmatprep.subr.mxu0 0.0
      %1849 = vmatpush1.msra.mxu0 0.0
      %1850 = vmatprep.subr.mxu0 0.0
      %1851 = vmatpush1.msra.mxu0 0.0
      %1852 = vmatprep.subr.mxu0 0.0
      %1853 = vmatpush1.msra.mxu0 0.0
      %1854 = vmatprep.subr.mxu0 0.0
      %1855 = vmatpush1.msra.mxu0 0.0
      %1856 = vmatprep.subr.mxu0 0.0
      %1857 = vmatpush1.msra.mxu0 0.0
      %1858 = vmatprep.subr.mxu0 0.0
      %1859 = vmatpush1.msra.mxu0 0.0
      %1860 = vmatprep.subr.mxu0 0.0
      %1861 = vmatpush1.msra.mxu0 0.0
      %1862 = vmatprep.subr.mxu0 0.0
      %1863 = vmatpush1.msra.mxu0 0.0
      %1864 = vmatprep.subr.mxu0 0.0
      %1865 = vmatpush1.msra.mxu0 0.0
      %1866 = vmatprep.subr.mxu0 0.0
      %1867 = vmatpush1.msra.mxu0 0.0
      %1868 = vmatprep.subr.mxu0 0.0
      %1869 = vmatpush1.msra.mxu0 0.0
      %1870 = vmatprep.subr.mxu0 0.0
      %1871 = vmatpush1.msra.mxu0 0.0
      %1872 = vmatprep.subr.mxu0 0.0
      %1873 = vmatpush1.msra.mxu0 0.0
      %1874 = vmatprep.subr.mxu0 0.0
      %1875 = vmatpush1.msra.mxu0 0.0
      %1876 = vmatprep.subr.mxu0 0.0
      %1877 = vmatpush1.msra.mxu0 0.0
      %1878 = vmatprep.subr.mxu0 0.0
      %1879 = vmatpush1.msra.mxu0 0.0
      %1880 = vmatprep.subr.mxu0 0.0
      %1881 = vmatpush1.msra.mxu0 0.0
      %1882 = vmatprep.subr.mxu0 0.0
      %1883 = vmatpush1.msra.mxu0 0.0
      %1884 = vmatprep.subr.mxu0 0.0
      %1885 = vmatpush1.msra.mxu0 0.0
      %1886 = vmatprep.subr.mxu0 0.0
      %1887 = vmatpush1.msra.mxu0 0.0
      %1888 = vmatprep.subr.mxu0 0.0
      %1889 = vmatpush1.msra.mxu0 0.0
      %1890 = vmatprep.subr.mxu0 0.0
      %1891 = vmatpush1.msra.mxu0 0.0
      %1892 = vmatprep.subr.mxu0 0.0
      %1893 = vmatpush1.msra.mxu0 0.0
      %1894 = vmatprep.subr.mxu0 0.0
      %1895 = vmatpush1.msra.mxu0 0.0
      %1896 = vmatprep.subr.mxu0 0.0
      %1897 = vmatpush1.msra.mxu0 0.0
      %1898 = vmatprep.subr.mxu0 0.0
      %1899 = vmatpush1.msra.mxu0 0.0
      %1900 = vmatprep.subr.mxu0 0.0
      %1901 = vmatpush1.msra.mxu0 0.0
      %1902 = vmatprep.subr.mxu0 0.0
      %1903 = vmatpush1.msra.mxu0 0.0
      %1904 = vmatprep.subr.mxu0 0.0
      %1905 = vmatpush1.msra.mxu0 0.0
      %1906 = vmatprep.subr.mxu0 0.0
      %1907 = vmatpush1.msra.mxu0 0.0
      %1908 = vmatprep.mubr.f32.mxu0 0.0
      %1909 = vmatmul.mubr.f32.gmra.mrb[0].mxu0 %v1836
      %v1910 = vpop.f32.mrb[0].mxu0
      %v1911 = vadd.f32 %v1832, %v1910
      %v1912 = vpop.f32.mrb[0].mxu0
      %v1913 = vadd.f32 %v1834, %v1912
      %1914 = vdwg.mxu0
      %v1915 = vld [vmem:[#allocation3] sm:$0x3f]
      %1916 = vrot.lane.b32.xlu0 %v1722, 124
      %v1917 = vpop.permute.xlu0 %1916
      %v1919 = vcombine.high %v1915, %v1915
      %v1921 = vunpack.c.l.s4 1983009808
      %v1922 = vunpack.c.0.s8 %v1921
      %v1923 = vlaneseq
      %v1924 = vshrl.u32 %v1923, 7
      %v1925 = vsub.s32 %v1922, %v1924
      %v1926 = vrot.slane %v1915, %v1925
      %v1928 = vunpack.c.l.s4 1983009808
      %v1929 = vunpack.c.0.s8 %v1928
      %v1930 = vlaneseq
      %v1931 = vshrl.u32 %v1930, 7
      %v1932 = vsub.s32 %v1929, %v1931
      %v1933 = vrot.slane %v1919, %v1932
      %v1934 = vcombine.high %v1926, %v1926
      %1935 = vrot.lane.b32.xlu0 %v1926, 126
      %v1936 = vpop.permute.xlu0 %1935
      %1937 = vrot.lane.b32.xlu0 %v1934, 126
      %v1938 = vpop.permute.xlu0 %1937
      %1939 = vrot.lane.b32.xlu0 %v1933, 126
      %v1940 = vpop.permute.xlu0 %1939
      %v1941 = vsel %vm874, %v1936, %v1938
      %v1942 = vsel %vm874, %v1938, %v1940
      %v1943 = vsel %vm1756, %v1917, 0
      %v1945 = vsel %vm1661, %v1941, 0
      %v1947 = vsel %vm1661, %v1942, 0
      %1949 = vmatprep.subr.mxu0 %v1947
      %1950 = vmatpush1.msra.mxu0 %v1945
      %1951 = vmatprep.subr.mxu0 0.0
      %1952 = vmatpush1.msra.mxu0 0.0
      %1953 = vmatprep.subr.mxu0 0.0
      %1954 = vmatpush1.msra.mxu0 0.0
      %1955 = vmatprep.subr.mxu0 0.0
      %1956 = vmatpush1.msra.mxu0 0.0
      %1957 = vmatprep.subr.mxu0 0.0
      %1958 = vmatpush1.msra.mxu0 0.0
      %1959 = vmatprep.subr.mxu0 0.0
      %1960 = vmatpush1.msra.mxu0 0.0
      %1961 = vmatprep.subr.mxu0 0.0
      %1962 = vmatpush1.msra.mxu0 0.0
      %1963 = vmatprep.subr.mxu0 0.0
      %1964 = vmatpush1.msra.mxu0 0.0
      %1965 = vmatprep.subr.mxu0 0.0
      %1966 = vmatpush1.msra.mxu0 0.0
      %1967 = vmatprep.subr.mxu0 0.0
      %1968 = vmatpush1.msra.mxu0 0.0
      %1969 = vmatprep.subr.mxu0 0.0
      %1970 = vmatpush1.msra.mxu0 0.0
      %1971 = vmatprep.subr.mxu0 0.0
      %1972 = vmatpush1.msra.mxu0 0.0
      %1973 = vmatprep.subr.mxu0 0.0
      %1974 = vmatpush1.msra.mxu0 0.0
      %1975 = vmatprep.subr.mxu0 0.0
      %1976 = vmatpush1.msra.mxu0 0.0
      %1977 = vmatprep.subr.mxu0 0.0
      %1978 = vmatpush1.msra.mxu0 0.0
      %1979 = vmatprep.subr.mxu0 0.0
      %1980 = vmatpush1.msra.mxu0 0.0
      %1981 = vmatprep.subr.mxu0 0.0
      %1982 = vmatpush1.msra.mxu0 0.0
      %1983 = vmatprep.subr.mxu0 0.0
      %1984 = vmatpush1.msra.mxu0 0.0
      %1985 = vmatprep.subr.mxu0 0.0
      %1986 = vmatpush1.msra.mxu0 0.0
      %1987 = vmatprep.subr.mxu0 0.0
      %1988 = vmatpush1.msra.mxu0 0.0
      %1989 = vmatprep.subr.mxu0 0.0
      %1990 = vmatpush1.msra.mxu0 0.0
      %1991 = vmatprep.subr.mxu0 0.0
      %1992 = vmatpush1.msra.mxu0 0.0
      %1993 = vmatprep.subr.mxu0 0.0
      %1994 = vmatpush1.msra.mxu0 0.0
      %1995 = vmatprep.subr.mxu0 0.0
      %1996 = vmatpush1.msra.mxu0 0.0
      %1997 = vmatprep.subr.mxu0 0.0
      %1998 = vmatpush1.msra.mxu0 0.0
      %1999 = vmatprep.subr.mxu0 0.0
      %2000 = vmatpush1.msra.mxu0 0.0
      %2001 = vmatprep.subr.mxu0 0.0
      %2002 = vmatpush1.msra.mxu0 0.0
      %2003 = vmatprep.subr.mxu0 0.0
      %2004 = vmatpush1.msra.mxu0 0.0
      %2005 = vmatprep.subr.mxu0 0.0
      %2006 = vmatpush1.msra.mxu0 0.0
      %2007 = vmatprep.subr.mxu0 0.0
      %2008 = vmatpush1.msra.mxu0 0.0
      %2009 = vmatprep.subr.mxu0 0.0
      %2010 = vmatpush1.msra.mxu0 0.0
      %2011 = vmatprep.subr.mxu0 0.0
      %2012 = vmatpush1.msra.mxu0 0.0
      %2013 = vmatprep.mubr.f32.mxu0 0.0
      %2014 = vmatmul.mubr.f32.gmra.mrb[0].mxu0 %v1943
      %v2015 = vpop.f32.mrb[0].mxu0
      %v2016 = vadd.f32 0.0, %v2015
      %v2017 = vpop.f32.mrb[0].mxu0
      %v2018 = vadd.f32 0.0, %v2017
      %2019 = vdwg.mxu0
      %v2020 = vadd.f32 %v1911, %v2016
      %v2021 = vadd.f32 %v1913, %v2018
      %v2022 = vld [vmem:[#allocation3] sm:$0x3f]
      %v2024 = vcombine.high %v2022, %v2022
      %v2026 = vunpack.c.l.s4 1983009808
      %v2027 = vunpack.c.0.s8 %v2026
      %v2028 = vlaneseq
      %v2029 = vshrl.u32 %v2028, 7
      %v2030 = vsub.s32 %v2027, %v2029
      %v2031 = vrot.slane %v2022, %v2030
      %v2033 = vunpack.c.l.s4 1983009808
      %v2034 = vunpack.c.0.s8 %v2033
      %v2035 = vlaneseq
      %v2036 = vshrl.u32 %v2035, 7
      %v2037 = vsub.s32 %v2034, %v2036
      %v2038 = vrot.slane %v2024, %v2037
      %v2039 = vcombine.high %v2031, %v2031
      %2040 = vrot.lane.b32.xlu0 %v2031, 125
      %v2041 = vpop.permute.xlu0 %2040
      %2042 = vrot.lane.b32.xlu0 %v2039, 125
      %v2043 = vpop.permute.xlu0 %2042
      %2044 = vrot.lane.b32.xlu0 %v2038, 125
      %v2045 = vpop.permute.xlu0 %2044
      %vm2046 = vcmask 1022976
      %v2047 = vsel %vm2046, %v2041, %v2043
      %v2048 = vsel %vm2046, %v2043, %v2045
      %v2051 = vsel %vm863, %v2047, 0.0
      %v2052 = vsel %vm864, %v2048, 0.0
      %v2053 = vld [vmem:[%s9] sm:$0xf]
      %2055 = vrot.lane.b32.xlu0 %v2053, 122
      %v2056 = vpop.permute.xlu0 %2055
      %v2057 = vsel %vm1756, %v2056, 0
      %v2060 = vsel %vm1661, %v2051, 0
      %v2063 = vsel %vm1661, %v2052, 0
      %2065 = vmatprep.subr.mxu0 %v2063
      %2066 = vmatpush1.msra.mxu0 %v2060
      %2067 = vmatprep.subr.mxu0 0.0
      %2068 = vmatpush1.msra.mxu0 0.0
      %2069 = vmatprep.subr.mxu0 0.0
      %2070 = vmatpush1.msra.mxu0 0.0
      %2071 = vmatprep.subr.mxu0 0.0
      %2072 = vmatpush1.msra.mxu0 0.0
      %2073 = vmatprep.subr.mxu0 0.0
      %2074 = vmatpush1.msra.mxu0 0.0
      %2075 = vmatprep.subr.mxu0 0.0
      %2076 = vmatpush1.msra.mxu0 0.0
      %2077 = vmatprep.subr.mxu0 0.0
      %2078 = vmatpush1.msra.mxu0 0.0
      %2079 = vmatprep.subr.mxu0 0.0
      %2080 = vmatpush1.msra.mxu0 0.0
      %2081 = vmatprep.subr.mxu0 0.0
      %2082 = vmatpush1.msra.mxu0 0.0
      %2083 = vmatprep.subr.mxu0 0.0
      %2084 = vmatpush1.msra.mxu0 0.0
      %2085 = vmatprep.subr.mxu0 0.0
      %2086 = vmatpush1.msra.mxu0 0.0
      %2087 = vmatprep.subr.mxu0 0.0
      %2088 = vmatpush1.msra.mxu0 0.0
      %2089 = vmatprep.subr.mxu0 0.0
      %2090 = vmatpush1.msra.mxu0 0.0
      %2091 = vmatprep.subr.mxu0 0.0
      %2092 = vmatpush1.msra.mxu0 0.0
      %2093 = vmatprep.subr.mxu0 0.0
      %2094 = vmatpush1.msra.mxu0 0.0
      %2095 = vmatprep.subr.mxu0 0.0
      %2096 = vmatpush1.msra.mxu0 0.0
      %2097 = vmatprep.subr.mxu0 0.0
      %2098 = vmatpush1.msra.mxu0 0.0
      %2099 = vmatprep.subr.mxu0 0.0
      %2100 = vmatpush1.msra.mxu0 0.0
      %2101 = vmatprep.subr.mxu0 0.0
      %2102 = vmatpush1.msra.mxu0 0.0
      %2103 = vmatprep.subr.mxu0 0.0
      %2104 = vmatpush1.msra.mxu0 0.0
      %2105 = vmatprep.subr.mxu0 0.0
      %2106 = vmatpush1.msra.mxu0 0.0
      %2107 = vmatprep.subr.mxu0 0.0
      %2108 = vmatpush1.msra.mxu0 0.0
      %2109 = vmatprep.subr.mxu0 0.0
      %2110 = vmatpush1.msra.mxu0 0.0
      %2111 = vmatprep.subr.mxu0 0.0
      %2112 = vmatpush1.msra.mxu0 0.0
      %2113 = vmatprep.subr.mxu0 0.0
      %2114 = vmatpush1.msra.mxu0 0.0
      %2115 = vmatprep.subr.mxu0 0.0
      %2116 = vmatpush1.msra.mxu0 0.0
      %2117 = vmatprep.subr.mxu0 0.0
      %2118 = vmatpush1.msra.mxu0 0.0
      %2119 = vmatprep.subr.mxu0 0.0
      %2120 = vmatpush1.msra.mxu0 0.0
      %2121 = vmatprep.subr.mxu0 0.0
      %2122 = vmatpush1.msra.mxu0 0.0
      %2123 = vmatprep.subr.mxu0 0.0
      %2124 = vmatpush1.msra.mxu0 0.0
      %2125 = vmatprep.subr.mxu0 0.0
      %2126 = vmatpush1.msra.mxu0 0.0
      %2127 = vmatprep.subr.mxu0 0.0
      %2128 = vmatpush1.msra.mxu0 0.0
      %2129 = vmatprep.mubr.f32.mxu0 0.0
      %2130 = vmatmul.mubr.f32.gmra.mrb[0].mxu0 %v2057
      %v2131 = vpop.f32.mrb[0].mxu0
      %v2132 = vadd.f32 0.0, %v2131
      %v2133 = vpop.f32.mrb[0].mxu0
      %v2134 = vadd.f32 0.0, %v2133
      %2135 = vdwg.mxu0
      %v2136 = vadd.f32 %v2020, %v2132
      %v2137 = vadd.f32 %v2021, %v2134
      %v2138 = vld [vmem:[#allocation3] sm:$0x3f]
      %v2139 = vsel %vm1702, 1, 0
      %v2140 = vsel %vm1703, 1, 0
      %vm2141 = vcmp.eq.s32.totalorder %v2139, 1
      %vm2142 = vcmp.eq.s32.totalorder %v2140, 1
      %v2144 = vcombine.high %v2138, %v2138
      %v2146 = vunpack.c.l.s4 1983009808
      %v2147 = vunpack.c.0.s8 %v2146
      %v2148 = vlaneseq
      %v2149 = vshrl.u32 %v2148, 7
      %v2150 = vsub.s32 %v2147, %v2149
      %v2151 = vrot.slane %v2138, %v2150
      %v2153 = vunpack.c.l.s4 1983009808
      %v2154 = vunpack.c.0.s8 %v2153
      %v2155 = vlaneseq
      %v2156 = vshrl.u32 %v2155, 7
      %v2157 = vsub.s32 %v2154, %v2156
      %v2158 = vrot.slane %v2144, %v2157
      %v2159 = vcombine.high %v2151, %v2151
      %2160 = vrot.lane.b32.xlu0 %v2151, 124
      %v2161 = vpop.permute.xlu0 %2160
      %2162 = vrot.lane.b32.xlu0 %v2159, 124
      %v2163 = vpop.permute.xlu0 %2162
      %2164 = vrot.lane.b32.xlu0 %v2158, 124
      %v2165 = vpop.permute.xlu0 %2164
      %vm2166 = vcmask 1014784
      %v2167 = vsel %vm2166, %v2161, %v2163
      %v2168 = vsel %vm2166, %v2163, %v2165
      %v2171 = vsel %vm2141, %v2167, 0.0
      %v2172 = vsel %vm2142, %v2168, 0.0
      %v2173 = vld [vmem:[%s9] sm:$0xf]
      %2175 = vrot.lane.b32.xlu0 %v2173, 120
      %v2176 = vpop.permute.xlu0 %2175
      %v2177 = vsel %vm1756, %v2176, 0
      %v2180 = vsel %vm1661, %v2171, 0
      %v2183 = vsel %vm1661, %v2172, 0
      %2185 = vmatprep.subr.mxu0 %v2183
      %2186 = vmatpush1.msra.mxu0 %v2180
      %2187 = vmatprep.subr.mxu0 0.0
      %2188 = vmatpush1.msra.mxu0 0.0
      %2189 = vmatprep.subr.mxu0 0.0
      %2190 = vmatpush1.msra.mxu0 0.0
      %2191 = vmatprep.subr.mxu0 0.0
      %2192 = vmatpush1.msra.mxu0 0.0
      %2193 = vmatprep.subr.mxu0 0.0
      %2194 = vmatpush1.msra.mxu0 0.0
      %2195 = vmatprep.subr.mxu0 0.0
      %2196 = vmatpush1.msra.mxu0 0.0
      %2197 = vmatprep.subr.mxu0 0.0
      %2198 = vmatpush1.msra.mxu0 0.0
      %2199 = vmatprep.subr.mxu0 0.0
      %2200 = vmatpush1.msra.mxu0 0.0
      %2201 = vmatprep.subr.mxu0 0.0
      %2202 = vmatpush1.msra.mxu0 0.0
      %2203 = vmatprep.subr.mxu0 0.0
      %2204 = vmatpush1.msra.mxu0 0.0
      %2205 = vmatprep.subr.mxu0 0.0
      %2206 = vmatpush1.msra.mxu0 0.0
      %2207 = vmatprep.subr.mxu0 0.0
      %2208 = vmatpush1.msra.mxu0 0.0
      %2209 = vmatprep.subr.mxu0 0.0
      %2210 = vmatpush1.msra.mxu0 0.0
      %2211 = vmatprep.subr.mxu0 0.0
      %2212 = vmatpush1.msra.mxu0 0.0
      %2213 = vmatprep.subr.mxu0 0.0
      %2214 = vmatpush1.msra.mxu0 0.0
      %2215 = vmatprep.subr.mxu0 0.0
      %2216 = vmatpush1.msra.mxu0 0.0
      %2217 = vmatprep.subr.mxu0 0.0
      %2218 = vmatpush1.msra.mxu0 0.0
      %2219 = vmatprep.subr.mxu0 0.0
      %2220 = vmatpush1.msra.mxu0 0.0
      %2221 = vmatprep.subr.mxu0 0.0
      %2222 = vmatpush1.msra.mxu0 0.0
      %2223 = vmatprep.subr.mxu0 0.0
      %2224 = vmatpush1.msra.mxu0 0.0
      %2225 = vmatprep.subr.mxu0 0.0
      %2226 = vmatpush1.msra.mxu0 0.0
      %2227 = vmatprep.subr.mxu0 0.0
      %2228 = vmatpush1.msra.mxu0 0.0
      %2229 = vmatprep.subr.mxu0 0.0
      %2230 = vmatpush1.msra.mxu0 0.0
      %2231 = vmatprep.subr.mxu0 0.0
      %2232 = vmatpush1.msra.mxu0 0.0
      %2233 = vmatprep.subr.mxu0 0.0
      %2234 = vmatpush1.msra.mxu0 0.0
      %2235 = vmatprep.subr.mxu0 0.0
      %2236 = vmatpush1.msra.mxu0 0.0
      %2237 = vmatprep.subr.mxu0 0.0
      %2238 = vmatpush1.msra.mxu0 0.0
      %2239 = vmatprep.subr.mxu0 0.0
      %2240 = vmatpush1.msra.mxu0 0.0
      %2241 = vmatprep.subr.mxu0 0.0
      %2242 = vmatpush1.msra.mxu0 0.0
      %2243 = vmatprep.subr.mxu0 0.0
      %2244 = vmatpush1.msra.mxu0 0.0
      %2245 = vmatprep.subr.mxu0 0.0
      %2246 = vmatpush1.msra.mxu0 0.0
      %2247 = vmatprep.subr.mxu0 0.0
      %2248 = vmatpush1.msra.mxu0 0.0
      %2249 = vmatprep.mubr.f32.mxu0 0.0
      %2250 = vmatmul.mubr.f32.gmra.mrb[0].mxu0 %v2177
      %v2251 = vpop.f32.mrb[0].mxu0
      %v2252 = vadd.f32 0.0, %v2251
      %v2253 = vpop.f32.mrb[0].mxu0
      %v2254 = vadd.f32 0.0, %v2253
      %2255 = vdwg.mxu0
      %v2256 = vadd.f32 %v2136, %v2252
      %v2257 = vadd.f32 %v2137, %v2254
      %v2258 = vld [vmem:[#allocation3] sm:$0x3f]
      %v2260 = vcombine.high %v2258, %v2258
      %v2262 = vunpack.c.l.s4 1983009808
      %v2263 = vunpack.c.0.s8 %v2262
      %v2264 = vlaneseq
      %v2265 = vshrl.u32 %v2264, 7
      %v2266 = vsub.s32 %v2263, %v2265
      %v2267 = vrot.slane %v2258, %v2266
      %v2269 = vunpack.c.l.s4 1983009808
      %v2270 = vunpack.c.0.s8 %v2269
      %v2271 = vlaneseq
      %v2272 = vshrl.u32 %v2271, 7
      %v2273 = vsub.s32 %v2270, %v2272
      %v2274 = vrot.slane %v2260, %v2273
      %v2275 = vcombine.high %v2267, %v2267
      %2276 = vrot.lane.b32.xlu0 %v2267, 112
      %v2277 = vpop.permute.xlu0 %2276
      %2278 = vrot.lane.b32.xlu0 %v2275, 112
      %v2279 = vpop.permute.xlu0 %2278
      %2280 = vrot.lane.b32.xlu0 %v2274, 112
      %v2281 = vpop.permute.xlu0 %2280
      %v2282 = vsel %vm977, %v2277, %v2279
      %v2283 = vsel %vm977, %v2279, %v2281
      %v2286 = vsel %vm1707, %v2282, 0.0
      %v2287 = vsel %vm1708, %v2283, 0.0
      %v2288 = vld [vmem:[%s9] sm:$0xf]
      %2290 = vrot.lane.b32.xlu0 %v2288, 118
      %v2291 = vpop.permute.xlu0 %2290
      %v2292 = vsel %vm1756, %v2291, 0
      %v2295 = vsel %vm1661, %v2286, 0
      %v2298 = vsel %vm1661, %v2287, 0
      %2300 = vmatprep.subr.mxu0 %v2298
      %2301 = vmatpush1.msra.mxu0 %v2295
      %2302 = vmatprep.subr.mxu0 0.0
      %2303 = vmatpush1.msra.mxu0 0.0
      %2304 = vmatprep.subr.mxu0 0.0
      %2305 = vmatpush1.msra.mxu0 0.0
      %2306 = vmatprep.subr.mxu0 0.0
      %2307 = vmatpush1.msra.mxu0 0.0
      %2308 = vmatprep.subr.mxu0 0.0
      %2309 = vmatpush1.msra.mxu0 0.0
      %2310 = vmatprep.subr.mxu0 0.0
      %2311 = vmatpush1.msra.mxu0 0.0
      %2312 = vmatprep.subr.mxu0 0.0
      %2313 = vmatpush1.msra.mxu0 0.0
      %2314 = vmatprep.subr.mxu0 0.0
      %2315 = vmatpush1.msra.mxu0 0.0
      %2316 = vmatprep.subr.mxu0 0.0
      %2317 = vmatpush1.msra.mxu0 0.0
      %2318 = vmatprep.subr.mxu0 0.0
      %2319 = vmatpush1.msra.mxu0 0.0
      %2320 = vmatprep.subr.mxu0 0.0
      %2321 = vmatpush1.msra.mxu0 0.0
      %2322 = vmatprep.subr.mxu0 0.0
      %2323 = vmatpush1.msra.mxu0 0.0
      %2324 = vmatprep.subr.mxu0 0.0
      %2325 = vmatpush1.msra.mxu0 0.0
      %2326 = vmatprep.subr.mxu0 0.0
      %2327 = vmatpush1.msra.mxu0 0.0
      %2328 = vmatprep.subr.mxu0 0.0
      %2329 = vmatpush1.msra.mxu0 0.0
      %2330 = vmatprep.subr.mxu0 0.0
      %2331 = vmatpush1.msra.mxu0 0.0
      %2332 = vmatprep.subr.mxu0 0.0
      %2333 = vmatpush1.msra.mxu0 0.0
      %2334 = vmatprep.subr.mxu0 0.0
      %2335 = vmatpush1.msra.mxu0 0.0
      %2336 = vmatprep.subr.mxu0 0.0
      %2337 = vmatpush1.msra.mxu0 0.0
      %2338 = vmatprep.subr.mxu0 0.0
      %2339 = vmatpush1.msra.mxu0 0.0
      %2340 = vmatprep.subr.mxu0 0.0
      %2341 = vmatpush1.msra.mxu0 0.0
      %2342 = vmatprep.subr.mxu0 0.0
      %2343 = vmatpush1.msra.mxu0 0.0
      %2344 = vmatprep.subr.mxu0 0.0
      %2345 = vmatpush1.msra.mxu0 0.0
      %2346 = vmatprep.subr.mxu0 0.0
      %2347 = vmatpush1.msra.mxu0 0.0
      %2348 = vmatprep.subr.mxu0 0.0
      %2349 = vmatpush1.msra.mxu0 0.0
      %2350 = vmatprep.subr.mxu0 0.0
      %2351 = vmatpush1.msra.mxu0 0.0
      %2352 = vmatprep.subr.mxu0 0.0
      %2353 = vmatpush1.msra.mxu0 0.0
      %2354 = vmatprep.subr.mxu0 0.0
      %2355 = vmatpush1.msra.mxu0 0.0
      %2356 = vmatprep.subr.mxu0 0.0
      %2357 = vmatpush1.msra.mxu0 0.0
      %2358 = vmatprep.subr.mxu0 0.0
      %2359 = vmatpush1.msra.mxu0 0.0
      %2360 = vmatprep.subr.mxu0 0.0
      %2361 = vmatpush1.msra.mxu0 0.0
      %2362 = vmatprep.subr.mxu0 0.0
      %2363 = vmatpush1.msra.mxu0 0.0
      %2364 = vmatprep.mubr.f32.mxu0 0.0
      %2365 = vmatmul.mubr.f32.gmra.mrb[0].mxu0 %v2292
      %v2366 = vpop.f32.mrb[0].mxu0
      %v2367 = vadd.f32 0.0, %v2366
      %v2368 = vpop.f32.mrb[0].mxu0
      %v2369 = vadd.f32 0.0, %v2368
      %2370 = vdwg.mxu0
      %v2371 = vadd.f32 %v2256, %v2367
      %v2372 = vadd.f32 %v2257, %v2369
      %v2373 = vld [vmem:[#allocation3] sm:$0x3f]
      %v2375 = vcombine.high %v2373, %v2373
      %v2377 = vunpack.c.l.s4 1983009808
      %v2378 = vunpack.c.0.s8 %v2377
      %v2379 = vlaneseq
      %v2380 = vshrl.u32 %v2379, 7
      %v2381 = vsub.s32 %v2378, %v2380
      %v2382 = vrot.slane %v2373, %v2381
      %v2384 = vunpack.c.l.s4 1983009808
      %v2385 = vunpack.c.0.s8 %v2384
      %v2386 = vlaneseq
      %v2387 = vshrl.u32 %v2386, 7
      %v2388 = vsub.s32 %v2385, %v2387
      %v2389 = vrot.slane %v2375, %v2388
      %v2390 = vcombine.high %v2382, %v2382
      %2391 = vrot.lane.b32.xlu0 %v2382, 111
      %v2392 = vpop.permute.xlu0 %2391
      %2393 = vrot.lane.b32.xlu0 %v2390, 111
      %v2394 = vpop.permute.xlu0 %2393
      %2395 = vrot.lane.b32.xlu0 %v2389, 111
      %v2396 = vpop.permute.xlu0 %2395
      %v2397 = vsel %vm1082, %v2392, %v2394
      %v2398 = vsel %vm1082, %v2394, %v2396
      %v2401 = vsel %vm681, %v2397, 0.0
      %v2402 = vsel %vm682, %v2398, 0.0
      %v2403 = vld [vmem:[%s9] sm:$0xf]
      %2405 = vrot.lane.b32.xlu0 %v2403, 116
      %v2406 = vpop.permute.xlu0 %2405
      %v2407 = vsel %vm1756, %v2406, 0
      %v2410 = vsel %vm1661, %v2401, 0
      %v2413 = vsel %vm1661, %v2402, 0
      %2415 = vmatprep.subr.mxu0 %v2413
      %2416 = vmatpush1.msra.mxu0 %v2410
      %2417 = vmatprep.subr.mxu0 0.0
      %2418 = vmatpush1.msra.mxu0 0.0
      %2419 = vmatprep.subr.mxu0 0.0
      %2420 = vmatpush1.msra.mxu0 0.0
      %2421 = vmatprep.subr.mxu0 0.0
      %2422 = vmatpush1.msra.mxu0 0.0
      %2423 = vmatprep.subr.mxu0 0.0
      %2424 = vmatpush1.msra.mxu0 0.0
      %2425 = vmatprep.subr.mxu0 0.0
      %2426 = vmatpush1.msra.mxu0 0.0
      %2427 = vmatprep.subr.mxu0 0.0
      %2428 = vmatpush1.msra.mxu0 0.0
      %2429 = vmatprep.subr.mxu0 0.0
      %2430 = vmatpush1.msra.mxu0 0.0
      %2431 = vmatprep.subr.mxu0 0.0
      %2432 = vmatpush1.msra.mxu0 0.0
      %2433 = vmatprep.subr.mxu0 0.0
      %2434 = vmatpush1.msra.mxu0 0.0
      %2435 = vmatprep.subr.mxu0 0.0
      %2436 = vmatpush1.msra.mxu0 0.0
      %2437 = vmatprep.subr.mxu0 0.0
      %2438 = vmatpush1.msra.mxu0 0.0
      %2439 = vmatprep.subr.mxu0 0.0
      %2440 = vmatpush1.msra.mxu0 0.0
      %2441 = vmatprep.subr.mxu0 0.0
      %2442 = vmatpush1.msra.mxu0 0.0
      %2443 = vmatprep.subr.mxu0 0.0
      %2444 = vmatpush1.msra.mxu0 0.0
      %2445 = vmatprep.subr.mxu0 0.0
      %2446 = vmatpush1.msra.mxu0 0.0
      %2447 = vmatprep.subr.mxu0 0.0
      %2448 = vmatpush1.msra.mxu0 0.0
      %2449 = vmatprep.subr.mxu0 0.0
      %2450 = vmatpush1.msra.mxu0 0.0
      %2451 = vmatprep.subr.mxu0 0.0
      %2452 = vmatpush1.msra.mxu0 0.0
      %2453 = vmatprep.subr.mxu0 0.0
      %2454 = vmatpush1.msra.mxu0 0.0
      %2455 = vmatprep.subr.mxu0 0.0
      %2456 = vmatpush1.msra.mxu0 0.0
      %2457 = vmatprep.subr.mxu0 0.0
      %2458 = vmatpush1.msra.mxu0 0.0
      %2459 = vmatprep.subr.mxu0 0.0
      %2460 = vmatpush1.msra.mxu0 0.0
      %2461 = vmatprep.subr.mxu0 0.0
      %2462 = vmatpush1.msra.mxu0 0.0
      %2463 = vmatprep.subr.mxu0 0.0
      %2464 = vmatpush1.msra.mxu0 0.0
      %2465 = vmatprep.subr.mxu0 0.0
      %2466 = vmatpush1.msra.mxu0 0.0
      %2467 = vmatprep.subr.mxu0 0.0
      %2468 = vmatpush1.msra.mxu0 0.0
      %2469 = vmatprep.subr.mxu0 0.0
      %2470 = vmatpush1.msra.mxu0 0.0
      %2471 = vmatprep.subr.mxu0 0.0
      %2472 = vmatpush1.msra.mxu0 0.0
      %2473 = vmatprep.subr.mxu0 0.0
      %2474 = vmatpush1.msra.mxu0 0.0
      %2475 = vmatprep.subr.mxu0 0.0
      %2476 = vmatpush1.msra.mxu0 0.0
      %2477 = vmatprep.subr.mxu0 0.0
      %2478 = vmatpush1.msra.mxu0 0.0
      %2479 = vmatprep.mubr.f32.mxu0 0.0
      %2480 = vmatmul.mubr.f32.gmra.mrb[0].mxu0 %v2407
      %v2481 = vpop.f32.mrb[0].mxu0
      %v2482 = vadd.f32 0.0, %v2481
      %v2483 = vpop.f32.mrb[0].mxu0
      %v2484 = vadd.f32 0.0, %v2483
      %2485 = vdwg.mxu0
      %v2486 = vadd.f32 %v2371, %v2482
      %v2487 = vadd.f32 %v2372, %v2484
      %v2488 = vld [vmem:[#allocation3] sm:$0x3f]
      %2489 = vrot.lane.b32.xlu0 %v2403, 114
      %v2490 = vpop.permute.xlu0 %2489
      %v2492 = vcombine.high %v2488, %v2488
      %v2494 = vunpack.c.l.s4 1983009808
      %v2495 = vunpack.c.0.s8 %v2494
      %v2496 = vlaneseq
      %v2497 = vshrl.u32 %v2496, 7
      %v2498 = vsub.s32 %v2495, %v2497
      %v2499 = vrot.slane %v2488, %v2498
      %v2501 = vunpack.c.l.s4 1983009808
      %v2502 = vunpack.c.0.s8 %v2501
      %v2503 = vlaneseq
      %v2504 = vshrl.u32 %v2503, 7
      %v2505 = vsub.s32 %v2502, %v2504
      %v2506 = vrot.slane %v2492, %v2505
      %v2507 = vcombine.high %v2499, %v2499
      %2508 = vrot.lane.b32.xlu0 %v2499, 110
      %v2509 = vpop.permute.xlu0 %2508
      %2510 = vrot.lane.b32.xlu0 %v2507, 110
      %v2511 = vpop.permute.xlu0 %2510
      %2512 = vrot.lane.b32.xlu0 %v2506, 110
      %v2513 = vpop.permute.xlu0 %2512
      %v2514 = vsel %vm1175, %v2509, %v2511
      %v2515 = vsel %vm1175, %v2511, %v2513
      %v2516 = vsel %vm1756, %v2490, 0
      %v2518 = vsel %vm1661, %v2514, 0
      %v2520 = vsel %vm1661, %v2515, 0
      %2522 = vmatprep.subr.mxu0 %v2520
      %2523 = vmatpush1.msra.mxu0 %v2518
      %2524 = vmatprep.subr.mxu0 0.0
      %2525 = vmatpush1.msra.mxu0 0.0
      %2526 = vmatprep.subr.mxu0 0.0
      %2527 = vmatpush1.msra.mxu0 0.0
      %2528 = vmatprep.subr.mxu0 0.0
      %2529 = vmatpush1.msra.mxu0 0.0
      %2530 = vmatprep.subr.mxu0 0.0
      %2531 = vmatpush1.msra.mxu0 0.0
      %2532 = vmatprep.subr.mxu0 0.0
      %2533 = vmatpush1.msra.mxu0 0.0
      %2534 = vmatprep.subr.mxu0 0.0
      %2535 = vmatpush1.msra.mxu0 0.0
      %2536 = vmatprep.subr.mxu0 0.0
      %2537 = vmatpush1.msra.mxu0 0.0
      %2538 = vmatprep.subr.mxu0 0.0
      %2539 = vmatpush1.msra.mxu0 0.0
      %2540 = vmatprep.subr.mxu0 0.0
      %2541 = vmatpush1.msra.mxu0 0.0
      %2542 = vmatprep.subr.mxu0 0.0
      %2543 = vmatpush1.msra.mxu0 0.0
      %2544 = vmatprep.subr.mxu0 0.0
      %2545 = vmatpush1.msra.mxu0 0.0
      %2546 = vmatprep.subr.mxu0 0.0
      %2547 = vmatpush1.msra.mxu0 0.0
      %2548 = vmatprep.subr.mxu0 0.0
      %2549 = vmatpush1.msra.mxu0 0.0
      %2550 = vmatprep.subr.mxu0 0.0
      %2551 = vmatpush1.msra.mxu0 0.0
      %2552 = vmatprep.subr.mxu0 0.0
      %2553 = vmatpush1.msra.mxu0 0.0
      %2554 = vmatprep.subr.mxu0 0.0
      %2555 = vmatpush1.msra.mxu0 0.0
      %2556 = vmatprep.subr.mxu0 0.0
      %2557 = vmatpush1.msra.mxu0 0.0
      %2558 = vmatprep.subr.mxu0 0.0
      %2559 = vmatpush1.msra.mxu0 0.0
      %2560 = vmatprep.subr.mxu0 0.0
      %2561 = vmatpush1.msra.mxu0 0.0
      %2562 = vmatprep.subr.mxu0 0.0
      %2563 = vmatpush1.msra.mxu0 0.0
      %2564 = vmatprep.subr.mxu0 0.0
      %2565 = vmatpush1.msra.mxu0 0.0
      %2566 = vmatprep.subr.mxu0 0.0
      %2567 = vmatpush1.msra.mxu0 0.0
      %2568 = vmatprep.subr.mxu0 0.0
      %2569 = vmatpush1.msra.mxu0 0.0
      %2570 = vmatprep.subr.mxu0 0.0
      %2571 = vmatpush1.msra.mxu0 0.0
      %2572 = vmatprep.subr.mxu0 0.0
      %2573 = vmatpush1.msra.mxu0 0.0
      %2574 = vmatprep.subr.mxu0 0.0
      %2575 = vmatpush1.msra.mxu0 0.0
      %2576 = vmatprep.subr.mxu0 0.0
      %2577 = vmatpush1.msra.mxu0 0.0
      %2578 = vmatprep.subr.mxu0 0.0
      %2579 = vmatpush1.msra.mxu0 0.0
      %2580 = vmatprep.subr.mxu0 0.0
      %2581 = vmatpush1.msra.mxu0 0.0
      %2582 = vmatprep.subr.mxu0 0.0
      %2583 = vmatpush1.msra.mxu0 0.0
      %2584 = vmatprep.subr.mxu0 0.0
      %2585 = vmatpush1.msra.mxu0 0.0
      %2586 = vmatprep.mubr.f32.mxu0 0.0
      %2587 = vmatmul.mubr.f32.gmra.mrb[0].mxu0 %v2516
      %v2588 = vpop.f32.mrb[0].mxu0
      %v2589 = vadd.f32 0.0, %v2588
      %v2590 = vpop.f32.mrb[0].mxu0
      %v2591 = vadd.f32 0.0, %v2590
      %2592 = vdwg.mxu0
      %v2593 = vadd.f32 %v2486, %v2589
      %v2594 = vadd.f32 %v2487, %v2591
      %v2595 = vld [vmem:[#allocation3] sm:$0x3f]
      %v2597 = vcombine.high %v2595, %v2595
      %v2599 = vunpack.c.l.s4 1983009808
      %v2600 = vunpack.c.0.s8 %v2599
      %v2601 = vlaneseq
      %v2602 = vshrl.u32 %v2601, 7
      %v2603 = vsub.s32 %v2600, %v2602
      %v2604 = vrot.slane %v2595, %v2603
      %v2606 = vunpack.c.l.s4 1983009808
      %v2607 = vunpack.c.0.s8 %v2606
      %v2608 = vlaneseq
      %v2609 = vshrl.u32 %v2608, 7
      %v2610 = vsub.s32 %v2607, %v2609
      %v2611 = vrot.slane %v2597, %v2610
      %v2612 = vcombine.high %v2604, %v2604
      %2613 = vrot.lane.b32.xlu0 %v2604, 109
      %v2614 = vpop.permute.xlu0 %2613
      %2615 = vrot.lane.b32.xlu0 %v2612, 109
      %v2616 = vpop.permute.xlu0 %2615
      %2617 = vrot.lane.b32.xlu0 %v2611, 109
      %v2618 = vpop.permute.xlu0 %2617
      %vm2619 = vcmask 891904
      %v2620 = vsel %vm2619, %v2614, %v2616
      %v2621 = vsel %vm2619, %v2616, %v2618
      %v2624 = vsel %vm863, %v2620, 0.0
      %v2625 = vsel %vm864, %v2621, 0.0
      %v2626 = vld [vmem:[%s9] sm:$0xf]
      %2628 = vrot.lane.b32.xlu0 %v2626, 112
      %v2629 = vpop.permute.xlu0 %2628
      %v2630 = vsel %vm1756, %v2629, 0
      %v2633 = vsel %vm1661, %v2624, 0
      %v2636 = vsel %vm1661, %v2625, 0
      %2638 = vmatprep.subr.mxu0 %v2636
      %2639 = vmatpush1.msra.mxu0 %v2633
      %2640 = vmatprep.subr.mxu0 0.0
      %2641 = vmatpush1.msra.mxu0 0.0
      %2642 = vmatprep.subr.mxu0 0.0
      %2643 = vmatpush1.msra.mxu0 0.0
      %2644 = vmatprep.subr.mxu0 0.0
      %2645 = vmatpush1.msra.mxu0 0.0
      %2646 = vmatprep.subr.mxu0 0.0
      %2647 = vmatpush1.msra.mxu0 0.0
      %2648 = vmatprep.subr.mxu0 0.0
      %2649 = vmatpush1.msra.mxu0 0.0
      %2650 = vmatprep.subr.mxu0 0.0
      %2651 = vmatpush1.msra.mxu0 0.0
      %2652 = vmatprep.subr.mxu0 0.0
      %2653 = vmatpush1.msra.mxu0 0.0
      %2654 = vmatprep.subr.mxu0 0.0
      %2655 = vmatpush1.msra.mxu0 0.0
      %2656 = vmatprep.subr.mxu0 0.0
      %2657 = vmatpush1.msra.mxu0 0.0
      %2658 = vmatprep.subr.mxu0 0.0
      %2659 = vmatpush1.msra.mxu0 0.0
      %2660 = vmatprep.subr.mxu0 0.0
      %2661 = vmatpush1.msra.mxu0 0.0
      %2662 = vmatprep.subr.mxu0 0.0
      %2663 = vmatpush1.msra.mxu0 0.0
      %2664 = vmatprep.subr.mxu0 0.0
      %2665 = vmatpush1.msra.mxu0 0.0
      %2666 = vmatprep.subr.mxu0 0.0
      %2667 = vmatpush1.msra.mxu0 0.0
      %2668 = vmatprep.subr.mxu0 0.0
      %2669 = vmatpush1.msra.mxu0 0.0
      %2670 = vmatprep.subr.mxu0 0.0
      %2671 = vmatpush1.msra.mxu0 0.0
      %2672 = vmatprep.subr.mxu0 0.0
      %2673 = vmatpush1.msra.mxu0 0.0
      %2674 = vmatprep.subr.mxu0 0.0
      %2675 = vmatpush1.msra.mxu0 0.0
      %2676 = vmatprep.subr.mxu0 0.0
      %2677 = vmatpush1.msra.mxu0 0.0
      %2678 = vmatprep.subr.mxu0 0.0
      %2679 = vmatpush1.msra.mxu0 0.0
      %2680 = vmatprep.subr.mxu0 0.0
      %2681 = vmatpush1.msra.mxu0 0.0
      %2682 = vmatprep.subr.mxu0 0.0
      %2683 = vmatpush1.msra.mxu0 0.0
      %2684 = vmatprep.subr.mxu0 0.0
      %2685 = vmatpush1.msra.mxu0 0.0
      %2686 = vmatprep.subr.mxu0 0.0
      %2687 = vmatpush1.msra.mxu0 0.0
      %2688 = vmatprep.subr.mxu0 0.0
      %2689 = vmatpush1.msra.mxu0 0.0
      %2690 = vmatprep.subr.mxu0 0.0
      %2691 = vmatpush1.msra.mxu0 0.0
      %2692 = vmatprep.subr.mxu0 0.0
      %2693 = vmatpush1.msra.mxu0 0.0
      %2694 = vmatprep.subr.mxu0 0.0
      %2695 = vmatpush1.msra.mxu0 0.0
      %2696 = vmatprep.subr.mxu0 0.0
      %2697 = vmatpush1.msra.mxu0 0.0
      %2698 = vmatprep.subr.mxu0 0.0
      %2699 = vmatpush1.msra.mxu0 0.0
      %2700 = vmatprep.subr.mxu0 0.0
      %2701 = vmatpush1.msra.mxu0 0.0
      %2702 = vmatprep.mubr.f32.mxu0 0.0
      %2703 = vmatmul.mubr.f32.gmra.mrb[0].mxu0 %v2630
      %v2704 = vpop.f32.mrb[0].mxu0
      %v2705 = vadd.f32 0.0, %v2704
      %v2706 = vpop.f32.mrb[0].mxu0
      %v2707 = vadd.f32 0.0, %v2706
      %2708 = vdwg.mxu0
      %v2709 = vadd.f32 %v2593, %v2705
      %v2710 = vadd.f32 %v2594, %v2707
      %v2711 = vld [vmem:[#allocation3] sm:$0x3f]
      %v2713 = vcombine.high %v2711, %v2711
      %v2715 = vunpack.c.l.s4 1983009808
      %v2716 = vunpack.c.0.s8 %v2715
      %v2717 = vlaneseq
      %v2718 = vshrl.u32 %v2717, 7
      %v2719 = vsub.s32 %v2716, %v2718
      %v2720 = vrot.slane %v2711, %v2719
      %v2722 = vunpack.c.l.s4 1983009808
      %v2723 = vunpack.c.0.s8 %v2722
      %v2724 = vlaneseq
      %v2725 = vshrl.u32 %v2724, 7
      %v2726 = vsub.s32 %v2723, %v2725
      %v2727 = vrot.slane %v2713, %v2726
      %v2728 = vcombine.high %v2720, %v2720
      %2729 = vrot.lane.b32.xlu0 %v2720, 108
      %v2730 = vpop.permute.xlu0 %2729
      %2731 = vrot.lane.b32.xlu0 %v2728, 108
      %v2732 = vpop.permute.xlu0 %2731
      %2733 = vrot.lane.b32.xlu0 %v2727, 108
      %v2734 = vpop.permute.xlu0 %2733
      %vm2735 = vcmask 883712
      %v2736 = vsel %vm2735, %v2730, %v2732
      %v2737 = vsel %vm2735, %v2732, %v2734
      %v2740 = vsel %vm2141, %v2736, 0.0
      %v2741 = vsel %vm2142, %v2737, 0.0
      %v2742 = vld [vmem:[%s9] sm:$0xf]
      %2744 = vrot.lane.b32.xlu0 %v2742, 110
      %v2745 = vpop.permute.xlu0 %2744
      %v2746 = vsel %vm1756, %v2745, 0
      %v2749 = vsel %vm1661, %v2740, 0
      %v2752 = vsel %vm1661, %v2741, 0
      %2754 = vmatprep.subr.mxu0 %v2752
      %2755 = vmatpush1.msra.mxu0 %v2749
      %2756 = vmatprep.subr.mxu0 0.0
      %2757 = vmatpush1.msra.mxu0 0.0
      %2758 = vmatprep.subr.mxu0 0.0
      %2759 = vmatpush1.msra.mxu0 0.0
      %2760 = vmatprep.subr.mxu0 0.0
      %2761 = vmatpush1.msra.mxu0 0.0
      %2762 = vmatprep.subr.mxu0 0.0
      %2763 = vmatpush1.msra.mxu0 0.0
      %2764 = vmatprep.subr.mxu0 0.0
      %2765 = vmatpush1.msra.mxu0 0.0
      %2766 = vmatprep.subr.mxu0 0.0
      %2767 = vmatpush1.msra.mxu0 0.0
      %2768 = vmatprep.subr.mxu0 0.0
      %2769 = vmatpush1.msra.mxu0 0.0
      %2770 = vmatprep.subr.mxu0 0.0
      %2771 = vmatpush1.msra.mxu0 0.0
      %2772 = vmatprep.subr.mxu0 0.0
      %2773 = vmatpush1.msra.mxu0 0.0
      %2774 = vmatprep.subr.mxu0 0.0
      %2775 = vmatpush1.msra.mxu0 0.0
      %2776 = vmatprep.subr.mxu0 0.0
      %2777 = vmatpush1.msra.mxu0 0.0
      %2778 = vmatprep.subr.mxu0 0.0
      %2779 = vmatpush1.msra.mxu0 0.0
      %2780 = vmatprep.subr.mxu0 0.0
      %2781 = vmatpush1.msra.mxu0 0.0
      %2782 = vmatprep.subr.mxu0 0.0
      %2783 = vmatpush1.msra.mxu0 0.0
      %2784 = vmatprep.subr.mxu0 0.0
      %2785 = vmatpush1.msra.mxu0 0.0
      %2786 = vmatprep.subr.mxu0 0.0
      %2787 = vmatpush1.msra.mxu0 0.0
      %2788 = vmatprep.subr.mxu0 0.0
      %2789 = vmatpush1.msra.mxu0 0.0
      %2790 = vmatprep.subr.mxu0 0.0
      %2791 = vmatpush1.msra.mxu0 0.0
      %2792 = vmatprep.subr.mxu0 0.0
      %2793 = vmatpush1.msra.mxu0 0.0
      %2794 = vmatprep.subr.mxu0 0.0
      %2795 = vmatpush1.msra.mxu0 0.0
      %2796 = vmatprep.subr.mxu0 0.0
      %2797 = vmatpush1.msra.mxu0 0.0
      %2798 = vmatprep.subr.mxu0 0.0
      %2799 = vmatpush1.msra.mxu0 0.0
      %2800 = vmatprep.subr.mxu0 0.0
      %2801 = vmatpush1.msra.mxu0 0.0
      %2802 = vmatprep.subr.mxu0 0.0
      %2803 = vmatpush1.msra.mxu0 0.0
      %2804 = vmatprep.subr.mxu0 0.0
      %2805 = vmatpush1.msra.mxu0 0.0
      %2806 = vmatprep.subr.mxu0 0.0
      %2807 = vmatpush1.msra.mxu0 0.0
      %2808 = vmatprep.subr.mxu0 0.0
      %2809 = vmatpush1.msra.mxu0 0.0
      %2810 = vmatprep.subr.mxu0 0.0
      %2811 = vmatpush1.msra.mxu0 0.0
      %2812 = vmatprep.subr.mxu0 0.0
      %2813 = vmatpush1.msra.mxu0 0.0
      %2814 = vmatprep.subr.mxu0 0.0
      %2815 = vmatpush1.msra.mxu0 0.0
      %2816 = vmatprep.subr.mxu0 0.0
      %2817 = vmatpush1.msra.mxu0 0.0
      %2818 = vmatprep.mubr.f32.mxu0 0.0
      %2819 = vmatmul.mubr.f32.gmra.mrb[0].mxu0 %v2746
      %v2820 = vpop.f32.mrb[0].mxu0
      %v2821 = vadd.f32 0.0, %v2820
      %v2822 = vpop.f32.mrb[0].mxu0
      %v2823 = vadd.f32 0.0, %v2822
      %2824 = vdwg.mxu0
      %v2825 = vadd.f32 %v2709, %v2821
      %v2826 = vadd.f32 %v2710, %v2823
      %v2827 = vld [vmem:[#allocation3] sm:$0x3f]
      %v2829 = vcombine.high %v2827, %v2827
      %v2831 = vunpack.c.l.s4 1983009808
      %v2832 = vunpack.c.0.s8 %v2831
      %v2833 = vlaneseq
      %v2834 = vshrl.u32 %v2833, 7
      %v2835 = vsub.s32 %v2832, %v2834
      %v2836 = vrot.slane %v2827, %v2835
      %v2838 = vunpack.c.l.s4 1983009808
      %v2839 = vunpack.c.0.s8 %v2838
      %v2840 = vlaneseq
      %v2841 = vshrl.u32 %v2840, 7
      %v2842 = vsub.s32 %v2839, %v2841
      %v2843 = vrot.slane %v2829, %v2842
      %v2844 = vcombine.high %v2836, %v2836
      %2845 = vrot.lane.b32.xlu0 %v2836, 96
      %v2846 = vpop.permute.xlu0 %2845
      %2847 = vrot.lane.b32.xlu0 %v2844, 96
      %v2848 = vpop.permute.xlu0 %2847
      %2849 = vrot.lane.b32.xlu0 %v2843, 96
      %v2850 = vpop.permute.xlu0 %2849
      %v2851 = vsel %vm1278, %v2846, %v2848
      %v2852 = vsel %vm1278, %v2848, %v2850
      %v2855 = vsel %vm1707, %v2851, 0.0
      %v2856 = vsel %vm1708, %v2852, 0.0
      %v2857 = vld [vmem:[%s9] sm:$0xf]
      %2859 = vrot.lane.b32.xlu0 %v2857, 108
      %v2860 = vpop.permute.xlu0 %2859
      %v2861 = vsel %vm1756, %v2860, 0
      %v2864 = vsel %vm1661, %v2855, 0
      %v2867 = vsel %vm1661, %v2856, 0
      %2869 = vmatprep.subr.mxu0 %v2867
      %2870 = vmatpush1.msra.mxu0 %v2864
      %2871 = vmatprep.subr.mxu0 0.0
      %2872 = vmatpush1.msra.mxu0 0.0
      %2873 = vmatprep.subr.mxu0 0.0
      %2874 = vmatpush1.msra.mxu0 0.0
      %2875 = vmatprep.subr.mxu0 0.0
      %2876 = vmatpush1.msra.mxu0 0.0
      %2877 = vmatprep.subr.mxu0 0.0
      %2878 = vmatpush1.msra.mxu0 0.0
      %2879 = vmatprep.subr.mxu0 0.0
      %2880 = vmatpush1.msra.mxu0 0.0
      %2881 = vmatprep.subr.mxu0 0.0
      %2882 = vmatpush1.msra.mxu0 0.0
      %2883 = vmatprep.subr.mxu0 0.0
      %2884 = vmatpush1.msra.mxu0 0.0
      %2885 = vmatprep.subr.mxu0 0.0
      %2886 = vmatpush1.msra.mxu0 0.0
      %2887 = vmatprep.subr.mxu0 0.0
      %2888 = vmatpush1.msra.mxu0 0.0
      %2889 = vmatprep.subr.mxu0 0.0
      %2890 = vmatpush1.msra.mxu0 0.0
      %2891 = vmatprep.subr.mxu0 0.0
      %2892 = vmatpush1.msra.mxu0 0.0
      %2893 = vmatprep.subr.mxu0 0.0
      %2894 = vmatpush1.msra.mxu0 0.0
      %2895 = vmatprep.subr.mxu0 0.0
      %2896 = vmatpush1.msra.mxu0 0.0
      %2897 = vmatprep.subr.mxu0 0.0
      %2898 = vmatpush1.msra.mxu0 0.0
      %2899 = vmatprep.subr.mxu0 0.0
      %2900 = vmatpush1.msra.mxu0 0.0
      %2901 = vmatprep.subr.mxu0 0.0
      %2902 = vmatpush1.msra.mxu0 0.0
      %2903 = vmatprep.subr.mxu0 0.0
      %2904 = vmatpush1.msra.mxu0 0.0
      %2905 = vmatprep.subr.mxu0 0.0
      %2906 = vmatpush1.msra.mxu0 0.0
      %2907 = vmatprep.subr.mxu0 0.0
      %2908 = vmatpush1.msra.mxu0 0.0
      %2909 = vmatprep.subr.mxu0 0.0
      %2910 = vmatpush1.msra.mxu0 0.0
      %2911 = vmatprep.subr.mxu0 0.0
      %2912 = vmatpush1.msra.mxu0 0.0
      %2913 = vmatprep.subr.mxu0 0.0
      %2914 = vmatpush1.msra.mxu0 0.0
      %2915 = vmatprep.subr.mxu0 0.0
      %2916 = vmatpush1.msra.mxu0 0.0
      %2917 = vmatprep.subr.mxu0 0.0
      %2918 = vmatpush1.msra.mxu0 0.0
      %2919 = vmatprep.subr.mxu0 0.0
      %2920 = vmatpush1.msra.mxu0 0.0
      %2921 = vmatprep.subr.mxu0 0.0
      %2922 = vmatpush1.msra.mxu0 0.0
      %2923 = vmatprep.subr.mxu0 0.0
      %2924 = vmatpush1.msra.mxu0 0.0
      %2925 = vmatprep.subr.mxu0 0.0
      %2926 = vmatpush1.msra.mxu0 0.0
      %2927 = vmatprep.subr.mxu0 0.0
      %2928 = vmatpush1.msra.mxu0 0.0
      %2929 = vmatprep.subr.mxu0 0.0
      %2930 = vmatpush1.msra.mxu0 0.0
      %2931 = vmatprep.subr.mxu0 0.0
      %2932 = vmatpush1.msra.mxu0 0.0
      %2933 = vmatprep.mubr.f32.mxu0 0.0
      %2934 = vmatmul.mubr.f32.gmra.mrb[0].mxu0 %v2861
      %v2935 = vpop.f32.mrb[0].mxu0
      %v2936 = vadd.f32 0.0, %v2935
      %v2937 = vpop.f32.mrb[0].mxu0
      %v2938 = vadd.f32 0.0, %v2937
      %2939 = vdwg.mxu0
      %v2940 = vadd.f32 %v2825, %v2936
      %v2941 = vadd.f32 %v2826, %v2938
      %v2942 = vld [vmem:[#allocation3] sm:$0x3f]
      %v2944 = vcombine.high %v2942, %v2942
      %v2946 = vunpack.c.l.s4 1983009808
      %v2947 = vunpack.c.0.s8 %v2946
      %v2948 = vlaneseq
      %v2949 = vshrl.u32 %v2948, 7
      %v2950 = vsub.s32 %v2947, %v2949
      %v2951 = vrot.slane %v2942, %v2950
      %v2953 = vunpack.c.l.s4 1983009808
      %v2954 = vunpack.c.0.s8 %v2953
      %v2955 = vlaneseq
      %v2956 = vshrl.u32 %v2955, 7
      %v2957 = vsub.s32 %v2954, %v2956
      %v2958 = vrot.slane %v2944, %v2957
      %v2959 = vcombine.high %v2951, %v2951
      %2960 = vrot.lane.b32.xlu0 %v2951, 95
      %v2961 = vpop.permute.xlu0 %2960
      %2962 = vrot.lane.b32.xlu0 %v2959, 95
      %v2963 = vpop.permute.xlu0 %2962
      %2964 = vrot.lane.b32.xlu0 %v2958, 95
      %v2965 = vpop.permute.xlu0 %2964
      %v2966 = vsel %vm1383, %v2961, %v2963
      %v2967 = vsel %vm1383, %v2963, %v2965
      %v2970 = vsel %vm681, %v2966, 0.0
      %v2971 = vsel %vm682, %v2967, 0.0
      %v2972 = vld [vmem:[%s9] sm:$0xf]
      %2974 = vrot.lane.b32.xlu0 %v2972, 106
      %v2975 = vpop.permute.xlu0 %2974
      %v2976 = vsel %vm1756, %v2975, 0
      %v2979 = vsel %vm1661, %v2970, 0
      %v2982 = vsel %vm1661, %v2971, 0
      %2984 = vmatprep.subr.mxu0 %v2982
      %2985 = vmatpush1.msra.mxu0 %v2979
      %2986 = vmatprep.subr.mxu0 0.0
      %2987 = vmatpush1.msra.mxu0 0.0
      %2988 = vmatprep.subr.mxu0 0.0
      %2989 = vmatpush1.msra.mxu0 0.0
      %2990 = vmatprep.subr.mxu0 0.0
      %2991 = vmatpush1.msra.mxu0 0.0
      %2992 = vmatprep.subr.mxu0 0.0
      %2993 = vmatpush1.msra.mxu0 0.0
      %2994 = vmatprep.subr.mxu0 0.0
      %2995 = vmatpush1.msra.mxu0 0.0
      %2996 = vmatprep.subr.mxu0 0.0
      %2997 = vmatpush1.msra.mxu0 0.0
      %2998 = vmatprep.subr.mxu0 0.0
      %2999 = vmatpush1.msra.mxu0 0.0
      %3000 = vmatprep.subr.mxu0 0.0
      %3001 = vmatpush1.msra.mxu0 0.0
      %3002 = vmatprep.subr.mxu0 0.0
      %3003 = vmatpush1.msra.mxu0 0.0
      %3004 = vmatprep.subr.mxu0 0.0
      %3005 = vmatpush1.msra.mxu0 0.0
      %3006 = vmatprep.subr.mxu0 0.0
      %3007 = vmatpush1.msra.mxu0 0.0
      %3008 = vmatprep.subr.mxu0 0.0
      %3009 = vmatpush1.msra.mxu0 0.0
      %3010 = vmatprep.subr.mxu0 0.0
      %3011 = vmatpush1.msra.mxu0 0.0
      %3012 = vmatprep.subr.mxu0 0.0
      %3013 = vmatpush1.msra.mxu0 0.0
      %3014 = vmatprep.subr.mxu0 0.0
      %3015 = vmatpush1.msra.mxu0 0.0
      %3016 = vmatprep.subr.mxu0 0.0
      %3017 = vmatpush1.msra.mxu0 0.0
      %3018 = vmatprep.subr.mxu0 0.0
      %3019 = vmatpush1.msra.mxu0 0.0
      %3020 = vmatprep.subr.mxu0 0.0
      %3021 = vmatpush1.msra.mxu0 0.0
      %3022 = vmatprep.subr.mxu0 0.0
      %3023 = vmatpush1.msra.mxu0 0.0
      %3024 = vmatprep.subr.mxu0 0.0
      %3025 = vmatpush1.msra.mxu0 0.0
      %3026 = vmatprep.subr.mxu0 0.0
      %3027 = vmatpush1.msra.mxu0 0.0
      %3028 = vmatprep.subr.mxu0 0.0
      %3029 = vmatpush1.msra.mxu0 0.0
      %3030 = vmatprep.subr.mxu0 0.0
      %3031 = vmatpush1.msra.mxu0 0.0
      %3032 = vmatprep.subr.mxu0 0.0
      %3033 = vmatpush1.msra.mxu0 0.0
      %3034 = vmatprep.subr.mxu0 0.0
      %3035 = vmatpush1.msra.mxu0 0.0
      %3036 = vmatprep.subr.mxu0 0.0
      %3037 = vmatpush1.msra.mxu0 0.0
      %3038 = vmatprep.subr.mxu0 0.0
      %3039 = vmatpush1.msra.mxu0 0.0
      %3040 = vmatprep.subr.mxu0 0.0
      %3041 = vmatpush1.msra.mxu0 0.0
      %3042 = vmatprep.subr.mxu0 0.0
      %3043 = vmatpush1.msra.mxu0 0.0
      %3044 = vmatprep.subr.mxu0 0.0
      %3045 = vmatpush1.msra.mxu0 0.0
      %3046 = vmatprep.subr.mxu0 0.0
      %3047 = vmatpush1.msra.mxu0 0.0
      %3048 = vmatprep.mubr.f32.mxu0 0.0
      %3049 = vmatmul.mubr.f32.gmra.mrb[0].mxu0 %v2976
      %v3050 = vpop.f32.mrb[0].mxu0
      %v3051 = vadd.f32 0.0, %v3050
      %v3052 = vpop.f32.mrb[0].mxu0
      %v3053 = vadd.f32 0.0, %v3052
      %3054 = vdwg.mxu0
      %v3055 = vadd.f32 %v2940, %v3051
      %v3056 = vadd.f32 %v2941, %v3053
      %v3057 = vld [vmem:[#allocation3] sm:$0x3f]
      %3058 = vrot.lane.b32.xlu0 %v2972, 104
      %v3059 = vpop.permute.xlu0 %3058
      %v3061 = vcombine.high %v3057, %v3057
      %v3063 = vunpack.c.l.s4 1983009808
      %v3064 = vunpack.c.0.s8 %v3063
      %v3065 = vlaneseq
      %v3066 = vshrl.u32 %v3065, 7
      %v3067 = vsub.s32 %v3064, %v3066
      %v3068 = vrot.slane %v3057, %v3067
      %v3070 = vunpack.c.l.s4 1983009808
      %v3071 = vunpack.c.0.s8 %v3070
      %v3072 = vlaneseq
      %v3073 = vshrl.u32 %v3072, 7
      %v3074 = vsub.s32 %v3071, %v3073
      %v3075 = vrot.slane %v3061, %v3074
      %v3076 = vcombine.high %v3068, %v3068
      %3077 = vrot.lane.b32.xlu0 %v3068, 94
      %v3078 = vpop.permute.xlu0 %3077
      %3079 = vrot.lane.b32.xlu0 %v3076, 94
      %v3080 = vpop.permute.xlu0 %3079
      %3081 = vrot.lane.b32.xlu0 %v3075, 94
      %v3082 = vpop.permute.xlu0 %3081
      %v3083 = vsel %vm1476, %v3078, %v3080
      %v3084 = vsel %vm1476, %v3080, %v3082
      %v3085 = vsel %vm1756, %v3059, 0
      %v3087 = vsel %vm1661, %v3083, 0
      %v3089 = vsel %vm1661, %v3084, 0
      %3091 = vmatprep.subr.mxu0 %v3089
      %3092 = vmatpush1.msra.mxu0 %v3087
      %3093 = vmatprep.subr.mxu0 0.0
      %3094 = vmatpush1.msra.mxu0 0.0
      %3095 = vmatprep.subr.mxu0 0.0
      %3096 = vmatpush1.msra.mxu0 0.0
      %3097 = vmatprep.subr.mxu0 0.0
      %3098 = vmatpush1.msra.mxu0 0.0
      %3099 = vmatprep.subr.mxu0 0.0
      %3100 = vmatpush1.msra.mxu0 0.0
      %3101 = vmatprep.subr.mxu0 0.0
      %3102 = vmatpush1.msra.mxu0 0.0
      %3103 = vmatprep.subr.mxu0 0.0
      %3104 = vmatpush1.msra.mxu0 0.0
      %3105 = vmatprep.subr.mxu0 0.0
      %3106 = vmatpush1.msra.mxu0 0.0
      %3107 = vmatprep.subr.mxu0 0.0
      %3108 = vmatpush1.msra.mxu0 0.0
      %3109 = vmatprep.subr.mxu0 0.0
      %3110 = vmatpush1.msra.mxu0 0.0
      %3111 = vmatprep.subr.mxu0 0.0
      %3112 = vmatpush1.msra.mxu0 0.0
      %3113 = vmatprep.subr.mxu0 0.0
      %3114 = vmatpush1.msra.mxu0 0.0
      %3115 = vmatprep.subr.mxu0 0.0
      %3116 = vmatpush1.msra.mxu0 0.0
      %3117 = vmatprep.subr.mxu0 0.0
      %3118 = vmatpush1.msra.mxu0 0.0
      %3119 = vmatprep.subr.mxu0 0.0
      %3120 = vmatpush1.msra.mxu0 0.0
      %3121 = vmatprep.subr.mxu0 0.0
      %3122 = vmatpush1.msra.mxu0 0.0
      %3123 = vmatprep.subr.mxu0 0.0
      %3124 = vmatpush1.msra.mxu0 0.0
      %3125 = vmatprep.subr.mxu0 0.0
      %3126 = vmatpush1.msra.mxu0 0.0
      %3127 = vmatprep.subr.mxu0 0.0
      %3128 = vmatpush1.msra.mxu0 0.0
      %3129 = vmatprep.subr.mxu0 0.0
      %3130 = vmatpush1.msra.mxu0 0.0
      %3131 = vmatprep.subr.mxu0 0.0
      %3132 = vmatpush1.msra.mxu0 0.0
      %3133 = vmatprep.subr.mxu0 0.0
      %3134 = vmatpush1.msra.mxu0 0.0
      %3135 = vmatprep.subr.mxu0 0.0
      %3136 = vmatpush1.msra.mxu0 0.0
      %3137 = vmatprep.subr.mxu0 0.0
      %3138 = vmatpush1.msra.mxu0 0.0
      %3139 = vmatprep.subr.mxu0 0.0
      %3140 = vmatpush1.msra.mxu0 0.0
      %3141 = vmatprep.subr.mxu0 0.0
      %3142 = vmatpush1.msra.mxu0 0.0
      %3143 = vmatprep.subr.mxu0 0.0
      %3144 = vmatpush1.msra.mxu0 0.0
      %3145 = vmatprep.subr.mxu0 0.0
      %3146 = vmatpush1.msra.mxu0 0.0
      %3147 = vmatprep.subr.mxu0 0.0
      %3148 = vmatpush1.msra.mxu0 0.0
      %3149 = vmatprep.subr.mxu0 0.0
      %3150 = vmatpush1.msra.mxu0 0.0
      %3151 = vmatprep.subr.mxu0 0.0
      %3152 = vmatpush1.msra.mxu0 0.0
      %3153 = vmatprep.subr.mxu0 0.0
      %3154 = vmatpush1.msra.mxu0 0.0
      %3155 = vmatprep.mubr.f32.mxu0 0.0
      %3156 = vmatmul.mubr.f32.gmra.mrb[0].mxu0 %v3085
      %v3157 = vpop.f32.mrb[0].mxu0
      %v3158 = vadd.f32 0.0, %v3157
      %v3159 = vpop.f32.mrb[0].mxu0
      %v3160 = vadd.f32 0.0, %v3159
      %3161 = vdwg.mxu0
      %v3162 = vadd.f32 %v3055, %v3158
      %v3163 = vadd.f32 %v3056, %v3160
      %v3164 = vld [vmem:[#allocation3] sm:$0x3f]
      %v3166 = vcombine.high %v3164, %v3164
      %v3168 = vunpack.c.l.s4 1983009808
      %v3169 = vunpack.c.0.s8 %v3168
      %v3170 = vlaneseq
      %v3171 = vshrl.u32 %v3170, 7
      %v3172 = vsub.s32 %v3169, %v3171
      %v3173 = vrot.slane %v3164, %v3172
      %v3175 = vunpack.c.l.s4 1983009808
      %v3176 = vunpack.c.0.s8 %v3175
      %v3177 = vlaneseq
      %v3178 = vshrl.u32 %v3177, 7
      %v3179 = vsub.s32 %v3176, %v3178
      %v3180 = vrot.slane %v3166, %v3179
      %v3181 = vcombine.high %v3173, %v3173
      %3182 = vrot.lane.b32.xlu0 %v3173, 93
      %v3183 = vpop.permute.xlu0 %3182
      %3184 = vrot.lane.b32.xlu0 %v3181, 93
      %v3185 = vpop.permute.xlu0 %3184
      %3186 = vrot.lane.b32.xlu0 %v3180, 93
      %v3187 = vpop.permute.xlu0 %3186
      %vm3188 = vcmask 760832
      %v3189 = vsel %vm3188, %v3183, %v3185
      %v3190 = vsel %vm3188, %v3185, %v3187
      %v3193 = vsel %vm863, %v3189, 0.0
      %v3194 = vsel %vm864, %v3190, 0.0
      %v3195 = vld [vmem:[%s9] sm:$0xf]
      %3197 = vrot.lane.b32.xlu0 %v3195, 102
      %v3198 = vpop.permute.xlu0 %3197
      %v3199 = vsel %vm1756, %v3198, 0
      %v3202 = vsel %vm1661, %v3193, 0
      %v3205 = vsel %vm1661, %v3194, 0
      %3207 = vmatprep.subr.mxu0 %v3205
      %3208 = vmatpush1.msra.mxu0 %v3202
      %3209 = vmatprep.subr.mxu0 0.0
      %3210 = vmatpush1.msra.mxu0 0.0
      %3211 = vmatprep.subr.mxu0 0.0
      %3212 = vmatpush1.msra.mxu0 0.0
      %3213 = vmatprep.subr.mxu0 0.0
      %3214 = vmatpush1.msra.mxu0 0.0
      %3215 = vmatprep.subr.mxu0 0.0
      %3216 = vmatpush1.msra.mxu0 0.0
      %3217 = vmatprep.subr.mxu0 0.0
      %3218 = vmatpush1.msra.mxu0 0.0
      %3219 = vmatprep.subr.mxu0 0.0
      %3220 = vmatpush1.msra.mxu0 0.0
      %3221 = vmatprep.subr.mxu0 0.0
      %3222 = vmatpush1.msra.mxu0 0.0
      %3223 = vmatprep.subr.mxu0 0.0
      %3224 = vmatpush1.msra.mxu0 0.0
      %3225 = vmatprep.subr.mxu0 0.0
      %3226 = vmatpush1.msra.mxu0 0.0
      %3227 = vmatprep.subr.mxu0 0.0
      %3228 = vmatpush1.msra.mxu0 0.0
      %3229 = vmatprep.subr.mxu0 0.0
      %3230 = vmatpush1.msra.mxu0 0.0
      %3231 = vmatprep.subr.mxu0 0.0
      %3232 = vmatpush1.msra.mxu0 0.0
      %3233 = vmatprep.subr.mxu0 0.0
      %3234 = vmatpush1.msra.mxu0 0.0
      %3235 = vmatprep.subr.mxu0 0.0
      %3236 = vmatpush1.msra.mxu0 0.0
      %3237 = vmatprep.subr.mxu0 0.0
      %3238 = vmatpush1.msra.mxu0 0.0
      %3239 = vmatprep.subr.mxu0 0.0
      %3240 = vmatpush1.msra.mxu0 0.0
      %3241 = vmatprep.subr.mxu0 0.0
      %3242 = vmatpush1.msra.mxu0 0.0
      %3243 = vmatprep.subr.mxu0 0.0
      %3244 = vmatpush1.msra.mxu0 0.0
      %3245 = vmatprep.subr.mxu0 0.0
      %3246 = vmatpush1.msra.mxu0 0.0
      %3247 = vmatprep.subr.mxu0 0.0
      %3248 = vmatpush1.msra.mxu0 0.0
      %3249 = vmatprep.subr.mxu0 0.0
      %3250 = vmatpush1.msra.mxu0 0.0
      %3251 = vmatprep.subr.mxu0 0.0
      %3252 = vmatpush1.msra.mxu0 0.0
      %3253 = vmatprep.subr.mxu0 0.0
      %3254 = vmatpush1.msra.mxu0 0.0
      %3255 = vmatprep.subr.mxu0 0.0
      %3256 = vmatpush1.msra.mxu0 0.0
      %3257 = vmatprep.subr.mxu0 0.0
      %3258 = vmatpush1.msra.mxu0 0.0
      %3259 = vmatprep.subr.mxu0 0.0
      %3260 = vmatpush1.msra.mxu0 0.0
      %3261 = vmatprep.subr.mxu0 0.0
      %3262 = vmatpush1.msra.mxu0 0.0
      %3263 = vmatprep.subr.mxu0 0.0
      %3264 = vmatpush1.msra.mxu0 0.0
      %3265 = vmatprep.subr.mxu0 0.0
      %3266 = vmatpush1.msra.mxu0 0.0
      %3267 = vmatprep.subr.mxu0 0.0
      %3268 = vmatpush1.msra.mxu0 0.0
      %3269 = vmatprep.subr.mxu0 0.0
      %3270 = vmatpush1.msra.mxu0 0.0
      %3271 = vmatprep.mubr.f32.mxu0 0.0
      %3272 = vmatmul.mubr.f32.gmra.mrb[0].mxu0 %v3199
      %v3273 = vpop.f32.mrb[0].mxu0
      %v3274 = vadd.f32 0.0, %v3273
      %v3275 = vpop.f32.mrb[0].mxu0
      %v3276 = vadd.f32 0.0, %v3275
      %3277 = vdwg.mxu0
      %v3278 = vadd.f32 %v3162, %v3274
      %v3279 = vadd.f32 %v3163, %v3276
      %v3280 = vld [vmem:[#allocation3] sm:$0x3f]
      %v3282 = vcombine.high %v3280, %v3280
      %v3284 = vunpack.c.l.s4 1983009808
      %v3285 = vunpack.c.0.s8 %v3284
      %v3286 = vlaneseq
      %v3287 = vshrl.u32 %v3286, 7
      %v3288 = vsub.s32 %v3285, %v3287
      %v3289 = vrot.slane %v3280, %v3288
      %v3291 = vunpack.c.l.s4 1983009808
      %v3292 = vunpack.c.0.s8 %v3291
      %v3293 = vlaneseq
      %v3294 = vshrl.u32 %v3293, 7
      %v3295 = vsub.s32 %v3292, %v3294
      %v3296 = vrot.slane %v3282, %v3295
      %v3297 = vcombine.high %v3289, %v3289
      %3298 = vrot.lane.b32.xlu0 %v3289, 92
      %v3299 = vpop.permute.xlu0 %3298
      %3300 = vrot.lane.b32.xlu0 %v3297, 92
      %v3301 = vpop.permute.xlu0 %3300
      %3302 = vrot.lane.b32.xlu0 %v3296, 92
      %v3303 = vpop.permute.xlu0 %3302
      %vm3304 = vcmask 752640
      %v3305 = vsel %vm3304, %v3299, %v3301
      %v3306 = vsel %vm3304, %v3301, %v3303
      %v3309 = vsel %vm2141, %v3305, 0.0
      %v3310 = vsel %vm2142, %v3306, 0.0
      %v3311 = vld [vmem:[%s9] sm:$0xf]
      %3313 = vrot.lane.b32.xlu0 %v3311, 100
      %v3314 = vpop.permute.xlu0 %3313
      %v3315 = vsel %vm1756, %v3314, 0
      %v3318 = vsel %vm1661, %v3309, 0
      %v3321 = vsel %vm1661, %v3310, 0
      %3323 = vmatprep.subr.mxu0 %v3321
      %3324 = vmatpush1.msra.mxu0 %v3318
      %3325 = vmatprep.subr.mxu0 0.0
      %3326 = vmatpush1.msra.mxu0 0.0
      %3327 = vmatprep.subr.mxu0 0.0
      %3328 = vmatpush1.msra.mxu0 0.0
      %3329 = vmatprep.subr.mxu0 0.0
      %3330 = vmatpush1.msra.mxu0 0.0
      %3331 = vmatprep.subr.mxu0 0.0
      %3332 = vmatpush1.msra.mxu0 0.0
      %3333 = vmatprep.subr.mxu0 0.0
      %3334 = vmatpush1.msra.mxu0 0.0
      %3335 = vmatprep.subr.mxu0 0.0
      %3336 = vmatpush1.msra.mxu0 0.0
      %3337 = vmatprep.subr.mxu0 0.0
      %3338 = vmatpush1.msra.mxu0 0.0
      %3339 = vmatprep.subr.mxu0 0.0
      %3340 = vmatpush1.msra.mxu0 0.0
      %3341 = vmatprep.subr.mxu0 0.0
      %3342 = vmatpush1.msra.mxu0 0.0
      %3343 = vmatprep.subr.mxu0 0.0
      %3344 = vmatpush1.msra.mxu0 0.0
      %3345 = vmatprep.subr.mxu0 0.0
      %3346 = vmatpush1.msra.mxu0 0.0
      %3347 = vmatprep.subr.mxu0 0.0
      %3348 = vmatpush1.msra.mxu0 0.0
      %3349 = vmatprep.subr.mxu0 0.0
      %3350 = vmatpush1.msra.mxu0 0.0
      %3351 = vmatprep.subr.mxu0 0.0
      %3352 = vmatpush1.msra.mxu0 0.0
      %3353 = vmatprep.subr.mxu0 0.0
      %3354 = vmatpush1.msra.mxu0 0.0
      %3355 = vmatprep.subr.mxu0 0.0
      %3356 = vmatpush1.msra.mxu0 0.0
      %3357 = vmatprep.subr.mxu0 0.0
      %3358 = vmatpush1.msra.mxu0 0.0
      %3359 = vmatprep.subr.mxu0 0.0
      %3360 = vmatpush1.msra.mxu0 0.0
      %3361 = vmatprep.subr.mxu0 0.0
      %3362 = vmatpush1.msra.mxu0 0.0
      %3363 = vmatprep.subr.mxu0 0.0
      %3364 = vmatpush1.msra.mxu0 0.0
      %3365 = vmatprep.subr.mxu0 0.0
      %3366 = vmatpush1.msra.mxu0 0.0
      %3367 = vmatprep.subr.mxu0 0.0
      %3368 = vmatpush1.msra.mxu0 0.0
      %3369 = vmatprep.subr.mxu0 0.0
      %3370 = vmatpush1.msra.mxu0 0.0
      %3371 = vmatprep.subr.mxu0 0.0
      %3372 = vmatpush1.msra.mxu0 0.0
      %3373 = vmatprep.subr.mxu0 0.0
      %3374 = vmatpush1.msra.mxu0 0.0
      %3375 = vmatprep.subr.mxu0 0.0
      %3376 = vmatpush1.msra.mxu0 0.0
      %3377 = vmatprep.subr.mxu0 0.0
      %3378 = vmatpush1.msra.mxu0 0.0
      %3379 = vmatprep.subr.mxu0 0.0
      %3380 = vmatpush1.msra.mxu0 0.0
      %3381 = vmatprep.subr.mxu0 0.0
      %3382 = vmatpush1.msra.mxu0 0.0
      %3383 = vmatprep.subr.mxu0 0.0
      %3384 = vmatpush1.msra.mxu0 0.0
      %3385 = vmatprep.subr.mxu0 0.0
      %3386 = vmatpush1.msra.mxu0 0.0
      %3387 = vmatprep.mubr.f32.mxu0 0.0
      %3388 = vmatmul.mubr.f32.gmra.mrb[0].mxu0 %v3315
      %v3389 = vpop.f32.mrb[0].mxu0
      %v3390 = vadd.f32 0.0, %v3389
      %v3391 = vpop.f32.mrb[0].mxu0
      %v3392 = vadd.f32 0.0, %v3391
      %3393 = vdwg.mxu0
      %v3394 = vadd.f32 %v3278, %v3390
      %v3395 = vadd.f32 %v3279, %v3392
      %v3396 = vld [vmem:[#allocation3] sm:$0x3f]
      %v3398 = vcombine.high %v3396, %v3396
      %v3400 = vunpack.c.l.s4 1983009808
      %v3401 = vunpack.c.0.s8 %v3400
      %v3402 = vlaneseq
      %v3403 = vshrl.u32 %v3402, 7
      %v3404 = vsub.s32 %v3401, %v3403
      %v3405 = vrot.slane %v3396, %v3404
      %v3407 = vunpack.c.l.s4 1983009808
      %v3408 = vunpack.c.0.s8 %v3407
      %v3409 = vlaneseq
      %v3410 = vshrl.u32 %v3409, 7
      %v3411 = vsub.s32 %v3408, %v3410
      %v3412 = vrot.slane %v3398, %v3411
      %v3413 = vcombine.high %v3405, %v3405
      %3414 = vrot.lane.b32.xlu0 %v3405, 80
      %v3415 = vpop.permute.xlu0 %3414
      %3416 = vrot.lane.b32.xlu0 %v3413, 80
      %v3417 = vpop.permute.xlu0 %3416
      %3418 = vrot.lane.b32.xlu0 %v3412, 80
      %v3419 = vpop.permute.xlu0 %3418
      %vm3420 = vcmask 654336
      %v3421 = vsel %vm3420, %v3415, %v3417
      %v3422 = vsel %vm3420, %v3417, %v3419
      %v3425 = vsel %vm1707, %v3421, 0.0
      %v3426 = vsel %vm1708, %v3422, 0.0
      %v3427 = vld [vmem:[%s9] sm:$0xf]
      %3429 = vrot.lane.b32.xlu0 %v3427, 98
      %v3430 = vpop.permute.xlu0 %3429
      %v3431 = vsel %vm1756, %v3430, 0
      %v3434 = vsel %vm1661, %v3425, 0
      %v3437 = vsel %vm1661, %v3426, 0
      %3439 = vmatprep.subr.mxu0 %v3437
      %3440 = vmatpush1.msra.mxu0 %v3434
      %3441 = vmatprep.subr.mxu0 0.0
      %3442 = vmatpush1.msra.mxu0 0.0
      %3443 = vmatprep.subr.mxu0 0.0
      %3444 = vmatpush1.msra.mxu0 0.0
      %3445 = vmatprep.subr.mxu0 0.0
      %3446 = vmatpush1.msra.mxu0 0.0
      %3447 = vmatprep.subr.mxu0 0.0
      %3448 = vmatpush1.msra.mxu0 0.0
      %3449 = vmatprep.subr.mxu0 0.0
      %3450 = vmatpush1.msra.mxu0 0.0
      %3451 = vmatprep.subr.mxu0 0.0
      %3452 = vmatpush1.msra.mxu0 0.0
      %3453 = vmatprep.subr.mxu0 0.0
      %3454 = vmatpush1.msra.mxu0 0.0
      %3455 = vmatprep.subr.mxu0 0.0
      %3456 = vmatpush1.msra.mxu0 0.0
      %3457 = vmatprep.subr.mxu0 0.0
      %3458 = vmatpush1.msra.mxu0 0.0
      %3459 = vmatprep.subr.mxu0 0.0
      %3460 = vmatpush1.msra.mxu0 0.0
      %3461 = vmatprep.subr.mxu0 0.0
      %3462 = vmatpush1.msra.mxu0 0.0
      %3463 = vmatprep.subr.mxu0 0.0
      %3464 = vmatpush1.msra.mxu0 0.0
      %3465 = vmatprep.subr.mxu0 0.0
      %3466 = vmatpush1.msra.mxu0 0.0
      %3467 = vmatprep.subr.mxu0 0.0
      %3468 = vmatpush1.msra.mxu0 0.0
      %3469 = vmatprep.subr.mxu0 0.0
      %3470 = vmatpush1.msra.mxu0 0.0
      %3471 = vmatprep.subr.mxu0 0.0
      %3472 = vmatpush1.msra.mxu0 0.0
      %3473 = vmatprep.subr.mxu0 0.0
      %3474 = vmatpush1.msra.mxu0 0.0
      %3475 = vmatprep.subr.mxu0 0.0
      %3476 = vmatpush1.msra.mxu0 0.0
      %3477 = vmatprep.subr.mxu0 0.0
      %3478 = vmatpush1.msra.mxu0 0.0
      %3479 = vmatprep.subr.mxu0 0.0
      %3480 = vmatpush1.msra.mxu0 0.0
      %3481 = vmatprep.subr.mxu0 0.0
      %3482 = vmatpush1.msra.mxu0 0.0
      %3483 = vmatprep.subr.mxu0 0.0
      %3484 = vmatpush1.msra.mxu0 0.0
      %3485 = vmatprep.subr.mxu0 0.0
      %3486 = vmatpush1.msra.mxu0 0.0
      %3487 = vmatprep.subr.mxu0 0.0
      %3488 = vmatpush1.msra.mxu0 0.0
      %3489 = vmatprep.subr.mxu0 0.0
      %3490 = vmatpush1.msra.mxu0 0.0
      %3491 = vmatprep.subr.mxu0 0.0
      %3492 = vmatpush1.msra.mxu0 0.0
      %3493 = vmatprep.subr.mxu0 0.0
      %3494 = vmatpush1.msra.mxu0 0.0
      %3495 = vmatprep.subr.mxu0 0.0
      %3496 = vmatpush1.msra.mxu0 0.0
      %3497 = vmatprep.subr.mxu0 0.0
      %3498 = vmatpush1.msra.mxu0 0.0
      %3499 = vmatprep.subr.mxu0 0.0
      %3500 = vmatpush1.msra.mxu0 0.0
      %3501 = vmatprep.subr.mxu0 0.0
      %3502 = vmatpush1.msra.mxu0 0.0
      %3503 = vmatprep.mubr.f32.mxu0 0.0
      %3504 = vmatmul.mubr.f32.gmra.mrb[0].mxu0 %v3431
      %v3505 = vpop.f32.mrb[0].mxu0
      %v3506 = vadd.f32 0.0, %v3505
      %v3507 = vpop.f32.mrb[0].mxu0
      %v3508 = vadd.f32 0.0, %v3507
      %3509 = vdwg.mxu0
      %v3510 = vadd.f32 %v3394, %v3506
      %v3511 = vadd.f32 %v3395, %v3508
      %v3512 = vld [vmem:[#allocation3] sm:$0x3f]
      %v3514 = vcombine.high %v3512, %v3512
      %v3516 = vunpack.c.l.s4 1983009808
      %v3517 = vunpack.c.0.s8 %v3516
      %v3518 = vlaneseq
      %v3519 = vshrl.u32 %v3518, 7
      %v3520 = vsub.s32 %v3517, %v3519
      %v3521 = vrot.slane %v3512, %v3520
      %v3523 = vunpack.c.l.s4 1983009808
      %v3524 = vunpack.c.0.s8 %v3523
      %v3525 = vlaneseq
      %v3526 = vshrl.u32 %v3525, 7
      %v3527 = vsub.s32 %v3524, %v3526
      %v3528 = vrot.slane %v3514, %v3527
      %v3529 = vcombine.high %v3521, %v3521
      %3530 = vrot.lane.b32.xlu0 %v3521, 79
      %v3531 = vpop.permute.xlu0 %3530
      %3532 = vrot.lane.b32.xlu0 %v3529, 79
      %v3533 = vpop.permute.xlu0 %3532
      %3534 = vrot.lane.b32.xlu0 %v3528, 79
      %v3535 = vpop.permute.xlu0 %3534
      %vm3536 = vcmask 646144
      %v3537 = vsel %vm3536, %v3531, %v3533
      %v3538 = vsel %vm3536, %v3533, %v3535
      %v3541 = vsel %vm681, %v3537, 0.0
      %v3542 = vsel %vm682, %v3538, 0.0
      %v3543 = vld [vmem:[%s9] sm:$0xf]
      %3545 = vrot.lane.b32.xlu0 %v3543, 96
      %v3546 = vpop.permute.xlu0 %3545
      %v3547 = vsel %vm1756, %v3546, 0
      %v3550 = vsel %vm1661, %v3541, 0
      %v3553 = vsel %vm1661, %v3542, 0
      %3555 = vmatprep.subr.mxu0 %v3553
      %3556 = vmatpush1.msra.mxu0 %v3550
      %3557 = vmatprep.subr.mxu0 0.0
      %3558 = vmatpush1.msra.mxu0 0.0
      %3559 = vmatprep.subr.mxu0 0.0
      %3560 = vmatpush1.msra.mxu0 0.0
      %3561 = vmatprep.subr.mxu0 0.0
      %3562 = vmatpush1.msra.mxu0 0.0
      %3563 = vmatprep.subr.mxu0 0.0
      %3564 = vmatpush1.msra.mxu0 0.0
      %3565 = vmatprep.subr.mxu0 0.0
      %3566 = vmatpush1.msra.mxu0 0.0
      %3567 = vmatprep.subr.mxu0 0.0
      %3568 = vmatpush1.msra.mxu0 0.0
      %3569 = vmatprep.subr.mxu0 0.0
      %3570 = vmatpush1.msra.mxu0 0.0
      %3571 = vmatprep.subr.mxu0 0.0
      %3572 = vmatpush1.msra.mxu0 0.0
      %3573 = vmatprep.subr.mxu0 0.0
      %3574 = vmatpush1.msra.mxu0 0.0
      %3575 = vmatprep.subr.mxu0 0.0
      %3576 = vmatpush1.msra.mxu0 0.0
      %3577 = vmatprep.subr.mxu0 0.0
      %3578 = vmatpush1.msra.mxu0 0.0
      %3579 = vmatprep.subr.mxu0 0.0
      %3580 = vmatpush1.msra.mxu0 0.0
      %3581 = vmatprep.subr.mxu0 0.0
      %3582 = vmatpush1.msra.mxu0 0.0
      %3583 = vmatprep.subr.mxu0 0.0
      %3584 = vmatpush1.msra.mxu0 0.0
      %3585 = vmatprep.subr.mxu0 0.0
      %3586 = vmatpush1.msra.mxu0 0.0
      %3587 = vmatprep.subr.mxu0 0.0
      %3588 = vmatpush1.msra.mxu0 0.0
      %3589 = vmatprep.subr.mxu0 0.0
      %3590 = vmatpush1.msra.mxu0 0.0
      %3591 = vmatprep.subr.mxu0 0.0
      %3592 = vmatpush1.msra.mxu0 0.0
      %3593 = vmatprep.subr.mxu0 0.0
      %3594 = vmatpush1.msra.mxu0 0.0
      %3595 = vmatprep.subr.mxu0 0.0
      %3596 = vmatpush1.msra.mxu0 0.0
      %3597 = vmatprep.subr.mxu0 0.0
      %3598 = vmatpush1.msra.mxu0 0.0
      %3599 = vmatprep.subr.mxu0 0.0
      %3600 = vmatpush1.msra.mxu0 0.0
      %3601 = vmatprep.subr.mxu0 0.0
      %3602 = vmatpush1.msra.mxu0 0.0
      %3603 = vmatprep.subr.mxu0 0.0
      %3604 = vmatpush1.msra.mxu0 0.0
      %3605 = vmatprep.subr.mxu0 0.0
      %3606 = vmatpush1.msra.mxu0 0.0
      %3607 = vmatprep.subr.mxu0 0.0
      %3608 = vmatpush1.msra.mxu0 0.0
      %3609 = vmatprep.subr.mxu0 0.0
      %3610 = vmatpush1.msra.mxu0 0.0
      %3611 = vmatprep.subr.mxu0 0.0
      %3612 = vmatpush1.msra.mxu0 0.0
      %3613 = vmatprep.subr.mxu0 0.0
      %3614 = vmatpush1.msra.mxu0 0.0
      %3615 = vmatprep.subr.mxu0 0.0
      %3616 = vmatpush1.msra.mxu0 0.0
      %3617 = vmatprep.subr.mxu0 0.0
      %3618 = vmatpush1.msra.mxu0 0.0
      %3619 = vmatprep.mubr.f32.mxu0 0.0
      %3620 = vmatmul.mubr.f32.gmra.mrb[0].mxu0 %v3547
      %v3621 = vpop.f32.mrb[0].mxu0
      %v3622 = vadd.f32 0.0, %v3621
      %v3623 = vpop.f32.mrb[0].mxu0
      %v3624 = vadd.f32 0.0, %v3623
      %3625 = vdwg.mxu0
      %v3626 = vadd.f32 %v3510, %v3622
      %v3627 = vadd.f32 %v3511, %v3624
      %v3628 = vld [vmem:[#allocation3] sm:$0x3f]
      %3629 = vrot.lane.b32.xlu0 %v3543, 94
      %v3630 = vpop.permute.xlu0 %3629
      %v3632 = vcombine.high %v3628, %v3628
      %v3634 = vunpack.c.l.s4 1983009808
      %v3635 = vunpack.c.0.s8 %v3634
      %v3636 = vlaneseq
      %v3637 = vshrl.u32 %v3636, 7
      %v3638 = vsub.s32 %v3635, %v3637
      %v3639 = vrot.slane %v3628, %v3638
      %v3641 = vunpack.c.l.s4 1983009808
      %v3642 = vunpack.c.0.s8 %v3641
      %v3643 = vlaneseq
      %v3644 = vshrl.u32 %v3643, 7
      %v3645 = vsub.s32 %v3642, %v3644
      %v3646 = vrot.slane %v3632, %v3645
      %v3647 = vcombine.high %v3639, %v3639
      %3648 = vrot.lane.b32.xlu0 %v3639, 78
      %v3649 = vpop.permute.xlu0 %3648
      %3650 = vrot.lane.b32.xlu0 %v3647, 78
      %v3651 = vpop.permute.xlu0 %3650
      %3652 = vrot.lane.b32.xlu0 %v3646, 78
      %v3653 = vpop.permute.xlu0 %3652
      %vm3654 = vcmask 637952
      %v3655 = vsel %vm3654, %v3649, %v3651
      %v3656 = vsel %vm3654, %v3651, %v3653
      %v3657 = vsel %vm1756, %v3630, 0
      %v3659 = vsel %vm1661, %v3655, 0
      %v3661 = vsel %vm1661, %v3656, 0
      %3663 = vmatprep.subr.mxu0 %v3661
      %3664 = vmatpush1.msra.mxu0 %v3659
      %3665 = vmatprep.subr.mxu0 0.0
      %3666 = vmatpush1.msra.mxu0 0.0
      %3667 = vmatprep.subr.mxu0 0.0
      %3668 = vmatpush1.msra.mxu0 0.0
      %3669 = vmatprep.subr.mxu0 0.0
      %3670 = vmatpush1.msra.mxu0 0.0
      %3671 = vmatprep.subr.mxu0 0.0
      %3672 = vmatpush1.msra.mxu0 0.0
      %3673 = vmatprep.subr.mxu0 0.0
      %3674 = vmatpush1.msra.mxu0 0.0
      %3675 = vmatprep.subr.mxu0 0.0
      %3676 = vmatpush1.msra.mxu0 0.0
      %3677 = vmatprep.subr.mxu0 0.0
      %3678 = vmatpush1.msra.mxu0 0.0
      %3679 = vmatprep.subr.mxu0 0.0
      %3680 = vmatpush1.msra.mxu0 0.0
      %3681 = vmatprep.subr.mxu0 0.0
      %3682 = vmatpush1.msra.mxu0 0.0
      %3683 = vmatprep.subr.mxu0 0.0
      %3684 = vmatpush1.msra.mxu0 0.0
      %3685 = vmatprep.subr.mxu0 0.0
      %3686 = vmatpush1.msra.mxu0 0.0
      %3687 = vmatprep.subr.mxu0 0.0
      %3688 = vmatpush1.msra.mxu0 0.0
      %3689 = vmatprep.subr.mxu0 0.0
      %3690 = vmatpush1.msra.mxu0 0.0
      %3691 = vmatprep.subr.mxu0 0.0
      %3692 = vmatpush1.msra.mxu0 0.0
      %3693 = vmatprep.subr.mxu0 0.0
      %3694 = vmatpush1.msra.mxu0 0.0
      %3695 = vmatprep.subr.mxu0 0.0
      %3696 = vmatpush1.msra.mxu0 0.0
      %3697 = vmatprep.subr.mxu0 0.0
      %3698 = vmatpush1.msra.mxu0 0.0
      %3699 = vmatprep.subr.mxu0 0.0
      %3700 = vmatpush1.msra.mxu0 0.0
      %3701 = vmatprep.subr.mxu0 0.0
      %3702 = vmatpush1.msra.mxu0 0.0
      %3703 = vmatprep.subr.mxu0 0.0
      %3704 = vmatpush1.msra.mxu0 0.0
      %3705 = vmatprep.subr.mxu0 0.0
      %3706 = vmatpush1.msra.mxu0 0.0
      %3707 = vmatprep.subr.mxu0 0.0
      %3708 = vmatpush1.msra.mxu0 0.0
      %3709 = vmatprep.subr.mxu0 0.0
      %3710 = vmatpush1.msra.mxu0 0.0
      %3711 = vmatprep.subr.mxu0 0.0
      %3712 = vmatpush1.msra.mxu0 0.0
      %3713 = vmatprep.subr.mxu0 0.0
      %3714 = vmatpush1.msra.mxu0 0.0
      %3715 = vmatprep.subr.mxu0 0.0
      %3716 = vmatpush1.msra.mxu0 0.0
      %3717 = vmatprep.subr.mxu0 0.0
      %3718 = vmatpush1.msra.mxu0 0.0
      %3719 = vmatprep.subr.mxu0 0.0
      %3720 = vmatpush1.msra.mxu0 0.0
      %3721 = vmatprep.subr.mxu0 0.0
      %3722 = vmatpush1.msra.mxu0 0.0
      %3723 = vmatprep.subr.mxu0 0.0
      %3724 = vmatpush1.msra.mxu0 0.0
      %3725 = vmatprep.subr.mxu0 0.0
      %3726 = vmatpush1.msra.mxu0 0.0
      %3727 = vmatprep.mubr.f32.mxu0 0.0
      %3728 = vmatmul.mubr.f32.gmra.mrb[0].mxu0 %v3657
      %v3729 = vpop.f32.mrb[0].mxu0
      %v3730 = vadd.f32 0.0, %v3729
      %v3731 = vpop.f32.mrb[0].mxu0
      %v3732 = vadd.f32 0.0, %v3731
      %3733 = vdwg.mxu0
      %v3734 = vadd.f32 %v3626, %v3730
      %v3735 = vadd.f32 %v3627, %v3732
      %v3736 = vld [vmem:[#allocation3] sm:$0x3f]
      %v3738 = vcombine.high %v3736, %v3736
      %v3740 = vunpack.c.l.s4 1983009808
      %v3741 = vunpack.c.0.s8 %v3740
      %v3742 = vlaneseq
      %v3743 = vshrl.u32 %v3742, 7
      %v3744 = vsub.s32 %v3741, %v3743
      %v3745 = vrot.slane %v3736, %v3744
      %v3747 = vunpack.c.l.s4 1983009808
      %v3748 = vunpack.c.0.s8 %v3747
      %v3749 = vlaneseq
      %v3750 = vshrl.u32 %v3749, 7
      %v3751 = vsub.s32 %v3748, %v3750
      %v3752 = vrot.slane %v3738, %v3751
      %v3753 = vcombine.high %v3745, %v3745
      %3754 = vrot.lane.b32.xlu0 %v3745, 77
      %v3755 = vpop.permute.xlu0 %3754
      %3756 = vrot.lane.b32.xlu0 %v3753, 77
      %v3757 = vpop.permute.xlu0 %3756
      %3758 = vrot.lane.b32.xlu0 %v3752, 77
      %v3759 = vpop.permute.xlu0 %3758
      %vm3760 = vcmask 629760
      %v3761 = vsel %vm3760, %v3755, %v3757
      %v3762 = vsel %vm3760, %v3757, %v3759
      %v3765 = vsel %vm863, %v3761, 0.0
      %v3766 = vsel %vm864, %v3762, 0.0
      %v3767 = vld [vmem:[%s9] sm:$0xf]
      %3769 = vrot.lane.b32.xlu0 %v3767, 92
      %v3770 = vpop.permute.xlu0 %3769
      %v3771 = vsel %vm1756, %v3770, 0
      %v3774 = vsel %vm1661, %v3765, 0
      %v3777 = vsel %vm1661, %v3766, 0
      %3779 = vmatprep.subr.mxu0 %v3777
      %3780 = vmatpush1.msra.mxu0 %v3774
      %3781 = vmatprep.subr.mxu0 0.0
      %3782 = vmatpush1.msra.mxu0 0.0
      %3783 = vmatprep.subr.mxu0 0.0
      %3784 = vmatpush1.msra.mxu0 0.0
      %3785 = vmatprep.subr.mxu0 0.0
      %3786 = vmatpush1.msra.mxu0 0.0
      %3787 = vmatprep.subr.mxu0 0.0
      %3788 = vmatpush1.msra.mxu0 0.0
      %3789 = vmatprep.subr.mxu0 0.0
      %3790 = vmatpush1.msra.mxu0 0.0
      %3791 = vmatprep.subr.mxu0 0.0
      %3792 = vmatpush1.msra.mxu0 0.0
      %3793 = vmatprep.subr.mxu0 0.0
      %3794 = vmatpush1.msra.mxu0 0.0
      %3795 = vmatprep.subr.mxu0 0.0
      %3796 = vmatpush1.msra.mxu0 0.0
      %3797 = vmatprep.subr.mxu0 0.0
      %3798 = vmatpush1.msra.mxu0 0.0
      %3799 = vmatprep.subr.mxu0 0.0
      %3800 = vmatpush1.msra.mxu0 0.0
      %3801 = vmatprep.subr.mxu0 0.0
      %3802 = vmatpush1.msra.mxu0 0.0
      %3803 = vmatprep.subr.mxu0 0.0
      %3804 = vmatpush1.msra.mxu0 0.0
      %3805 = vmatprep.subr.mxu0 0.0
      %3806 = vmatpush1.msra.mxu0 0.0
      %3807 = vmatprep.subr.mxu0 0.0
      %3808 = vmatpush1.msra.mxu0 0.0
      %3809 = vmatprep.subr.mxu0 0.0
      %3810 = vmatpush1.msra.mxu0 0.0
      %3811 = vmatprep.subr.mxu0 0.0
      %3812 = vmatpush1.msra.mxu0 0.0
      %3813 = vmatprep.subr.mxu0 0.0
      %3814 = vmatpush1.msra.mxu0 0.0
      %3815 = vmatprep.subr.mxu0 0.0
      %3816 = vmatpush1.msra.mxu0 0.0
      %3817 = vmatprep.subr.mxu0 0.0
      %3818 = vmatpush1.msra.mxu0 0.0
      %3819 = vmatprep.subr.mxu0 0.0
      %3820 = vmatpush1.msra.mxu0 0.0
      %3821 = vmatprep.subr.mxu0 0.0
      %3822 = vmatpush1.msra.mxu0 0.0
      %3823 = vmatprep.subr.mxu0 0.0
      %3824 = vmatpush1.msra.mxu0 0.0
      %3825 = vmatprep.subr.mxu0 0.0
      %3826 = vmatpush1.msra.mxu0 0.0
      %3827 = vmatprep.subr.mxu0 0.0
      %3828 = vmatpush1.msra.mxu0 0.0
      %3829 = vmatprep.subr.mxu0 0.0
      %3830 = vmatpush1.msra.mxu0 0.0
      %3831 = vmatprep.subr.mxu0 0.0
      %3832 = vmatpush1.msra.mxu0 0.0
      %3833 = vmatprep.subr.mxu0 0.0
      %3834 = vmatpush1.msra.mxu0 0.0
      %3835 = vmatprep.subr.mxu0 0.0
      %3836 = vmatpush1.msra.mxu0 0.0
      %3837 = vmatprep.subr.mxu0 0.0
      %3838 = vmatpush1.msra.mxu0 0.0
      %3839 = vmatprep.subr.mxu0 0.0
      %3840 = vmatpush1.msra.mxu0 0.0
      %3841 = vmatprep.subr.mxu0 0.0
      %3842 = vmatpush1.msra.mxu0 0.0
      %3843 = vmatprep.mubr.f32.mxu0 0.0
      %3844 = vmatmul.mubr.f32.gmra.mrb[0].mxu0 %v3771
      %v3845 = vpop.f32.mrb[0].mxu0
      %v3846 = vadd.f32 0.0, %v3845
      %v3847 = vpop.f32.mrb[0].mxu0
      %v3848 = vadd.f32 0.0, %v3847
      %3849 = vdwg.mxu0
      %v3850 = vadd.f32 %v3734, %v3846
      %v3851 = vadd.f32 %v3735, %v3848
      %v3852 = vld [vmem:[#allocation3] sm:$0x3f]
      %v3854 = vcombine.high %v3852, %v3852
      %v3856 = vunpack.c.l.s4 1983009808
      %v3857 = vunpack.c.0.s8 %v3856
      %v3858 = vlaneseq
      %v3859 = vshrl.u32 %v3858, 7
      %v3860 = vsub.s32 %v3857, %v3859
      %v3861 = vrot.slane %v3852, %v3860
      %v3863 = vunpack.c.l.s4 1983009808
      %v3864 = vunpack.c.0.s8 %v3863
      %v3865 = vlaneseq
      %v3866 = vshrl.u32 %v3865, 7
      %v3867 = vsub.s32 %v3864, %v3866
      %v3868 = vrot.slane %v3854, %v3867
      %v3869 = vcombine.high %v3861, %v3861
      %3870 = vrot.lane.b32.xlu0 %v3861, 76
      %v3871 = vpop.permute.xlu0 %3870
      %3872 = vrot.lane.b32.xlu0 %v3869, 76
      %v3873 = vpop.permute.xlu0 %3872
      %3874 = vrot.lane.b32.xlu0 %v3868, 76
      %v3875 = vpop.permute.xlu0 %3874
      %vm3876 = vcmask 621568
      %v3877 = vsel %vm3876, %v3871, %v3873
      %v3878 = vsel %vm3876, %v3873, %v3875
      %v3881 = vsel %vm2141, %v3877, 0.0
      %v3882 = vsel %vm2142, %v3878, 0.0
      %v3883 = vld [vmem:[%s9] sm:$0xf]
      %3885 = vrot.lane.b32.xlu0 %v3883, 90
      %v3886 = vpop.permute.xlu0 %3885
      %v3887 = vsel %vm1756, %v3886, 0
      %v3890 = vsel %vm1661, %v3881, 0
      %v3893 = vsel %vm1661, %v3882, 0
      %3895 = vmatprep.subr.mxu0 %v3893
      %3896 = vmatpush1.msra.mxu0 %v3890
      %3897 = vmatprep.subr.mxu0 0.0
      %3898 = vmatpush1.msra.mxu0 0.0
      %3899 = vmatprep.subr.mxu0 0.0
      %3900 = vmatpush1.msra.mxu0 0.0
      %3901 = vmatprep.subr.mxu0 0.0
      %3902 = vmatpush1.msra.mxu0 0.0
      %3903 = vmatprep.subr.mxu0 0.0
      %3904 = vmatpush1.msra.mxu0 0.0
      %3905 = vmatprep.subr.mxu0 0.0
      %3906 = vmatpush1.msra.mxu0 0.0
      %3907 = vmatprep.subr.mxu0 0.0
      %3908 = vmatpush1.msra.mxu0 0.0
      %3909 = vmatprep.subr.mxu0 0.0
      %3910 = vmatpush1.msra.mxu0 0.0
      %3911 = vmatprep.subr.mxu0 0.0
      %3912 = vmatpush1.msra.mxu0 0.0
      %3913 = vmatprep.subr.mxu0 0.0
      %3914 = vmatpush1.msra.mxu0 0.0
      %3915 = vmatprep.subr.mxu0 0.0
      %3916 = vmatpush1.msra.mxu0 0.0
      %3917 = vmatprep.subr.mxu0 0.0
      %3918 = vmatpush1.msra.mxu0 0.0
      %3919 = vmatprep.subr.mxu0 0.0
      %3920 = vmatpush1.msra.mxu0 0.0
      %3921 = vmatprep.subr.mxu0 0.0
      %3922 = vmatpush1.msra.mxu0 0.0
      %3923 = vmatprep.subr.mxu0 0.0
      %3924 = vmatpush1.msra.mxu0 0.0
      %3925 = vmatprep.subr.mxu0 0.0
      %3926 = vmatpush1.msra.mxu0 0.0
      %3927 = vmatprep.subr.mxu0 0.0
      %3928 = vmatpush1.msra.mxu0 0.0
      %3929 = vmatprep.subr.mxu0 0.0
      %3930 = vmatpush1.msra.mxu0 0.0
      %3931 = vmatprep.subr.mxu0 0.0
      %3932 = vmatpush1.msra.mxu0 0.0
      %3933 = vmatprep.subr.mxu0 0.0
      %3934 = vmatpush1.msra.mxu0 0.0
      %3935 = vmatprep.subr.mxu0 0.0
      %3936 = vmatpush1.msra.mxu0 0.0
      %3937 = vmatprep.subr.mxu0 0.0
      %3938 = vmatpush1.msra.mxu0 0.0
      %3939 = vmatprep.subr.mxu0 0.0
      %3940 = vmatpush1.msra.mxu0 0.0
      %3941 = vmatprep.subr.mxu0 0.0
      %3942 = vmatpush1.msra.mxu0 0.0
      %3943 = vmatprep.subr.mxu0 0.0
      %3944 = vmatpush1.msra.mxu0 0.0
      %3945 = vmatprep.subr.mxu0 0.0
      %3946 = vmatpush1.msra.mxu0 0.0
      %3947 = vmatprep.subr.mxu0 0.0
      %3948 = vmatpush1.msra.mxu0 0.0
      %3949 = vmatprep.subr.mxu0 0.0
      %3950 = vmatpush1.msra.mxu0 0.0
      %3951 = vmatprep.subr.mxu0 0.0
      %3952 = vmatpush1.msra.mxu0 0.0
      %3953 = vmatprep.subr.mxu0 0.0
      %3954 = vmatpush1.msra.mxu0 0.0
      %3955 = vmatprep.subr.mxu0 0.0
      %3956 = vmatpush1.msra.mxu0 0.0
      %3957 = vmatprep.subr.mxu0 0.0
      %3958 = vmatpush1.msra.mxu0 0.0
      %3959 = vmatprep.mubr.f32.mxu0 0.0
      %3960 = vmatmul.mubr.f32.gmra.mrb[0].mxu0 %v3887
      %v3961 = vpop.f32.mrb[0].mxu0
      %v3962 = vadd.f32 0.0, %v3961
      %v3963 = vpop.f32.mrb[0].mxu0
      %v3964 = vadd.f32 0.0, %v3963
      %3965 = vdwg.mxu0
      %v3966 = vadd.f32 %v3850, %v3962
      %v3967 = vadd.f32 %v3851, %v3964
      %v3968 = vld [vmem:[#allocation3] sm:$0x3f]
      %v3970 = vcombine.high %v3968, %v3968
      %v3972 = vunpack.c.l.s4 1983009808
      %v3973 = vunpack.c.0.s8 %v3972
      %v3974 = vlaneseq
      %v3975 = vshrl.u32 %v3974, 7
      %v3976 = vsub.s32 %v3973, %v3975
      %v3977 = vrot.slane %v3968, %v3976
      %v3979 = vunpack.c.l.s4 1983009808
      %v3980 = vunpack.c.0.s8 %v3979
      %v3981 = vlaneseq
      %v3982 = vshrl.u32 %v3981, 7
      %v3983 = vsub.s32 %v3980, %v3982
      %v3984 = vrot.slane %v3970, %v3983
      %v3985 = vcombine.high %v3977, %v3977
      %3986 = vrot.lane.b32.xlu0 %v3977, 64
      %v3987 = vpop.permute.xlu0 %3986
      %3988 = vrot.lane.b32.xlu0 %v3985, 64
      %v3989 = vpop.permute.xlu0 %3988
      %3990 = vrot.lane.b32.xlu0 %v3984, 64
      %v3991 = vpop.permute.xlu0 %3990
      %vm3992 = vcmask 523264
      %v3993 = vsel %vm3992, %v3987, %v3989
      %v3994 = vsel %vm3992, %v3989, %v3991
      %v3997 = vsel %vm1707, %v3993, 0.0
      %v3998 = vsel %vm1708, %v3994, 0.0
      %v3999 = vld [vmem:[%s9] sm:$0xf]
      %4001 = vrot.lane.b32.xlu0 %v3999, 88
      %v4002 = vpop.permute.xlu0 %4001
      %v4003 = vsel %vm1756, %v4002, 0
      %v4006 = vsel %vm1661, %v3997, 0
      %v4009 = vsel %vm1661, %v3998, 0
      %4011 = vmatprep.subr.mxu0 %v4009
      %4012 = vmatpush1.msra.mxu0 %v4006
      %4013 = vmatprep.subr.mxu0 0.0
      %4014 = vmatpush1.msra.mxu0 0.0
      %4015 = vmatprep.subr.mxu0 0.0
      %4016 = vmatpush1.msra.mxu0 0.0
      %4017 = vmatprep.subr.mxu0 0.0
      %4018 = vmatpush1.msra.mxu0 0.0
      %4019 = vmatprep.subr.mxu0 0.0
      %4020 = vmatpush1.msra.mxu0 0.0
      %4021 = vmatprep.subr.mxu0 0.0
      %4022 = vmatpush1.msra.mxu0 0.0
      %4023 = vmatprep.subr.mxu0 0.0
      %4024 = vmatpush1.msra.mxu0 0.0
      %4025 = vmatprep.subr.mxu0 0.0
      %4026 = vmatpush1.msra.mxu0 0.0
      %4027 = vmatprep.subr.mxu0 0.0
      %4028 = vmatpush1.msra.mxu0 0.0
      %4029 = vmatprep.subr.mxu0 0.0
      %4030 = vmatpush1.msra.mxu0 0.0
      %4031 = vmatprep.subr.mxu0 0.0
      %4032 = vmatpush1.msra.mxu0 0.0
      %4033 = vmatprep.subr.mxu0 0.0
      %4034 = vmatpush1.msra.mxu0 0.0
      %4035 = vmatprep.subr.mxu0 0.0
      %4036 = vmatpush1.msra.mxu0 0.0
      %4037 = vmatprep.subr.mxu0 0.0
      %4038 = vmatpush1.msra.mxu0 0.0
      %4039 = vmatprep.subr.mxu0 0.0
      %4040 = vmatpush1.msra.mxu0 0.0
      %4041 = vmatprep.subr.mxu0 0.0
      %4042 = vmatpush1.msra.mxu0 0.0
      %4043 = vmatprep.subr.mxu0 0.0
      %4044 = vmatpush1.msra.mxu0 0.0
      %4045 = vmatprep.subr.mxu0 0.0
      %4046 = vmatpush1.msra.mxu0 0.0
      %4047 = vmatprep.subr.mxu0 0.0
      %4048 = vmatpush1.msra.mxu0 0.0
      %4049 = vmatprep.subr.mxu0 0.0
      %4050 = vmatpush1.msra.mxu0 0.0
      %4051 = vmatprep.subr.mxu0 0.0
      %4052 = vmatpush1.msra.mxu0 0.0
      %4053 = vmatprep.subr.mxu0 0.0
      %4054 = vmatpush1.msra.mxu0 0.0
      %4055 = vmatprep.subr.mxu0 0.0
      %4056 = vmatpush1.msra.mxu0 0.0
      %4057 = vmatprep.subr.mxu0 0.0
      %4058 = vmatpush1.msra.mxu0 0.0
      %4059 = vmatprep.subr.mxu0 0.0
      %4060 = vmatpush1.msra.mxu0 0.0
      %4061 = vmatprep.subr.mxu0 0.0
      %4062 = vmatpush1.msra.mxu0 0.0
      %4063 = vmatprep.subr.mxu0 0.0
      %4064 = vmatpush1.msra.mxu0 0.0
      %4065 = vmatprep.subr.mxu0 0.0
      %4066 = vmatpush1.msra.mxu0 0.0
      %4067 = vmatprep.subr.mxu0 0.0
      %4068 = vmatpush1.msra.mxu0 0.0
      %4069 = vmatprep.subr.mxu0 0.0
      %4070 = vmatpush1.msra.mxu0 0.0
      %4071 = vmatprep.subr.mxu0 0.0
      %4072 = vmatpush1.msra.mxu0 0.0
      %4073 = vmatprep.subr.mxu0 0.0
      %4074 = vmatpush1.msra.mxu0 0.0
      %4075 = vmatprep.mubr.f32.mxu0 0.0
      %4076 = vmatmul.mubr.f32.gmra.mrb[0].mxu0 %v4003
      %v4077 = vpop.f32.mrb[0].mxu0
      %v4078 = vadd.f32 0.0, %v4077
      %v4079 = vpop.f32.mrb[0].mxu0
      %v4080 = vadd.f32 0.0, %v4079
      %4081 = vdwg.mxu0
      %v4082 = vadd.f32 %v3966, %v4078
      %v4083 = vadd.f32 %v3967, %v4080
      %v4084 = vld [vmem:[#allocation3] sm:$0x3f]
      %v4086 = vcombine.high %v4084, %v4084
      %v4088 = vunpack.c.l.s4 1983009808
      %v4089 = vunpack.c.0.s8 %v4088
      %v4090 = vlaneseq
      %v4091 = vshrl.u32 %v4090, 7
      %v4092 = vsub.s32 %v4089, %v4091
      %v4093 = vrot.slane %v4084, %v4092
      %v4095 = vunpack.c.l.s4 1983009808
      %v4096 = vunpack.c.0.s8 %v4095
      %v4097 = vlaneseq
      %v4098 = vshrl.u32 %v4097, 7
      %v4099 = vsub.s32 %v4096, %v4098
      %v4100 = vrot.slane %v4086, %v4099
      %v4101 = vcombine.high %v4093, %v4093
      %4102 = vrot.lane.b32.xlu0 %v4093, 63
      %v4103 = vpop.permute.xlu0 %4102
      %4104 = vrot.lane.b32.xlu0 %v4101, 63
      %v4105 = vpop.permute.xlu0 %4104
      %4106 = vrot.lane.b32.xlu0 %v4100, 63
      %v4107 = vpop.permute.xlu0 %4106
      %vm4108 = vcmask 515072
      %v4109 = vsel %vm4108, %v4103, %v4105
      %v4110 = vsel %vm4108, %v4105, %v4107
      %v4113 = vsel %vm681, %v4109, 0.0
      %v4114 = vsel %vm682, %v4110, 0.0
      %v4115 = vld [vmem:[%s9] sm:$0xf]
      %4117 = vrot.lane.b32.xlu0 %v4115, 86
      %v4118 = vpop.permute.xlu0 %4117
      %v4119 = vsel %vm1756, %v4118, 0
      %v4122 = vsel %vm1661, %v4113, 0
      %v4125 = vsel %vm1661, %v4114, 0
      %4127 = vmatprep.subr.mxu0 %v4125
      %4128 = vmatpush1.msra.mxu0 %v4122
      %4129 = vmatprep.subr.mxu0 0.0
      %4130 = vmatpush1.msra.mxu0 0.0
      %4131 = vmatprep.subr.mxu0 0.0
      %4132 = vmatpush1.msra.mxu0 0.0
      %4133 = vmatprep.subr.mxu0 0.0
      %4134 = vmatpush1.msra.mxu0 0.0
      %4135 = vmatprep.subr.mxu0 0.0
      %4136 = vmatpush1.msra.mxu0 0.0
      %4137 = vmatprep.subr.mxu0 0.0
      %4138 = vmatpush1.msra.mxu0 0.0
      %4139 = vmatprep.subr.mxu0 0.0
      %4140 = vmatpush1.msra.mxu0 0.0
      %4141 = vmatprep.subr.mxu0 0.0
      %4142 = vmatpush1.msra.mxu0 0.0
      %4143 = vmatprep.subr.mxu0 0.0
      %4144 = vmatpush1.msra.mxu0 0.0
      %4145 = vmatprep.subr.mxu0 0.0
      %4146 = vmatpush1.msra.mxu0 0.0
      %4147 = vmatprep.subr.mxu0 0.0
      %4148 = vmatpush1.msra.mxu0 0.0
      %4149 = vmatprep.subr.mxu0 0.0
      %4150 = vmatpush1.msra.mxu0 0.0
      %4151 = vmatprep.subr.mxu0 0.0
      %4152 = vmatpush1.msra.mxu0 0.0
      %4153 = vmatprep.subr.mxu0 0.0
      %4154 = vmatpush1.msra.mxu0 0.0
      %4155 = vmatprep.subr.mxu0 0.0
      %4156 = vmatpush1.msra.mxu0 0.0
      %4157 = vmatprep.subr.mxu0 0.0
      %4158 = vmatpush1.msra.mxu0 0.0
      %4159 = vmatprep.subr.mxu0 0.0
      %4160 = vmatpush1.msra.mxu0 0.0
      %4161 = vmatprep.subr.mxu0 0.0
      %4162 = vmatpush1.msra.mxu0 0.0
      %4163 = vmatprep.subr.mxu0 0.0
      %4164 = vmatpush1.msra.mxu0 0.0
      %4165 = vmatprep.subr.mxu0 0.0
      %4166 = vmatpush1.msra.mxu0 0.0
      %4167 = vmatprep.subr.mxu0 0.0
      %4168 = vmatpush1.msra.mxu0 0.0
      %4169 = vmatprep.subr.mxu0 0.0
      %4170 = vmatpush1.msra.mxu0 0.0
      %4171 = vmatprep.subr.mxu0 0.0
      %4172 = vmatpush1.msra.mxu0 0.0
      %4173 = vmatprep.subr.mxu0 0.0
      %4174 = vmatpush1.msra.mxu0 0.0
      %4175 = vmatprep.subr.mxu0 0.0
      %4176 = vmatpush1.msra.mxu0 0.0
      %4177 = vmatprep.subr.mxu0 0.0
      %4178 = vmatpush1.msra.mxu0 0.0
      %4179 = vmatprep.subr.mxu0 0.0
      %4180 = vmatpush1.msra.mxu0 0.0
      %4181 = vmatprep.subr.mxu0 0.0
      %4182 = vmatpush1.msra.mxu0 0.0
      %4183 = vmatprep.subr.mxu0 0.0
      %4184 = vmatpush1.msra.mxu0 0.0
      %4185 = vmatprep.subr.mxu0 0.0
      %4186 = vmatpush1.msra.mxu0 0.0
      %4187 = vmatprep.subr.mxu0 0.0
      %4188 = vmatpush1.msra.mxu0 0.0
      %4189 = vmatprep.subr.mxu0 0.0
      %4190 = vmatpush1.msra.mxu0 0.0
      %4191 = vmatprep.mubr.f32.mxu0 0.0
      %4192 = vmatmul.mubr.f32.gmra.mrb[0].mxu0 %v4119
      %v4193 = vpop.f32.mrb[0].mxu0
      %v4194 = vadd.f32 0.0, %v4193
      %v4195 = vpop.f32.mrb[0].mxu0
      %v4196 = vadd.f32 0.0, %v4195
      %4197 = vdwg.mxu0
      %v4198 = vadd.f32 %v4082, %v4194
      %v4199 = vadd.f32 %v4083, %v4196
      %v4200 = vld [vmem:[#allocation3] sm:$0x3f]
      %4201 = vrot.lane.b32.xlu0 %v4115, 84
      %v4202 = vpop.permute.xlu0 %4201
      %v4204 = vcombine.high %v4200, %v4200
      %v4206 = vunpack.c.l.s4 1983009808
      %v4207 = vunpack.c.0.s8 %v4206
      %v4208 = vlaneseq
      %v4209 = vshrl.u32 %v4208, 7
      %v4210 = vsub.s32 %v4207, %v4209
      %v4211 = vrot.slane %v4200, %v4210
      %v4213 = vunpack.c.l.s4 1983009808
      %v4214 = vunpack.c.0.s8 %v4213
      %v4215 = vlaneseq
      %v4216 = vshrl.u32 %v4215, 7
      %v4217 = vsub.s32 %v4214, %v4216
      %v4218 = vrot.slane %v4204, %v4217
      %v4219 = vcombine.high %v4211, %v4211
      %4220 = vrot.lane.b32.xlu0 %v4211, 62
      %v4221 = vpop.permute.xlu0 %4220
      %4222 = vrot.lane.b32.xlu0 %v4219, 62
      %v4223 = vpop.permute.xlu0 %4222
      %4224 = vrot.lane.b32.xlu0 %v4218, 62
      %v4225 = vpop.permute.xlu0 %4224
      %vm4226 = vcmask 506880
      %v4227 = vsel %vm4226, %v4221, %v4223
      %v4228 = vsel %vm4226, %v4223, %v4225
      %v4229 = vsel %vm1756, %v4202, 0
      %v4231 = vsel %vm1661, %v4227, 0
      %v4233 = vsel %vm1661, %v4228, 0
      %4235 = vmatprep.subr.mxu0 %v4233
      %4236 = vmatpush1.msra.mxu0 %v4231
      %4237 = vmatprep.subr.mxu0 0.0
      %4238 = vmatpush1.msra.mxu0 0.0
      %4239 = vmatprep.subr.mxu0 0.0
      %4240 = vmatpush1.msra.mxu0 0.0
      %4241 = vmatprep.subr.mxu0 0.0
      %4242 = vmatpush1.msra.mxu0 0.0
      %4243 = vmatprep.subr.mxu0 0.0
      %4244 = vmatpush1.msra.mxu0 0.0
      %4245 = vmatprep.subr.mxu0 0.0
      %4246 = vmatpush1.msra.mxu0 0.0
      %4247 = vmatprep.subr.mxu0 0.0
      %4248 = vmatpush1.msra.mxu0 0.0
      %4249 = vmatprep.subr.mxu0 0.0
      %4250 = vmatpush1.msra.mxu0 0.0
      %4251 = vmatprep.subr.mxu0 0.0
      %4252 = vmatpush1.msra.mxu0 0.0
      %4253 = vmatprep.subr.mxu0 0.0
      %4254 = vmatpush1.msra.mxu0 0.0
      %4255 = vmatprep.subr.mxu0 0.0
      %4256 = vmatpush1.msra.mxu0 0.0
      %4257 = vmatprep.subr.mxu0 0.0
      %4258 = vmatpush1.msra.mxu0 0.0
      %4259 = vmatprep.subr.mxu0 0.0
      %4260 = vmatpush1.msra.mxu0 0.0
      %4261 = vmatprep.subr.mxu0 0.0
      %4262 = vmatpush1.msra.mxu0 0.0
      %4263 = vmatprep.subr.mxu0 0.0
      %4264 = vmatpush1.msra.mxu0 0.0
      %4265 = vmatprep.subr.mxu0 0.0
      %4266 = vmatpush1.msra.mxu0 0.0
      %4267 = vmatprep.subr.mxu0 0.0
      %4268 = vmatpush1.msra.mxu0 0.0
      %4269 = vmatprep.subr.mxu0 0.0
      %4270 = vmatpush1.msra.mxu0 0.0
      %4271 = vmatprep.subr.mxu0 0.0
      %4272 = vmatpush1.msra.mxu0 0.0
      %4273 = vmatprep.subr.mxu0 0.0
      %4274 = vmatpush1.msra.mxu0 0.0
      %4275 = vmatprep.subr.mxu0 0.0
      %4276 = vmatpush1.msra.mxu0 0.0
      %4277 = vmatprep.subr.mxu0 0.0
      %4278 = vmatpush1.msra.mxu0 0.0
      %4279 = vmatprep.subr.mxu0 0.0
      %4280 = vmatpush1.msra.mxu0 0.0
      %4281 = vmatprep.subr.mxu0 0.0
      %4282 = vmatpush1.msra.mxu0 0.0
      %4283 = vmatprep.subr.mxu0 0.0
      %4284 = vmatpush1.msra.mxu0 0.0
      %4285 = vmatprep.subr.mxu0 0.0
      %4286 = vmatpush1.msra.mxu0 0.0
      %4287 = vmatprep.subr.mxu0 0.0
      %4288 = vmatpush1.msra.mxu0 0.0
      %4289 = vmatprep.subr.mxu0 0.0
      %4290 = vmatpush1.msra.mxu0 0.0
      %4291 = vmatprep.subr.mxu0 0.0
      %4292 = vmatpush1.msra.mxu0 0.0
      %4293 = vmatprep.subr.mxu0 0.0
      %4294 = vmatpush1.msra.mxu0 0.0
      %4295 = vmatprep.subr.mxu0 0.0
      %4296 = vmatpush1.msra.mxu0 0.0
      %4297 = vmatprep.subr.mxu0 0.0
      %4298 = vmatpush1.msra.mxu0 0.0
      %4299 = vmatprep.mubr.f32.mxu0 0.0
      %4300 = vmatmul.mubr.f32.gmra.mrb[0].mxu0 %v4229
      %v4301 = vpop.f32.mrb[0].mxu0
      %v4302 = vadd.f32 0.0, %v4301
      %v4303 = vpop.f32.mrb[0].mxu0
      %v4304 = vadd.f32 0.0, %v4303
      %4305 = vdwg.mxu0
      %v4306 = vadd.f32 %v4198, %v4302
      %v4307 = vadd.f32 %v4199, %v4304
      %v4308 = vld [vmem:[#allocation3] sm:$0x3f]
      %v4310 = vcombine.high %v4308, %v4308
      %v4312 = vunpack.c.l.s4 1983009808
      %v4313 = vunpack.c.0.s8 %v4312
      %v4314 = vlaneseq
      %v4315 = vshrl.u32 %v4314, 7
      %v4316 = vsub.s32 %v4313, %v4315
      %v4317 = vrot.slane %v4308, %v4316
      %v4319 = vunpack.c.l.s4 1983009808
      %v4320 = vunpack.c.0.s8 %v4319
      %v4321 = vlaneseq
      %v4322 = vshrl.u32 %v4321, 7
      %v4323 = vsub.s32 %v4320, %v4322
      %v4324 = vrot.slane %v4310, %v4323
      %v4325 = vcombine.high %v4317, %v4317
      %4326 = vrot.lane.b32.xlu0 %v4317, 61
      %v4327 = vpop.permute.xlu0 %4326
      %4328 = vrot.lane.b32.xlu0 %v4325, 61
      %v4329 = vpop.permute.xlu0 %4328
      %4330 = vrot.lane.b32.xlu0 %v4324, 61
      %v4331 = vpop.permute.xlu0 %4330
      %vm4332 = vcmask 498688
      %v4333 = vsel %vm4332, %v4327, %v4329
      %v4334 = vsel %vm4332, %v4329, %v4331
      %v4337 = vsel %vm863, %v4333, 0.0
      %v4338 = vsel %vm864, %v4334, 0.0
      %v4339 = vld [vmem:[%s9] sm:$0xf]
      %4341 = vrot.lane.b32.xlu0 %v4339, 82
      %v4342 = vpop.permute.xlu0 %4341
      %v4343 = vsel %vm1756, %v4342, 0
      %v4346 = vsel %vm1661, %v4337, 0
      %v4349 = vsel %vm1661, %v4338, 0
      %4351 = vmatprep.subr.mxu0 %v4349
      %4352 = vmatpush1.msra.mxu0 %v4346
      %4353 = vmatprep.subr.mxu0 0.0
      %4354 = vmatpush1.msra.mxu0 0.0
      %4355 = vmatprep.subr.mxu0 0.0
      %4356 = vmatpush1.msra.mxu0 0.0
      %4357 = vmatprep.subr.mxu0 0.0
      %4358 = vmatpush1.msra.mxu0 0.0
      %4359 = vmatprep.subr.mxu0 0.0
      %4360 = vmatpush1.msra.mxu0 0.0
      %4361 = vmatprep.subr.mxu0 0.0
      %4362 = vmatpush1.msra.mxu0 0.0
      %4363 = vmatprep.subr.mxu0 0.0
      %4364 = vmatpush1.msra.mxu0 0.0
      %4365 = vmatprep.subr.mxu0 0.0
      %4366 = vmatpush1.msra.mxu0 0.0
      %4367 = vmatprep.subr.mxu0 0.0
      %4368 = vmatpush1.msra.mxu0 0.0
      %4369 = vmatprep.subr.mxu0 0.0
      %4370 = vmatpush1.msra.mxu0 0.0
      %4371 = vmatprep.subr.mxu0 0.0
      %4372 = vmatpush1.msra.mxu0 0.0
      %4373 = vmatprep.subr.mxu0 0.0
      %4374 = vmatpush1.msra.mxu0 0.0
      %4375 = vmatprep.subr.mxu0 0.0
      %4376 = vmatpush1.msra.mxu0 0.0
      %4377 = vmatprep.subr.mxu0 0.0
      %4378 = vmatpush1.msra.mxu0 0.0
      %4379 = vmatprep.subr.mxu0 0.0
      %4380 = vmatpush1.msra.mxu0 0.0
      %4381 = vmatprep.subr.mxu0 0.0
      %4382 = vmatpush1.msra.mxu0 0.0
      %4383 = vmatprep.subr.mxu0 0.0
      %4384 = vmatpush1.msra.mxu0 0.0
      %4385 = vmatprep.subr.mxu0 0.0
      %4386 = vmatpush1.msra.mxu0 0.0
      %4387 = vmatprep.subr.mxu0 0.0
      %4388 = vmatpush1.msra.mxu0 0.0
      %4389 = vmatprep.subr.mxu0 0.0
      %4390 = vmatpush1.msra.mxu0 0.0
      %4391 = vmatprep.subr.mxu0 0.0
      %4392 = vmatpush1.msra.mxu0 0.0
      %4393 = vmatprep.subr.mxu0 0.0
      %4394 = vmatpush1.msra.mxu0 0.0
      %4395 = vmatprep.subr.mxu0 0.0
      %4396 = vmatpush1.msra.mxu0 0.0
      %4397 = vmatprep.subr.mxu0 0.0
      %4398 = vmatpush1.msra.mxu0 0.0
      %4399 = vmatprep.subr.mxu0 0.0
      %4400 = vmatpush1.msra.mxu0 0.0
      %4401 = vmatprep.subr.mxu0 0.0
      %4402 = vmatpush1.msra.mxu0 0.0
      %4403 = vmatprep.subr.mxu0 0.0
      %4404 = vmatpush1.msra.mxu0 0.0
      %4405 = vmatprep.subr.mxu0 0.0
      %4406 = vmatpush1.msra.mxu0 0.0
      %4407 = vmatprep.subr.mxu0 0.0
      %4408 = vmatpush1.msra.mxu0 0.0
      %4409 = vmatprep.subr.mxu0 0.0
      %4410 = vmatpush1.msra.mxu0 0.0
      %4411 = vmatprep.subr.mxu0 0.0
      %4412 = vmatpush1.msra.mxu0 0.0
      %4413 = vmatprep.subr.mxu0 0.0
      %4414 = vmatpush1.msra.mxu0 0.0
      %4415 = vmatprep.mubr.f32.mxu0 0.0
      %4416 = vmatmul.mubr.f32.gmra.mrb[0].mxu0 %v4343
      %v4417 = vpop.f32.mrb[0].mxu0
      %v4418 = vadd.f32 0.0, %v4417
      %v4419 = vpop.f32.mrb[0].mxu0
      %v4420 = vadd.f32 0.0, %v4419
      %4421 = vdwg.mxu0
      %v4422 = vadd.f32 %v4306, %v4418
      %v4423 = vadd.f32 %v4307, %v4420
      %v4424 = vld [vmem:[#allocation3] sm:$0x3f]
      %v4426 = vcombine.high %v4424, %v4424
      %v4428 = vunpack.c.l.s4 1983009808
      %v4429 = vunpack.c.0.s8 %v4428
      %v4430 = vlaneseq
      %v4431 = vshrl.u32 %v4430, 7
      %v4432 = vsub.s32 %v4429, %v4431
      %v4433 = vrot.slane %v4424, %v4432
      %v4435 = vunpack.c.l.s4 1983009808
      %v4436 = vunpack.c.0.s8 %v4435
      %v4437 = vlaneseq
      %v4438 = vshrl.u32 %v4437, 7
      %v4439 = vsub.s32 %v4436, %v4438
      %v4440 = vrot.slane %v4426, %v4439
      %v4441 = vcombine.high %v4433, %v4433
      %4442 = vrot.lane.b32.xlu0 %v4433, 60
      %v4443 = vpop.permute.xlu0 %4442
      %4444 = vrot.lane.b32.xlu0 %v4441, 60
      %v4445 = vpop.permute.xlu0 %4444
      %4446 = vrot.lane.b32.xlu0 %v4440, 60
      %v4447 = vpop.permute.xlu0 %4446
      %vm4448 = vcmask 490496
      %v4449 = vsel %vm4448, %v4443, %v4445
      %v4450 = vsel %vm4448, %v4445, %v4447
      %v4453 = vsel %vm2141, %v4449, 0.0
      %v4454 = vsel %vm2142, %v4450, 0.0
      %v4455 = vld [vmem:[%s9] sm:$0xf]
      %4457 = vrot.lane.b32.xlu0 %v4455, 80
      %v4458 = vpop.permute.xlu0 %4457
      %v4459 = vsel %vm1756, %v4458, 0
      %v4462 = vsel %vm1661, %v4453, 0
      %v4465 = vsel %vm1661, %v4454, 0
      %4467 = vmatprep.subr.mxu0 %v4465
      %4468 = vmatpush1.msra.mxu0 %v4462
      %4469 = vmatprep.subr.mxu0 0.0
      %4470 = vmatpush1.msra.mxu0 0.0
      %4471 = vmatprep.subr.mxu0 0.0
      %4472 = vmatpush1.msra.mxu0 0.0
      %4473 = vmatprep.subr.mxu0 0.0
      %4474 = vmatpush1.msra.mxu0 0.0
      %4475 = vmatprep.subr.mxu0 0.0
      %4476 = vmatpush1.msra.mxu0 0.0
      %4477 = vmatprep.subr.mxu0 0.0
      %4478 = vmatpush1.msra.mxu0 0.0
      %4479 = vmatprep.subr.mxu0 0.0
      %4480 = vmatpush1.msra.mxu0 0.0
      %4481 = vmatprep.subr.mxu0 0.0
      %4482 = vmatpush1.msra.mxu0 0.0
      %4483 = vmatprep.subr.mxu0 0.0
      %4484 = vmatpush1.msra.mxu0 0.0
      %4485 = vmatprep.subr.mxu0 0.0
      %4486 = vmatpush1.msra.mxu0 0.0
      %4487 = vmatprep.subr.mxu0 0.0
      %4488 = vmatpush1.msra.mxu0 0.0
      %4489 = vmatprep.subr.mxu0 0.0
      %4490 = vmatpush1.msra.mxu0 0.0
      %4491 = vmatprep.subr.mxu0 0.0
      %4492 = vmatpush1.msra.mxu0 0.0
      %4493 = vmatprep.subr.mxu0 0.0
      %4494 = vmatpush1.msra.mxu0 0.0
      %4495 = vmatprep.subr.mxu0 0.0
      %4496 = vmatpush1.msra.mxu0 0.0
      %4497 = vmatprep.subr.mxu0 0.0
      %4498 = vmatpush1.msra.mxu0 0.0
      %4499 = vmatprep.subr.mxu0 0.0
      %4500 = vmatpush1.msra.mxu0 0.0
      %4501 = vmatprep.subr.mxu0 0.0
      %4502 = vmatpush1.msra.mxu0 0.0
      %4503 = vmatprep.subr.mxu0 0.0
      %4504 = vmatpush1.msra.mxu0 0.0
      %4505 = vmatprep.subr.mxu0 0.0
      %4506 = vmatpush1.msra.mxu0 0.0
      %4507 = vmatprep.subr.mxu0 0.0
      %4508 = vmatpush1.msra.mxu0 0.0
      %4509 = vmatprep.subr.mxu0 0.0
      %4510 = vmatpush1.msra.mxu0 0.0
      %4511 = vmatprep.subr.mxu0 0.0
      %4512 = vmatpush1.msra.mxu0 0.0
      %4513 = vmatprep.subr.mxu0 0.0
      %4514 = vmatpush1.msra.mxu0 0.0
      %4515 = vmatprep.subr.mxu0 0.0
      %4516 = vmatpush1.msra.mxu0 0.0
      %4517 = vmatprep.subr.mxu0 0.0
      %4518 = vmatpush1.msra.mxu0 0.0
      %4519 = vmatprep.subr.mxu0 0.0
      %4520 = vmatpush1.msra.mxu0 0.0
      %4521 = vmatprep.subr.mxu0 0.0
      %4522 = vmatpush1.msra.mxu0 0.0
      %4523 = vmatprep.subr.mxu0 0.0
      %4524 = vmatpush1.msra.mxu0 0.0
      %4525 = vmatprep.subr.mxu0 0.0
      %4526 = vmatpush1.msra.mxu0 0.0
      %4527 = vmatprep.subr.mxu0 0.0
      %4528 = vmatpush1.msra.mxu0 0.0
      %4529 = vmatprep.subr.mxu0 0.0
      %4530 = vmatpush1.msra.mxu0 0.0
      %4531 = vmatprep.mubr.f32.mxu0 0.0
      %4532 = vmatmul.mubr.f32.gmra.mrb[0].mxu0 %v4459
      %v4533 = vpop.f32.mrb[0].mxu0
      %v4534 = vadd.f32 0.0, %v4533
      %v4535 = vpop.f32.mrb[0].mxu0
      %v4536 = vadd.f32 0.0, %v4535
      %4537 = vdwg.mxu0
      %v4538 = vadd.f32 %v4422, %v4534
      %v4539 = vadd.f32 %v4423, %v4536
      %v4540 = vld [vmem:[%s10] sm:$0xf]
      %4542 = vset.pattern.permute.xlu0 0
      %4543 = vperm.xlu0 %4542, %v4540
      %v4544 = vpop.permute.xlu0 %4543
      %v4546 = vadd.f32 %v4538, %v4544
      %v4547 = vadd.f32 %v4539, %v4544
      %v4548 = vmax.f32 %v4546, 0.0
      %v4549 = vmax.f32 %v4547, 0.0
      %4550 = vst [vmem:[#allocation4] sm:$0xff] -inf
      %4551 = vst.msk [vmem:[#allocation4 + $0x8] sm:$0xf] %vm644, -inf
      %4552 = vrot.lane.b32.xlu0 %v441, 17
      %v4553 = vpop.permute.xlu0 %4552
      %v4554 = vrot.slane %v4553, 4
      %v4555 = vsel %vm652, %v4554, %v4553
      %4558 = vst.msk [vmem:[#allocation4] sm:$0xff] %vm658, %v4555
      %4559 = vst.msk [vmem:[#allocation4 + $0x8] sm:$0xf] %vm660, %v4554
      %v4560 = vld [vmem:[#allocation4] sm:$0xff]
      %v4562 = vcombine.high %v4560, %v4560
      %v4564 = vsel %vm681, %v4560, -inf
      %v4565 = vsel %vm682, %v4562, -inf
      %v4566 = vld [vmem:[#allocation4 + $0x8] sm:$0xf]
      %4568 = vrot.lane.b32.xlu0 %v4560, 127
      %v4569 = vpop.permute.xlu0 %4568
      %4570 = vrot.lane.b32.xlu0 %v4562, 127
      %v4571 = vpop.permute.xlu0 %4570
      %4572 = vrot.lane.b32.xlu0 %v4566, 127
      %v4573 = vpop.permute.xlu0 %4572
      %v4574 = vsel %vm700, %v4569, %v4571
      %v4575 = vsel %vm700, %v4571, %v4573
      %v4578 = vmax.f32 %v4564, %v4574
      %v4579 = vmax.f32 %v4565, %v4575
      %4580 = vrot.lane.b32.xlu0 %v4560, 126
      %v4581 = vpop.permute.xlu0 %4580
      %4582 = vrot.lane.b32.xlu0 %v4562, 126
      %v4583 = vpop.permute.xlu0 %4582
      %4584 = vrot.lane.b32.xlu0 %v4566, 126
      %v4585 = vpop.permute.xlu0 %4584
      %v4586 = vsel %vm874, %v4581, %v4583
      %v4587 = vsel %vm874, %v4583, %v4585
      %v4590 = vsel %vm863, %v4586, -inf
      %v4591 = vsel %vm864, %v4587, -inf
      %v4592 = vmax.f32 %v4578, %v4590
      %v4593 = vmax.f32 %v4579, %v4591
      %4594 = vrot.lane.b32.xlu0 %v4560, 112
      %v4595 = vpop.permute.xlu0 %4594
      %4596 = vrot.lane.b32.xlu0 %v4562, 112
      %v4597 = vpop.permute.xlu0 %4596
      %4598 = vrot.lane.b32.xlu0 %v4566, 112
      %v4599 = vpop.permute.xlu0 %4598
      %v4600 = vsel %vm977, %v4595, %v4597
      %v4601 = vsel %vm977, %v4597, %v4599
      %v4604 = vsel %vm681, %v4600, -inf
      %v4605 = vsel %vm682, %v4601, -inf
      %v4606 = vmax.f32 %v4592, %v4604
      %v4607 = vmax.f32 %v4593, %v4605
      %4608 = vrot.lane.b32.xlu0 %v4560, 111
      %v4609 = vpop.permute.xlu0 %4608
      %4610 = vrot.lane.b32.xlu0 %v4562, 111
      %v4611 = vpop.permute.xlu0 %4610
      %4612 = vrot.lane.b32.xlu0 %v4566, 111
      %v4613 = vpop.permute.xlu0 %4612
      %v4614 = vsel %vm1082, %v4609, %v4611
      %v4615 = vsel %vm1082, %v4611, %v4613
      %v4618 = vmax.f32 %v4606, %v4614
      %v4619 = vmax.f32 %v4607, %v4615
      %4620 = vrot.lane.b32.xlu0 %v4560, 110
      %v4621 = vpop.permute.xlu0 %4620
      %4622 = vrot.lane.b32.xlu0 %v4562, 110
      %v4623 = vpop.permute.xlu0 %4622
      %4624 = vrot.lane.b32.xlu0 %v4566, 110
      %v4625 = vpop.permute.xlu0 %4624
      %v4626 = vsel %vm1175, %v4621, %v4623
      %v4627 = vsel %vm1175, %v4623, %v4625
      %v4630 = vsel %vm863, %v4626, -inf
      %v4631 = vsel %vm864, %v4627, -inf
      %v4632 = vmax.f32 %v4618, %v4630
      %v4633 = vmax.f32 %v4619, %v4631
      %4634 = vrot.lane.b32.xlu0 %v4560, 96
      %v4635 = vpop.permute.xlu0 %4634
      %4636 = vrot.lane.b32.xlu0 %v4562, 96
      %v4637 = vpop.permute.xlu0 %4636
      %4638 = vrot.lane.b32.xlu0 %v4566, 96
      %v4639 = vpop.permute.xlu0 %4638
      %v4640 = vsel %vm1278, %v4635, %v4637
      %v4641 = vsel %vm1278, %v4637, %v4639
      %v4644 = vsel %vm681, %v4640, -inf
      %v4645 = vsel %vm682, %v4641, -inf
      %v4646 = vmax.f32 %v4632, %v4644
      %v4647 = vmax.f32 %v4633, %v4645
      %4648 = vrot.lane.b32.xlu0 %v4560, 95
      %v4649 = vpop.permute.xlu0 %4648
      %4650 = vrot.lane.b32.xlu0 %v4562, 95
      %v4651 = vpop.permute.xlu0 %4650
      %4652 = vrot.lane.b32.xlu0 %v4566, 95
      %v4653 = vpop.permute.xlu0 %4652
      %v4654 = vsel %vm1383, %v4649, %v4651
      %v4655 = vsel %vm1383, %v4651, %v4653
      %v4658 = vmax.f32 %v4646, %v4654
      %v4659 = vmax.f32 %v4647, %v4655
      %4660 = vrot.lane.b32.xlu0 %v4560, 94
      %v4661 = vpop.permute.xlu0 %4660
      %4662 = vrot.lane.b32.xlu0 %v4562, 94
      %v4663 = vpop.permute.xlu0 %4662
      %4664 = vrot.lane.b32.xlu0 %v4566, 94
      %v4665 = vpop.permute.xlu0 %4664
      %v4666 = vsel %vm1476, %v4661, %v4663
      %v4667 = vsel %vm1476, %v4663, %v4665
      %v4670 = vsel %vm863, %v4666, -inf
      %v4671 = vsel %vm864, %v4667, -inf
      %v4672 = vmax.f32 %v4658, %v4670
      %v4673 = vmax.f32 %v4659, %v4671
      %v4674 = vld [vmem:[%s11] sm:$0xf]
      %v4675 = vld [vmem:[%s12] sm:$0xf]
      %4677 = vset.pattern.permute.xlu0 0
      %4678 = vperm.xlu0 %4677, %v4675
      %v4679 = vpop.permute.xlu0 %4678
      %v4682 = vsel %vm478, %v4674, 0
      %v4685 = vsel %vm482, %v4672, 0
      %v4688 = vsel %vm482, %v4673, 0
      %4690 = vmatprep.subr.mxu0 %v4688
      %4691 = vmatpush1.msra.mxu0 %v4685
      %4692 = vmatprep.subr.mxu0 0.0
      %4693 = vmatpush1.msra.mxu0 0.0
      %4694 = vmatprep.subr.mxu0 0.0
      %4695 = vmatpush1.msra.mxu0 0.0
      %4696 = vmatprep.subr.mxu0 0.0
      %4697 = vmatpush1.msra.mxu0 0.0
      %4698 = vmatprep.subr.mxu0 0.0
      %4699 = vmatpush1.msra.mxu0 0.0
      %4700 = vmatprep.subr.mxu0 0.0
      %4701 = vmatpush1.msra.mxu0 0.0
      %4702 = vmatprep.subr.mxu0 0.0
      %4703 = vmatpush1.msra.mxu0 0.0
      %4704 = vmatprep.subr.mxu0 0.0
      %4705 = vmatpush1.msra.mxu0 0.0
      %4706 = vmatprep.subr.mxu0 0.0
      %4707 = vmatpush1.msra.mxu0 0.0
      %4708 = vmatprep.subr.mxu0 0.0
      %4709 = vmatpush1.msra.mxu0 0.0
      %4710 = vmatprep.subr.mxu0 0.0
      %4711 = vmatpush1.msra.mxu0 0.0
      %4712 = vmatprep.subr.mxu0 0.0
      %4713 = vmatpush1.msra.mxu0 0.0
      %4714 = vmatprep.subr.mxu0 0.0
      %4715 = vmatpush1.msra.mxu0 0.0
      %4716 = vmatprep.subr.mxu0 0.0
      %4717 = vmatpush1.msra.mxu0 0.0
      %4718 = vmatprep.subr.mxu0 0.0
      %4719 = vmatpush1.msra.mxu0 0.0
      %4720 = vmatprep.subr.mxu0 0.0
      %4721 = vmatpush1.msra.mxu0 0.0
      %4722 = vmatprep.subr.mxu0 0.0
      %4723 = vmatpush1.msra.mxu0 0.0
      %4724 = vmatprep.subr.mxu0 0.0
      %4725 = vmatpush1.msra.mxu0 0.0
      %4726 = vmatprep.subr.mxu0 0.0
      %4727 = vmatpush1.msra.mxu0 0.0
      %4728 = vmatprep.subr.mxu0 0.0
      %4729 = vmatpush1.msra.mxu0 0.0
      %4730 = vmatprep.subr.mxu0 0.0
      %4731 = vmatpush1.msra.mxu0 0.0
      %4732 = vmatprep.subr.mxu0 0.0
      %4733 = vmatpush1.msra.mxu0 0.0
      %4734 = vmatprep.subr.mxu0 0.0
      %4735 = vmatpush1.msra.mxu0 0.0
      %4736 = vmatprep.subr.mxu0 0.0
      %4737 = vmatpush1.msra.mxu0 0.0
      %4738 = vmatprep.subr.mxu0 0.0
      %4739 = vmatpush1.msra.mxu0 0.0
      %4740 = vmatprep.subr.mxu0 0.0
      %4741 = vmatpush1.msra.mxu0 0.0
      %4742 = vmatprep.subr.mxu0 0.0
      %4743 = vmatpush1.msra.mxu0 0.0
      %4744 = vmatprep.subr.mxu0 0.0
      %4745 = vmatpush1.msra.mxu0 0.0
      %4746 = vmatprep.subr.mxu0 0.0
      %4747 = vmatpush1.msra.mxu0 0.0
      %4748 = vmatprep.subr.mxu0 0.0
      %4749 = vmatpush1.msra.mxu0 0.0
      %4750 = vmatprep.subr.mxu0 0.0
      %4751 = vmatpush1.msra.mxu0 0.0
      %4752 = vmatprep.subr.mxu0 0.0
      %4753 = vmatpush1.msra.mxu0 0.0
      %4754 = vmatprep.mubr.f32.mxu0 0.0
      %4755 = vmatmul.mubr.f32.gmra.mrb[0].mxu0 %v4682
      %v4756 = vpop.f32.mrb[0].mxu0
      %v4757 = vadd.f32 %v4679, %v4756
      %v4758 = vpop.f32.mrb[0].mxu0
      %v4759 = vadd.f32 %v4679, %v4758
      %4760 = vdwg.mxu0
      %v4761 = vmax.f32 %v4757, 0.0
      %v4762 = vmax.f32 %v4759, 0.0
      %4763 = vst [vmem:[%s440] sm:$0xf] %v558
      %4764 = vst [vmem:[%s440 + $0x8] sm:$0xf] %v559
      %v4767 = vrot.slane %v1576, 4
      %v4768 = vrot.slane %v1577, 4
      %4771 = vst [vmem:[%s440] sm:$0xf0] %v4767
      %4772 = vst [vmem:[%s440 + $0x8] sm:$0xf0] %v4768
      %4773 = vst [vmem:[%s440 + $0x10] sm:$0xf] %v4767
      %4774 = vst [vmem:[%s440 + $0x18] sm:$0xf] %v4768
      %v4777 = vrot.slane %v4548, 4
      %v4778 = vrot.slane %v4549, 4
      %4781 = vst [vmem:[%s440 + $0x10] sm:$0xf0] %v4777
      %4782 = vst [vmem:[%s440 + $0x18] sm:$0xf0] %v4778
      %4783 = vst [vmem:[%s440 + $0x20] sm:$0xf] %v4761
      %4784 = vst [vmem:[%s440 + $0x28] sm:$0xf] %v4762
      %p4785 = scmp.lt.s32.totalorder %s24, 1
      %s4786 = scalar_select %p4785, %s24, 1
      %s4787 = smul.addr %s4786, 6
      %s4788 = smul.addr %s4787, 8
      %s4789 = scalar_lea.vmem %s13, %s4788
      // Predicated region
      $region73: #{inception_forward.1} parent=71 // pred_check
        %p4790 = pneg %p320
      $region74: #{inception_forward.1} parent=71 // pred_check_branch
        %4792 = sbr.rel (%p4790) target = $region76
      $region75: #{inception_forward.1} parent=71 // pred_region
        _
      $region76: #{inception_forward.1} parent=71 // pred_fallthru
        _
    $region72: #{inception_forward.1} parent=5 // pred_fallthru
      _
    %p4793 = scmp.le.s32.totalorder 2, %s19
    // Predicated region
    $region77: #{inception_forward.1} parent=5 // pred_check
      %p4794 = pneg %p4793
    $region78: #{inception_forward.1} parent=5 // pred_check_branch
      %4796 = sbr.rel (%p4794) target = $region80
    $region79: #{inception_forward.1} parent=5 // pred_region
      %s4797 = ssub.s32 %s19, 2
      // Predicated region
      $region81: #{inception_forward.1} parent=79 // pred_check
        %p4798 = pneg %p326
      $region82: #{inception_forward.1} parent=79 // pred_check_branch
        %4800 = sbr.rel (%p4798) target = $region84
      $region83: #{inception_forward.1} parent=79 // pred_region
        %p4801 = scmp.lt.s32.totalorder %s25, 1
        %s4802 = scalar_select %p4801, %s25, 1
        %s4803 = smul.addr %s4802, 6
        %s4804 = smul.addr %s4803, 8
        %s4805 = scalar_lea.vmem %s13, %s4804
      $region84: #{inception_forward.1} parent=79 // pred_fallthru
        _
    $region80: #{inception_forward.1} parent=5 // pred_fallthru
      _
  $region6: #{inception_forward.1} parent=0 // loop_footer
    %s23 = sadd.s32 1, %s19
  $region7: #{inception_forward.1} parent=0 // loop_footer_branch
    %18 = sbr.rel target = $region3
  $region8: #{inception_forward.1} parent=0 // loop_exit
    _

</llo_original>
